<compile_context>
chip_gen: v7x
topology: tpu7x:2x2x1
jax: 0.10.0
libtpu: 0.0.40
codegen_flags: <defaults>
</compile_context>

<pallas_src>
import functools

import jax
import jax.numpy as jnp
import numpy as np
from jax.experimental import pallas as pl
from jax.experimental.pallas import tpu as pltpu

_SQRT_HALF = 0.7071067811865476

# Row indices into the packed (9, D) bias / LayerNorm slab.
_BQ, _BK, _BV, _BO, _B2, _G1, _BE1, _G2, _BE2 = range(9)


def _gelu_exact(x):
    # PyTorch F.gelu default is the exact erf formulation.
    return 0.5 * x * (1.0 + jax.lax.erf(x * _SQRT_HALF))


def _layernorm(z, g, b, eps=1e-5):
    mu = jnp.mean(z, axis=-1, keepdims=True)
    var = jnp.mean((z - mu) ** 2, axis=-1, keepdims=True)
    return (z - mu) * jax.lax.rsqrt(var + eps) * g + b


def encoder_layer_kernel(srcpos_ref, src_ref,
                         wq_ref, wk_ref, wv_ref, wo_ref,
                         w1_ref, b1_ref, w2_ref, vec_ref,
                         *out_refs, nhead, need_weights, compute_dtype):
    if need_weights:
        osrc_ref, owts_ref = out_refs
    else:
        (osrc_ref,) = out_refs
        owts_ref = None

    S, D = src_ref.shape[1], src_ref.shape[2]
    H = nhead
    hd = D // H
    cd = compute_dtype
    inv_h = jnp.float32(1.0 / H)

    # Weights were pre-split / pre-transposed / pre-cast once in the wrapper;
    # load them once per grid step.
    w_q, w_k, w_v, w_o = wq_ref[...], wk_ref[...], wv_ref[...], wo_ref[...]
    w_1, w_2 = w1_ref[...], w2_ref[...]
    b_1 = b1_ref[...]                              # (1, DFF) f32
    vec = vec_ref[...]                             # (9, D)  f32 packed slab
    b_q, b_k, b_v = vec[_BQ:_BQ + 1], vec[_BK:_BK + 1], vec[_BV:_BV + 1]
    b_o, b_2 = vec[_BO:_BO + 1], vec[_B2:_B2 + 1]
    g1, be1 = vec[_G1:_G1 + 1], vec[_BE1:_BE1 + 1]
    g2, be2 = vec[_G2:_G2 + 1], vec[_BE2:_BE2 + 1]

    x = src_ref[0]                                 # (S, D) f32 (residual path)
    qk_in = srcpos_ref[0].astype(cd)               # src + pos (added in wrapper)
    x_c = x.astype(cd)

    # QKV projections: K=D MXU matmuls, f32 accumulation, bias fused in the
    # epilogue.  The 1/sqrt(hd) attention scale is already folded into w_q/b_q.
    q = jnp.dot(qk_in, w_q, preferred_element_type=jnp.float32) + b_q
    k = jnp.dot(qk_in, w_k, preferred_element_type=jnp.float32) + b_k
    v = jnp.dot(x_c, w_v, preferred_element_type=jnp.float32) + b_v

    # Single lane-layout relayout per tensor (cast to the MXU dtype first so
    # the relayout moves half the bytes in bf16 mode).
    def split_heads(t):
        return jnp.transpose(t.astype(cd).reshape(S, H, hd), (1, 0, 2))

    qh, kh, vh = split_heads(q), split_heads(k), split_heads(v)   # (H, S, hd)

    # Heads-batched QK^T and PV (no per-head matmuls).
    s = jnp.einsum('hqd,hkd->hqk', qh, kh,
                   preferred_element_type=jnp.float32)            # (H, S, S)
    s = s - jnp.max(s, axis=-1, keepdims=True)
    p = jnp.exp(s)
    denom = jnp.sum(p, axis=-1, keepdims=True)
    # EUP approx reciprocal on the production (context-only) path; exact when
    # the attention weights are exported so rows sum to 1 like PyTorch.
    a = p * pl.reciprocal(denom, approx=not need_weights)

    if need_weights:
        owts_ref[0] = jnp.sum(a, axis=0) * inv_h                  # head-avg (S, S)

    ctx_h = jnp.einsum('hqk,hkd->hqd', a.astype(cd), vh,
                       preferred_element_type=jnp.float32)        # (H, S, hd)
    # Value-level regather (single transpose), no VMEM scratch round trip.
    ctx = jnp.transpose(ctx_h, (1, 0, 2)).reshape(S, D)

    attn = jnp.dot(ctx.astype(cd), w_o,
                   preferred_element_type=jnp.float32) + b_o

    # residual + LayerNorm1 (dropout1 = identity in eval mode)
    h1 = _layernorm(x + attn, g1, be1)

    # FFN: linear1 -> gelu -> linear2 (dropout = identity); f32 everywhere
    # except the MXU inputs.
    y1 = _gelu_exact(jnp.dot(h1.astype(cd), w_1,
                             preferred_element_type=jnp.float32) + b_1)
    y2 = jnp.dot(y1.astype(cd), w_2,
                 preferred_element_type=jnp.float32) + b_2

    # residual + LayerNorm2 (dropout2 = identity in eval mode)
    osrc_ref[0] = _layernorm(h1 + y2, g2, be2)


def prepare_params(params, nhead, compute_dtype=jnp.float32):
    """Split / transpose / scale-fold the PyTorch-layout weights ONCE.

    compute_dtype=bf16 is a supported numerics mode on ALL generations
    (v5e/v6e/v7x MXUs are bf16-native); accumulation and softmax/LN stats stay
    f32 inside the kernel.  Note it quantizes the stored weights.
    """
    D = params['out_w'].shape[0]
    hd = D // nhead
    scale = np.float32(1.0 / np.sqrt(hd))
    cd = compute_dtype
    f32 = jnp.float32
    in_w = params['in_w'].astype(f32)
    in_b = params['in_b'].astype(f32)
    vec_rows = [
        in_b[:, 0:D] * scale,          # b_q (scale folded)
        in_b[:, D:2 * D],              # b_k
        in_b[:, 2 * D:3 * D],          # b_v
        params['out_b'],               # b_o
        params['b2'],                  # b_2
        params['g1'], params['be1'],   # norm1
        params['g2'], params['be2'],   # norm2
    ]
    return {
        'w_q': (in_w[0:D].T * scale).astype(cd),
        'w_k': in_w[D:2 * D].T.astype(cd),
        'w_v': in_w[2 * D:3 * D].T.astype(cd),
        'w_o': params['out_w'].T.astype(cd),
        'w_1': params['w1'].T.astype(cd),
        'b_1': params['b1'].astype(f32),
        'w_2': params['w2'].T.astype(cd),
        'vec_d': jnp.concatenate([r.astype(f32) for r in vec_rows], axis=0),
    }


def _vmem_limit_bytes():
    # ~75% of physical VMEM: ~96 MiB on v5e/v6e (128 MiB physical), ~48 MiB on
    # v7x (64 MiB physical).  Conservative fallback if the query is unavailable.
    cap = 64 * 1024 * 1024
    try:
        cap = int(pltpu.get_tpu_info().vmem_capacity_bytes)
    except Exception:
        pass
    return int(cap * 3 // 4)


def transformer_encoder_layer(src, pos, prep, nhead, *,
                              need_weights=False, seq_major=True):
    """One TransformerEncoderLayer.forward_post (eval mode).

    src/pos: (S, B, D) if seq_major (PyTorch layout) else (B, S, D).
    Returns (out, weights) with out in the same layout as the input; weights
    (B, S, S) head-averaged, or None when need_weights=False.
    """
    if seq_major:
        src_b = jnp.transpose(src, (1, 0, 2))
        pos_b = jnp.transpose(pos, (1, 0, 2))
    else:
        src_b, pos_b = src, pos
    srcpos_b = src_b + pos_b          # fused into the same XLA pass as the transpose
    B, S, D = src_b.shape
    DFF = prep['w_1'].shape[1]

    kernel = functools.partial(
        encoder_layer_kernel, nhead=nhead, need_weights=need_weights,
        compute_dtype=prep['w_q'].dtype)

    def build(single_buffer):
        def const_spec(shape):
            # Constant-index operands: never re-fetched, so single-buffer them
            # to halve their VMEM residency when supported.
            if single_buffer:
                return pl.BlockSpec(shape, lambda i: (0,) * len(shape),
                                    pipeline_mode=pl.Buffered(1))
            return pl.BlockSpec(shape, lambda i: (0,) * len(shape))

        in_specs = [
            pl.BlockSpec((1, S, D), lambda i: (i, 0, 0)),   # src + pos
            pl.BlockSpec((1, S, D), lambda i: (i, 0, 0)),   # src
            const_spec((D, D)), const_spec((D, D)),          # w_q, w_k (pre-T)
            const_spec((D, D)), const_spec((D, D)),          # w_v, w_o (pre-T)
            const_spec((D, DFF)), const_spec((1, DFF)),      # w_1 (pre-T), b_1
            const_spec((DFF, D)),                            # w_2 (pre-T)
            const_spec((9, D)),                              # packed bias/LN slab
        ]
        out_specs = [pl.BlockSpec((1, S, D), lambda i: (i, 0, 0))]
        out_shape = [jax.ShapeDtypeStruct((B, S, D), jnp.float32)]
        if need_weights:
            out_specs.append(pl.BlockSpec((1, S, S), lambda i: (i, 0, 0)))
            out_shape.append(jax.ShapeDtypeStruct((B, S, S), jnp.float32))

        return pl.pallas_call(
            kernel,
            out_shape=out_shape,
            grid_spec=pltpu.PrefetchScalarGridSpec(
                num_scalar_prefetch=0,
                grid=(B,),                                   # one batch element / step
                in_specs=in_specs,
                out_specs=out_specs),
            compiler_params=pltpu.CompilerParams(
                dimension_semantics=("parallel",),
                vmem_limit_bytes=_vmem_limit_bytes()),
        )

    args = (srcpos_b, src_b,
            prep['w_q'], prep['w_k'], prep['w_v'], prep['w_o'],
            prep['w_1'], prep['b_1'], prep['w_2'], prep['vec_d'])
    try:
        outs = build(single_buffer=True)(*args)
    except Exception:
        # Fallback if this Pallas build rejects pl.Buffered(1) single-buffering.
        outs = build(single_buffer=False)(*args)

    out = outs[0]
    if seq_major:
        out = jnp.transpose(out, (1, 0, 2))                  # back to (S, B, D)
    if need_weights:
        return out, outs[1]
    return out, None


def reference(src_sbd, pos_sbd, params, nhead):
    """Pure-JAX reference replicating PyTorch forward_post (eval mode)."""
    x = jnp.transpose(src_sbd, (1, 0, 2))
    pos = jnp.transpose(pos_sbd, (1, 0, 2))
    B, S, D = x.shape
    H = nhead
    hd = D // H
    scale = 1.0 / np.sqrt(hd)

    qk = x + pos
    q = qk @ params['in_w'][0:D].T + params['in_b'][0, 0:D]
    k = qk @ params['in_w'][D:2 * D].T + params['in_b'][0, D:2 * D]
    v = x @ params['in_w'][2 * D:].T + params['in_b'][0, 2 * D:]
    q = q.reshape(B, S, H, hd)
    k = k.reshape(B, S, H, hd)
    v = v.reshape(B, S, H, hd)
    sc = jnp.einsum('bqhd,bkhd->bhqk', q, k) * scale
    a = jax.nn.softmax(sc, axis=-1)
    ctx = jnp.einsum('bhqk,bkhd->bqhd', a, v).reshape(B, S, D)
    attn_out = ctx @ params['out_w'].T + params['out_b'][0]
    wts = a.mean(axis=1)

    def ln(z, g, b):
        mu = z.mean(-1, keepdims=True)
        var = ((z - mu) ** 2).mean(-1, keepdims=True)
        return (z - mu) / jnp.sqrt(var + 1e-5) * g[0] + b[0]

    h1 = ln(x + attn_out, params['g1'], params['be1'])
    y1 = h1 @ params['w1'].T + params['b1'][0]
    y1 = 0.5 * y1 * (1.0 + jax.lax.erf(y1 * _SQRT_HALF))
    y2 = y1 @ params['w2'].T + params['b2'][0]
    out = ln(h1 + y2, params['g2'], params['be2'])
    return jnp.transpose(out, (1, 0, 2)), wts


if __name__ == "__main__":
    # Small shapes consistent with the module (d_model/nhead/dff scaled down).
    S, B, D, H, DFF = 8, 2, 32, 4, 64

    key = jax.random.PRNGKey(0)
    ks = jax.random.split(key, 10)
    params = {
        'in_w':  jax.random.normal(ks[0], (3 * D, D), jnp.float32) * 0.05,
        'in_b':  jax.random.normal(ks[1], (1, 3 * D), jnp.float32) * 0.05,
        'out_w': jax.random.normal(ks[2], (D, D), jnp.float32) * 0.05,
        'out_b': jax.random.normal(ks[3], (1, D), jnp.float32) * 0.05,
        'w1':    jax.random.normal(ks[4], (DFF, D), jnp.float32) * 0.05,
        'b1':    jax.random.normal(ks[5], (1, DFF), jnp.float32) * 0.05,
        'w2':    jax.random.normal(ks[6], (D, DFF), jnp.float32) * 0.05,
        'b2':    jax.random.normal(ks[7], (1, D), jnp.float32) * 0.05,
        'g1':    jnp.ones((1, D), jnp.float32),
        'be1':   jnp.zeros((1, D), jnp.float32),
        'g2':    jnp.ones((1, D), jnp.float32),
        'be2':   jnp.zeros((1, D), jnp.float32),
    }
    src = jax.random.normal(ks[8], (S, B, D), jnp.float32)
    pos = jax.random.normal(ks[9], (S, B, D), jnp.float32)

    ref_src, ref_wts = reference(src, pos, params, H)

    # f32 path with exported attention weights (exact softmax reciprocal).
    prep_f32 = prepare_params(params, H, jnp.float32)
    out_src, out_wts = transformer_encoder_layer(src, pos, prep_f32, H,
                                                 need_weights=True)
    jax.block_until_ready((out_src, out_wts))
    assert np.allclose(np.asarray(out_src), np.asarray(ref_src), atol=2e-3, rtol=2e-3)
    assert np.allclose(np.asarray(out_wts), np.asarray(ref_wts), atol=2e-3, rtol=2e-3)

    # Production path: no weights writeback, EUP approx reciprocal.
    out_prod, _ = transformer_encoder_layer(src, pos, prep_f32, H,
                                            need_weights=False)
    jax.block_until_ready(out_prod)
    assert np.allclose(np.asarray(out_prod), np.asarray(ref_src), atol=5e-3, rtol=5e-3)

    # Batch-major entry point (skips the wrapper transposes).
    out_bm, _ = transformer_encoder_layer(jnp.transpose(src, (1, 0, 2)),
                                          jnp.transpose(pos, (1, 0, 2)),
                                          prep_f32, H,
                                          need_weights=False, seq_major=False)
    jax.block_until_ready(out_bm)
    assert np.allclose(np.asarray(out_bm),
                       np.asarray(jnp.transpose(out_prod, (1, 0, 2))),
                       atol=1e-5, rtol=1e-5)

    # bf16 MXU numerics mode (all generations): f32 accumulation + f32 stats.
    prep_bf16 = prepare_params(params, H, jnp.bfloat16)
    out_src_bf, out_wts_bf = transformer_encoder_layer(src, pos, prep_bf16, H,
                                                       need_weights=True)
    jax.block_until_ready((out_src_bf, out_wts_bf))
    assert np.allclose(np.asarray(out_src_bf), np.asarray(ref_src), atol=5e-2, rtol=5e-2)
    assert np.allclose(np.asarray(out_wts_bf), np.asarray(ref_wts), atol=5e-2, rtol=5e-2)

    print("KERNEL_OK")
</pallas_src>

<mosaic_0001>
module attributes {stable_mosaic.version = 11 : i64} {
  func.func @encoder_layer_kernel(%arg0: i32, %arg1: memref<1x8x32xf32, #tpu.memory_space<vmem>>, %arg2: memref<1x8x32xf32, #tpu.memory_space<vmem>>, %arg3: memref<32x32xf32, #tpu.memory_space<vmem>>, %arg4: memref<32x32xf32, #tpu.memory_space<vmem>>, %arg5: memref<32x32xf32, #tpu.memory_space<vmem>>, %arg6: memref<32x32xf32, #tpu.memory_space<vmem>>, %arg7: memref<32x64xf32, #tpu.memory_space<vmem>>, %arg8: memref<1x64xf32, #tpu.memory_space<vmem>>, %arg9: memref<64x32xf32, #tpu.memory_space<vmem>>, %arg10: memref<9x32xf32, #tpu.memory_space<vmem>>, %arg11: memref<1x8x32xf32, #tpu.memory_space<vmem>>, %arg12: memref<1x8x8xf32, #tpu.memory_space<vmem>>) attributes {dimension_semantics = [#tpu.dimension_semantics<parallel>], iteration_bounds = array<i64: 2>, scalar_prefetch = 0 : i64, scratch_operands = 0 : i64, tpu.core_type = #tpu.core_type<tc>, window_params = [{transform_indices = @transform_0, window_bounds = array<i64: 1, 8, 32>}, {transform_indices = @transform_1, window_bounds = array<i64: 1, 8, 32>}, {pipeline_mode = #tpu.pipeline_mode<synchronous>, transform_indices = @transform_2, window_bounds = array<i64: 32, 32>}, {pipeline_mode = #tpu.pipeline_mode<synchronous>, transform_indices = @transform_3, window_bounds = array<i64: 32, 32>}, {pipeline_mode = #tpu.pipeline_mode<synchronous>, transform_indices = @transform_4, window_bounds = array<i64: 32, 32>}, {pipeline_mode = #tpu.pipeline_mode<synchronous>, transform_indices = @transform_5, window_bounds = array<i64: 32, 32>}, {pipeline_mode = #tpu.pipeline_mode<synchronous>, transform_indices = @transform_6, window_bounds = array<i64: 32, 64>}, {pipeline_mode = #tpu.pipeline_mode<synchronous>, transform_indices = @transform_7, window_bounds = array<i64: 1, 64>}, {pipeline_mode = #tpu.pipeline_mode<synchronous>, transform_indices = @transform_8, window_bounds = array<i64: 64, 32>}, {pipeline_mode = #tpu.pipeline_mode<synchronous>, transform_indices = @transform_9, window_bounds = array<i64: 9, 32>}, {transform_indices = @transform_10, window_bounds = array<i64: 1, 8, 32>}, {transform_indices = @transform_11, window_bounds = array<i64: 1, 8, 8>}]} {
    %c0 = arith.constant 0 : index
    %c0_0 = arith.constant 0 : index
    %0 = vector.load %arg3[%c0, %c0_0] : memref<32x32xf32, #tpu.memory_space<vmem>>, vector<32x32xf32>
    %c0_1 = arith.constant 0 : index
    %c0_2 = arith.constant 0 : index
    %1 = vector.load %arg4[%c0_1, %c0_2] : memref<32x32xf32, #tpu.memory_space<vmem>>, vector<32x32xf32>
    %c0_3 = arith.constant 0 : index
    %c0_4 = arith.constant 0 : index
    %2 = vector.load %arg5[%c0_3, %c0_4] : memref<32x32xf32, #tpu.memory_space<vmem>>, vector<32x32xf32>
    %c0_5 = arith.constant 0 : index
    %c0_6 = arith.constant 0 : index
    %3 = vector.load %arg6[%c0_5, %c0_6] : memref<32x32xf32, #tpu.memory_space<vmem>>, vector<32x32xf32>
    %c0_7 = arith.constant 0 : index
    %c0_8 = arith.constant 0 : index
    %4 = vector.load %arg7[%c0_7, %c0_8] : memref<32x64xf32, #tpu.memory_space<vmem>>, vector<32x64xf32>
    %c0_9 = arith.constant 0 : index
    %c0_10 = arith.constant 0 : index
    %5 = vector.load %arg9[%c0_9, %c0_10] : memref<64x32xf32, #tpu.memory_space<vmem>>, vector<64x32xf32>
    %c0_11 = arith.constant 0 : index
    %c0_12 = arith.constant 0 : index
    %6 = vector.load %arg8[%c0_11, %c0_12] : memref<1x64xf32, #tpu.memory_space<vmem>>, vector<1x64xf32>
    %c0_13 = arith.constant 0 : index
    %c0_14 = arith.constant 0 : index
    %7 = vector.load %arg10[%c0_13, %c0_14] : memref<9x32xf32, #tpu.memory_space<vmem>>, vector<9x32xf32>
    %8 = vector.extract_strided_slice %7 {offsets = [0, 0], sizes = [1, 32], strides = [1, 1]} : vector<9x32xf32> to vector<1x32xf32>
    %9 = vector.extract_strided_slice %7 {offsets = [1, 0], sizes = [1, 32], strides = [1, 1]} : vector<9x32xf32> to vector<1x32xf32>
    %10 = vector.extract_strided_slice %7 {offsets = [2, 0], sizes = [1, 32], strides = [1, 1]} : vector<9x32xf32> to vector<1x32xf32>
    %11 = vector.extract_strided_slice %7 {offsets = [3, 0], sizes = [1, 32], strides = [1, 1]} : vector<9x32xf32> to vector<1x32xf32>
    %12 = vector.extract_strided_slice %7 {offsets = [4, 0], sizes = [1, 32], strides = [1, 1]} : vector<9x32xf32> to vector<1x32xf32>
    %13 = vector.extract_strided_slice %7 {offsets = [5, 0], sizes = [1, 32], strides = [1, 1]} : vector<9x32xf32> to vector<1x32xf32>
    %14 = vector.extract_strided_slice %7 {offsets = [6, 0], sizes = [1, 32], strides = [1, 1]} : vector<9x32xf32> to vector<1x32xf32>
    %15 = vector.extract_strided_slice %7 {offsets = [7, 0], sizes = [1, 32], strides = [1, 1]} : vector<9x32xf32> to vector<1x32xf32>
    %16 = vector.extract_strided_slice %7 {offsets = [8, 0], sizes = [1, 32], strides = [1, 1]} : vector<9x32xf32> to vector<1x32xf32>
    %c0_15 = arith.constant 0 : index
    %c0_16 = arith.constant 0 : index
    %c0_17 = arith.constant 0 : index
    %17 = vector.load %arg2[%c0_15, %c0_16, %c0_17] : memref<1x8x32xf32, #tpu.memory_space<vmem>>, vector<1x8x32xf32>
    %18 = vector.shape_cast %17 : vector<1x8x32xf32> to vector<8x32xf32>
    %c0_18 = arith.constant 0 : index
    %c0_19 = arith.constant 0 : index
    %c0_20 = arith.constant 0 : index
    %19 = vector.load %arg1[%c0_18, %c0_19, %c0_20] : memref<1x8x32xf32, #tpu.memory_space<vmem>>, vector<1x8x32xf32>
    %20 = vector.shape_cast %19 : vector<1x8x32xf32> to vector<8x32xf32>
    %cst = arith.constant dense<0.000000e+00> : vector<8x32xf32>
    %21 = tpu.matmul %20, %0, %cst {dimension_numbers = #tpu.dot_dimension_numbers<[1], [0], [0], [1], [0, 0, 1, 1], [], []>} : vector<8x32xf32>, vector<32x32xf32>, vector<8x32xf32> -> vector<8x32xf32>
    %22 = vector.broadcast %8 : vector<1x32xf32> to vector<8x32xf32>
    %23 = arith.addf %21, %22 : vector<8x32xf32>
    %cst_21 = arith.constant dense<0.000000e+00> : vector<8x32xf32>
    %24 = tpu.matmul %20, %1, %cst_21 {dimension_numbers = #tpu.dot_dimension_numbers<[1], [0], [0], [1], [0, 0, 1, 1], [], []>} : vector<8x32xf32>, vector<32x32xf32>, vector<8x32xf32> -> vector<8x32xf32>
    %25 = vector.broadcast %9 : vector<1x32xf32> to vector<8x32xf32>
    %26 = arith.addf %24, %25 : vector<8x32xf32>
    %cst_22 = arith.constant dense<0.000000e+00> : vector<8x32xf32>
    %27 = tpu.matmul %18, %2, %cst_22 {dimension_numbers = #tpu.dot_dimension_numbers<[1], [0], [0], [1], [0, 0, 1, 1], [], []>} : vector<8x32xf32>, vector<32x32xf32>, vector<8x32xf32> -> vector<8x32xf32>
    %28 = vector.broadcast %10 : vector<1x32xf32> to vector<8x32xf32>
    %29 = arith.addf %27, %28 : vector<8x32xf32>
    %30 = vector.shape_cast %23 : vector<8x32xf32> to vector<8x4x8xf32>
    %31 = tpu.transpose %30, [1, 0, 2] : vector<8x4x8xf32> -> vector<4x8x8xf32>
    %32 = vector.shape_cast %26 : vector<8x32xf32> to vector<8x4x8xf32>
    %33 = tpu.transpose %32, [1, 0, 2] : vector<8x4x8xf32> -> vector<4x8x8xf32>
    %34 = vector.shape_cast %29 : vector<8x32xf32> to vector<8x4x8xf32>
    %35 = tpu.transpose %34, [1, 0, 2] : vector<8x4x8xf32> -> vector<4x8x8xf32>
    "tpu.trace_start"() <{level = 10 : i32, message = "hqd,hkd->hqk"}> : () -> ()
    %cst_23 = arith.constant dense<0.000000e+00> : vector<4x8x8xf32>
    %36 = tpu.matmul %31, %33, %cst_23 {dimension_numbers = #tpu.dot_dimension_numbers<[2], [2], [1], [1], [0, 0, 0, 1, 1, 1], [0], [0]>} : vector<4x8x8xf32>, vector<4x8x8xf32>, vector<4x8x8xf32> -> vector<4x8x8xf32>
    "tpu.trace_stop"() : () -> ()
    %cst_24 = arith.constant dense<0xFF800000> : vector<4x8xf32>
    %37 = vector.multi_reduction <maximumf>, %36, %cst_24 [2] : vector<4x8x8xf32> to vector<4x8xf32>
    %38 = vector.shape_cast %37 : vector<4x8xf32> to vector<4x8x1xf32>
    %39 = vector.broadcast %38 : vector<4x8x1xf32> to vector<4x8x8xf32>
    %40 = arith.subf %36, %39 : vector<4x8x8xf32>
    %41 = math.exp %40 : vector<4x8x8xf32>
    %cst_25 = arith.constant dense<0.000000e+00> : vector<4x8xf32>
    %42 = vector.multi_reduction <add>, %41, %cst_25 [2] : vector<4x8x8xf32> to vector<4x8xf32>
    %43 = vector.shape_cast %42 : vector<4x8xf32> to vector<4x8x1xf32>
    %44 = tpu.reciprocal %43 : vector<4x8x1xf32> -> vector<4x8x1xf32>
    %45 = vector.broadcast %44 : vector<4x8x1xf32> to vector<4x8x8xf32>
    %46 = arith.mulf %41, %45 : vector<4x8x8xf32>
    %cst_26 = arith.constant dense<0.000000e+00> : vector<8x8xf32>
    %47 = vector.multi_reduction <add>, %46, %cst_26 [0] : vector<4x8x8xf32> to vector<8x8xf32>
    %cst_27 = arith.constant 2.500000e-01 : f32
    %48 = vector.broadcast %cst_27 : f32 to vector<8x8xf32>
    %49 = arith.mulf %47, %48 : vector<8x8xf32>
    %c0_28 = arith.constant 0 : index
    %c0_29 = arith.constant 0 : index
    %c0_30 = arith.constant 0 : index
    %50 = vector.load %arg12[%c0_28, %c0_29, %c0_30] : memref<1x8x8xf32, #tpu.memory_space<vmem>>, vector<1x8x8xf32>
    %51 = vector.shape_cast %50 : vector<1x8x8xf32> to vector<8x8xf32>
    %52 = vector.shape_cast %49 : vector<8x8xf32> to vector<1x8x8xf32>
    tpu.vector_store %arg12[%c0_28, %c0_29, %c0_30], %52 {strides = array<i32>} : memref<1x8x8xf32, #tpu.memory_space<vmem>>, vector<1x8x8xf32>,
    "tpu.trace_start"() <{level = 10 : i32, message = "hqk,hkd->hqd"}> : () -> ()
    %cst_31 = arith.constant dense<0.000000e+00> : vector<4x8x8xf32>
    %53 = tpu.matmul %46, %35, %cst_31 {dimension_numbers = #tpu.dot_dimension_numbers<[2], [1], [1], [2], [0, 0, 0, 1, 1, 2], [0], [0]>} : vector<4x8x8xf32>, vector<4x8x8xf32>, vector<4x8x8xf32> -> vector<4x8x8xf32>
    "tpu.trace_stop"() : () -> ()
    %54 = tpu.transpose %53, [1, 0, 2] : vector<4x8x8xf32> -> vector<8x4x8xf32>
    %55 = vector.shape_cast %54 : vector<8x4x8xf32> to vector<8x32xf32>
    %cst_32 = arith.constant dense<0.000000e+00> : vector<8x32xf32>
    %56 = tpu.matmul %55, %3, %cst_32 {dimension_numbers = #tpu.dot_dimension_numbers<[1], [0], [0], [1], [0, 0, 1, 1], [], []>} : vector<8x32xf32>, vector<32x32xf32>, vector<8x32xf32> -> vector<8x32xf32>
    %57 = vector.broadcast %11 : vector<1x32xf32> to vector<8x32xf32>
    %58 = arith.addf %56, %57 : vector<8x32xf32>
    %59 = arith.addf %18, %58 : vector<8x32xf32>
    %cst_33 = arith.constant dense<0.000000e+00> : vector<8xf32>
    %60 = vector.multi_reduction <add>, %59, %cst_33 [1] : vector<8x32xf32> to vector<8xf32>
    %61 = vector.shape_cast %60 : vector<8xf32> to vector<8x1xf32>
    %cst_34 = arith.constant 3.200000e+01 : f32
    %62 = vector.broadcast %cst_34 : f32 to vector<8x1xf32>
    %63 = arith.divf %61, %62 : vector<8x1xf32>
    %64 = vector.broadcast %63 : vector<8x1xf32> to vector<8x32xf32>
    %65 = arith.subf %59, %64 : vector<8x32xf32>
    %66 = arith.mulf %65, %65 : vector<8x32xf32>
    %cst_35 = arith.constant dense<0.000000e+00> : vector<8xf32>
    %67 = vector.multi_reduction <add>, %66, %cst_35 [1] : vector<8x32xf32> to vector<8xf32>
    %68 = vector.shape_cast %67 : vector<8xf32> to vector<8x1xf32>
    %cst_36 = arith.constant 3.200000e+01 : f32
    %69 = vector.broadcast %cst_36 : f32 to vector<8x1xf32>
    %70 = arith.divf %68, %69 : vector<8x1xf32>
    %71 = vector.broadcast %63 : vector<8x1xf32> to vector<8x32xf32>
    %72 = arith.subf %59, %71 : vector<8x32xf32>
    %cst_37 = arith.constant 9.99999974E-6 : f32
    %73 = vector.broadcast %cst_37 : f32 to vector<8x1xf32>
    %74 = arith.addf %70, %73 : vector<8x1xf32>
    %75 = math.rsqrt %74 : vector<8x1xf32>
    %76 = vector.broadcast %75 : vector<8x1xf32> to vector<8x32xf32>
    %77 = arith.mulf %72, %76 : vector<8x32xf32>
    %78 = vector.broadcast %13 : vector<1x32xf32> to vector<8x32xf32>
    %79 = arith.mulf %77, %78 : vector<8x32xf32>
    %80 = vector.broadcast %14 : vector<1x32xf32> to vector<8x32xf32>
    %81 = arith.addf %79, %80 : vector<8x32xf32>
    %cst_38 = arith.constant dense<0.000000e+00> : vector<8x64xf32>
    %82 = tpu.matmul %81, %4, %cst_38 {dimension_numbers = #tpu.dot_dimension_numbers<[1], [0], [0], [1], [0, 0, 1, 1], [], []>} : vector<8x32xf32>, vector<32x64xf32>, vector<8x64xf32> -> vector<8x64xf32>
    %83 = vector.broadcast %6 : vector<1x64xf32> to vector<8x64xf32>
    %84 = arith.addf %82, %83 : vector<8x64xf32>
    %cst_39 = arith.constant 5.000000e-01 : f32
    %85 = vector.broadcast %cst_39 : f32 to vector<8x64xf32>
    %86 = arith.mulf %85, %84 : vector<8x64xf32>
    %cst_40 = arith.constant 0.707106769 : f32
    %87 = vector.broadcast %cst_40 : f32 to vector<8x64xf32>
    %88 = arith.mulf %84, %87 : vector<8x64xf32>
    %89 = math.erf %88 : vector<8x64xf32>
    %cst_41 = arith.constant 1.000000e+00 : f32
    %90 = vector.broadcast %cst_41 : f32 to vector<8x64xf32>
    %91 = arith.addf %90, %89 : vector<8x64xf32>
    %92 = arith.mulf %86, %91 : vector<8x64xf32>
    %cst_42 = arith.constant dense<0.000000e+00> : vector<8x32xf32>
    %93 = tpu.matmul %92, %5, %cst_42 {dimension_numbers = #tpu.dot_dimension_numbers<[1], [0], [0], [1], [0, 0, 1, 1], [], []>} : vector<8x64xf32>, vector<64x32xf32>, vector<8x32xf32> -> vector<8x32xf32>
    %94 = vector.broadcast %12 : vector<1x32xf32> to vector<8x32xf32>
    %95 = arith.addf %93, %94 : vector<8x32xf32>
    %96 = arith.addf %81, %95 : vector<8x32xf32>
    %cst_43 = arith.constant dense<0.000000e+00> : vector<8xf32>
    %97 = vector.multi_reduction <add>, %96, %cst_43 [1] : vector<8x32xf32> to vector<8xf32>
    %98 = vector.shape_cast %97 : vector<8xf32> to vector<8x1xf32>
    %cst_44 = arith.constant 3.200000e+01 : f32
    %99 = vector.broadcast %cst_44 : f32 to vector<8x1xf32>
    %100 = arith.divf %98, %99 : vector<8x1xf32>
    %101 = vector.broadcast %100 : vector<8x1xf32> to vector<8x32xf32>
    %102 = arith.subf %96, %101 : vector<8x32xf32>
    %103 = arith.mulf %102, %102 : vector<8x32xf32>
    %cst_45 = arith.constant dense<0.000000e+00> : vector<8xf32>
    %104 = vector.multi_reduction <add>, %103, %cst_45 [1] : vector<8x32xf32> to vector<8xf32>
    %105 = vector.shape_cast %104 : vector<8xf32> to vector<8x1xf32>
    %cst_46 = arith.constant 3.200000e+01 : f32
    %106 = vector.broadcast %cst_46 : f32 to vector<8x1xf32>
    %107 = arith.divf %105, %106 : vector<8x1xf32>
    %108 = vector.broadcast %100 : vector<8x1xf32> to vector<8x32xf32>
    %109 = arith.subf %96, %108 : vector<8x32xf32>
    %cst_47 = arith.constant 9.99999974E-6 : f32
    %110 = vector.broadcast %cst_47 : f32 to vector<8x1xf32>
    %111 = arith.addf %107, %110 : vector<8x1xf32>
    %112 = math.rsqrt %111 : vector<8x1xf32>
    %113 = vector.broadcast %112 : vector<8x1xf32> to vector<8x32xf32>
    %114 = arith.mulf %109, %113 : vector<8x32xf32>
    %115 = vector.broadcast %15 : vector<1x32xf32> to vector<8x32xf32>
    %116 = arith.mulf %114, %115 : vector<8x32xf32>
    %117 = vector.broadcast %16 : vector<1x32xf32> to vector<8x32xf32>
    %118 = arith.addf %116, %117 : vector<8x32xf32>
    %c0_48 = arith.constant 0 : index
    %c0_49 = arith.constant 0 : index
    %c0_50 = arith.constant 0 : index
    %119 = vector.load %arg11[%c0_48, %c0_49, %c0_50] : memref<1x8x32xf32, #tpu.memory_space<vmem>>, vector<1x8x32xf32>
    %120 = vector.shape_cast %119 : vector<1x8x32xf32> to vector<8x32xf32>
    %121 = vector.shape_cast %118 : vector<8x32xf32> to vector<1x8x32xf32>
    tpu.vector_store %arg11[%c0_48, %c0_49, %c0_50], %121 {strides = array<i32>} : memref<1x8x32xf32, #tpu.memory_space<vmem>>, vector<1x8x32xf32>,
    return
  }
  func.func @transform_0(%arg0: i32) -> (i32, i32, i32) {
    %c0_i32 = arith.constant 0 : i32
    %c0_i32_0 = arith.constant 0 : i32
    %c0_i32_1 = arith.constant 0 : i32
    return %arg0, %c0_i32, %c0_i32_0 : i32, i32, i32
  }
  func.func @transform_1(%arg0: i32) -> (i32, i32, i32) {
    %c0_i32 = arith.constant 0 : i32
    %c0_i32_0 = arith.constant 0 : i32
    %c0_i32_1 = arith.constant 0 : i32
    return %arg0, %c0_i32, %c0_i32_0 : i32, i32, i32
  }
  func.func @transform_2(%arg0: i32) -> (i32, i32) {
    %c0_i32 = arith.constant 0 : i32
    %c0_i32_0 = arith.constant 0 : i32
    %c0_i32_1 = arith.constant 0 : i32
    return %c0_i32, %c0_i32_0 : i32, i32
  }
  func.func @transform_3(%arg0: i32) -> (i32, i32) {
    %c0_i32 = arith.constant 0 : i32
    %c0_i32_0 = arith.constant 0 : i32
    %c0_i32_1 = arith.constant 0 : i32
    return %c0_i32, %c0_i32_0 : i32, i32
  }
  func.func @transform_4(%arg0: i32) -> (i32, i32) {
    %c0_i32 = arith.constant 0 : i32
    %c0_i32_0 = arith.constant 0 : i32
    %c0_i32_1 = arith.constant 0 : i32
    return %c0_i32, %c0_i32_0 : i32, i32
  }
  func.func @transform_5(%arg0: i32) -> (i32, i32) {
    %c0_i32 = arith.constant 0 : i32
    %c0_i32_0 = arith.constant 0 : i32
    %c0_i32_1 = arith.constant 0 : i32
    return %c0_i32, %c0_i32_0 : i32, i32
  }
  func.func @transform_6(%arg0: i32) -> (i32, i32) {
    %c0_i32 = arith.constant 0 : i32
    %c0_i32_0 = arith.constant 0 : i32
    %c0_i32_1 = arith.constant 0 : i32
    return %c0_i32, %c0_i32_0 : i32, i32
  }
  func.func @transform_7(%arg0: i32) -> (i32, i32) {
    %c0_i32 = arith.constant 0 : i32
    %c0_i32_0 = arith.constant 0 : i32
    %c0_i32_1 = arith.constant 0 : i32
    return %c0_i32, %c0_i32_0 : i32, i32
  }
  func.func @transform_8(%arg0: i32) -> (i32, i32) {
    %c0_i32 = arith.constant 0 : i32
    %c0_i32_0 = arith.constant 0 : i32
    %c0_i32_1 = arith.constant 0 : i32
    return %c0_i32, %c0_i32_0 : i32, i32
  }
  func.func @transform_9(%arg0: i32) -> (i32, i32) {
    %c0_i32 = arith.constant 0 : i32
    %c0_i32_0 = arith.constant 0 : i32
    %c0_i32_1 = arith.constant 0 : i32
    return %c0_i32, %c0_i32_0 : i32, i32
  }
  func.func @transform_10(%arg0: i32) -> (i32, i32, i32) {
    %c0_i32 = arith.constant 0 : i32
    %c0_i32_0 = arith.constant 0 : i32
    %c0_i32_1 = arith.constant 0 : i32
    return %arg0, %c0_i32, %c0_i32_0 : i32, i32, i32
  }
  func.func @transform_11(%arg0: i32) -> (i32, i32, i32) {
    %c0_i32 = arith.constant 0 : i32
    %c0_i32_0 = arith.constant 0 : i32
    %c0_i32_1 = arith.constant 0 : i32
    return %arg0, %c0_i32, %c0_i32_0 : i32, i32, i32
  }
}

module attributes {stable_mosaic.version = 11 : i64} {
  func.func @encoder_layer_kernel(%arg0: i32, %arg1: memref<1x8x32xf32, #tpu.memory_space<vmem>>, %arg2: memref<1x8x32xf32, #tpu.memory_space<vmem>>, %arg3: memref<32x32xf32, #tpu.memory_space<vmem>>, %arg4: memref<32x32xf32, #tpu.memory_space<vmem>>, %arg5: memref<32x32xf32, #tpu.memory_space<vmem>>, %arg6: memref<32x32xf32, #tpu.memory_space<vmem>>, %arg7: memref<32x64xf32, #tpu.memory_space<vmem>>, %arg8: memref<1x64xf32, #tpu.memory_space<vmem>>, %arg9: memref<64x32xf32, #tpu.memory_space<vmem>>, %arg10: memref<9x32xf32, #tpu.memory_space<vmem>>, %arg11: memref<1x8x32xf32, #tpu.memory_space<vmem>>, %arg12: memref<1x8x8xf32, #tpu.memory_space<vmem>>) attributes {dimension_semantics = [#tpu.dimension_semantics<parallel>], iteration_bounds = array<i64: 2>, scalar_prefetch = 0 : i64, scratch_operands = 0 : i64, tpu.core_type = #tpu.core_type<tc>, window_params = [{transform_indices = @transform_0, window_bounds = array<i64: 1, 8, 32>}, {transform_indices = @transform_1, window_bounds = array<i64: 1, 8, 32>}, {pipeline_mode = #tpu.pipeline_mode<synchronous>, transform_indices = @transform_2, window_bounds = array<i64: 32, 32>}, {pipeline_mode = #tpu.pipeline_mode<synchronous>, transform_indices = @transform_3, window_bounds = array<i64: 32, 32>}, {pipeline_mode = #tpu.pipeline_mode<synchronous>, transform_indices = @transform_4, window_bounds = array<i64: 32, 32>}, {pipeline_mode = #tpu.pipeline_mode<synchronous>, transform_indices = @transform_5, window_bounds = array<i64: 32, 32>}, {pipeline_mode = #tpu.pipeline_mode<synchronous>, transform_indices = @transform_6, window_bounds = array<i64: 32, 64>}, {pipeline_mode = #tpu.pipeline_mode<synchronous>, transform_indices = @transform_7, window_bounds = array<i64: 1, 64>}, {pipeline_mode = #tpu.pipeline_mode<synchronous>, transform_indices = @transform_8, window_bounds = array<i64: 64, 32>}, {pipeline_mode = #tpu.pipeline_mode<synchronous>, transform_indices = @transform_9, window_bounds = array<i64: 9, 32>}, {transform_indices = @transform_10, window_bounds = array<i64: 1, 8, 32>}, {transform_indices = @transform_11, window_bounds = array<i64: 1, 8, 8>}]} {
    %c0 = arith.constant 0 : index
    %c0_0 = arith.constant 0 : index
    %0 = vector.load %arg3[%c0, %c0_0] : memref<32x32xf32, #tpu.memory_space<vmem>>, vector<32x32xf32>
    %c0_1 = arith.constant 0 : index
    %c0_2 = arith.constant 0 : index
    %1 = vector.load %arg4[%c0_1, %c0_2] : memref<32x32xf32, #tpu.memory_space<vmem>>, vector<32x32xf32>
    %c0_3 = arith.constant 0 : index
    %c0_4 = arith.constant 0 : index
    %2 = vector.load %arg5[%c0_3, %c0_4] : memref<32x32xf32, #tpu.memory_space<vmem>>, vector<32x32xf32>
    %c0_5 = arith.constant 0 : index
    %c0_6 = arith.constant 0 : index
    %3 = vector.load %arg6[%c0_5, %c0_6] : memref<32x32xf32, #tpu.memory_space<vmem>>, vector<32x32xf32>
    %c0_7 = arith.constant 0 : index
    %c0_8 = arith.constant 0 : index
    %4 = vector.load %arg7[%c0_7, %c0_8] : memref<32x64xf32, #tpu.memory_space<vmem>>, vector<32x64xf32>
    %c0_9 = arith.constant 0 : index
    %c0_10 = arith.constant 0 : index
    %5 = vector.load %arg9[%c0_9, %c0_10] : memref<64x32xf32, #tpu.memory_space<vmem>>, vector<64x32xf32>
    %c0_11 = arith.constant 0 : index
    %c0_12 = arith.constant 0 : index
    %6 = vector.load %arg8[%c0_11, %c0_12] : memref<1x64xf32, #tpu.memory_space<vmem>>, vector<1x64xf32>
    %c0_13 = arith.constant 0 : index
    %c0_14 = arith.constant 0 : index
    %7 = vector.load %arg10[%c0_13, %c0_14] : memref<9x32xf32, #tpu.memory_space<vmem>>, vector<9x32xf32>
    %8 = vector.extract_strided_slice %7 {offsets = [0, 0], sizes = [1, 32], strides = [1, 1]} : vector<9x32xf32> to vector<1x32xf32>
    %9 = vector.extract_strided_slice %7 {offsets = [1, 0], sizes = [1, 32], strides = [1, 1]} : vector<9x32xf32> to vector<1x32xf32>
    %10 = vector.extract_strided_slice %7 {offsets = [2, 0], sizes = [1, 32], strides = [1, 1]} : vector<9x32xf32> to vector<1x32xf32>
    %11 = vector.extract_strided_slice %7 {offsets = [3, 0], sizes = [1, 32], strides = [1, 1]} : vector<9x32xf32> to vector<1x32xf32>
    %12 = vector.extract_strided_slice %7 {offsets = [4, 0], sizes = [1, 32], strides = [1, 1]} : vector<9x32xf32> to vector<1x32xf32>
    %13 = vector.extract_strided_slice %7 {offsets = [5, 0], sizes = [1, 32], strides = [1, 1]} : vector<9x32xf32> to vector<1x32xf32>
    %14 = vector.extract_strided_slice %7 {offsets = [6, 0], sizes = [1, 32], strides = [1, 1]} : vector<9x32xf32> to vector<1x32xf32>
    %15 = vector.extract_strided_slice %7 {offsets = [7, 0], sizes = [1, 32], strides = [1, 1]} : vector<9x32xf32> to vector<1x32xf32>
    %16 = vector.extract_strided_slice %7 {offsets = [8, 0], sizes = [1, 32], strides = [1, 1]} : vector<9x32xf32> to vector<1x32xf32>
    %c0_15 = arith.constant 0 : index
    %c0_16 = arith.constant 0 : index
    %c0_17 = arith.constant 0 : index
    %17 = vector.load %arg2[%c0_15, %c0_16, %c0_17] : memref<1x8x32xf32, #tpu.memory_space<vmem>>, vector<1x8x32xf32>
    %18 = vector.shape_cast %17 : vector<1x8x32xf32> to vector<8x32xf32>
    %c0_18 = arith.constant 0 : index
    %c0_19 = arith.constant 0 : index
    %c0_20 = arith.constant 0 : index
    %19 = vector.load %arg1[%c0_18, %c0_19, %c0_20] : memref<1x8x32xf32, #tpu.memory_space<vmem>>, vector<1x8x32xf32>
    %20 = vector.shape_cast %19 : vector<1x8x32xf32> to vector<8x32xf32>
    %cst = arith.constant dense<0.000000e+00> : vector<8x32xf32>
    %21 = tpu.matmul %20, %0, %cst {dimension_numbers = #tpu.dot_dimension_numbers<[1], [0], [0], [1], [0, 0, 1, 1], [], []>} : vector<8x32xf32>, vector<32x32xf32>, vector<8x32xf32> -> vector<8x32xf32>
    %22 = vector.broadcast %8 : vector<1x32xf32> to vector<8x32xf32>
    %23 = arith.addf %21, %22 : vector<8x32xf32>
    %cst_21 = arith.constant dense<0.000000e+00> : vector<8x32xf32>
    %24 = tpu.matmul %20, %1, %cst_21 {dimension_numbers = #tpu.dot_dimension_numbers<[1], [0], [0], [1], [0, 0, 1, 1], [], []>} : vector<8x32xf32>, vector<32x32xf32>, vector<8x32xf32> -> vector<8x32xf32>
    %25 = vector.broadcast %9 : vector<1x32xf32> to vector<8x32xf32>
    %26 = arith.addf %24, %25 : vector<8x32xf32>
    %cst_22 = arith.constant dense<0.000000e+00> : vector<8x32xf32>
    %27 = tpu.matmul %18, %2, %cst_22 {dimension_numbers = #tpu.dot_dimension_numbers<[1], [0], [0], [1], [0, 0, 1, 1], [], []>} : vector<8x32xf32>, vector<32x32xf32>, vector<8x32xf32> -> vector<8x32xf32>
    %28 = vector.broadcast %10 : vector<1x32xf32> to vector<8x32xf32>
    %29 = arith.addf %27, %28 : vector<8x32xf32>
    %30 = vector.shape_cast %23 : vector<8x32xf32> to vector<8x4x8xf32>
    %31 = tpu.transpose %30, [1, 0, 2] : vector<8x4x8xf32> -> vector<4x8x8xf32>
    %32 = vector.shape_cast %26 : vector<8x32xf32> to vector<8x4x8xf32>
    %33 = tpu.transpose %32, [1, 0, 2] : vector<8x4x8xf32> -> vector<4x8x8xf32>
    %34 = vector.shape_cast %29 : vector<8x32xf32> to vector<8x4x8xf32>
    %35 = tpu.transpose %34, [1, 0, 2] : vector<8x4x8xf32> -> vector<4x8x8xf32>
    "tpu.trace_start"() <{level = 10 : i32, message = "hqd,hkd->hqk"}> : () -> ()
    %cst_23 = arith.constant dense<0.000000e+00> : vector<4x8x8xf32>
    %36 = tpu.matmul %31, %33, %cst_23 {dimension_numbers = #tpu.dot_dimension_numbers<[2], [2], [1], [1], [0, 0, 0, 1, 1, 1], [0], [0]>} : vector<4x8x8xf32>, vector<4x8x8xf32>, vector<4x8x8xf32> -> vector<4x8x8xf32>
    "tpu.trace_stop"() : () -> ()
    %cst_24 = arith.constant dense<0xFF800000> : vector<4x8xf32>
    %37 = vector.multi_reduction <maximumf>, %36, %cst_24 [2] : vector<4x8x8xf32> to vector<4x8xf32>
    %38 = vector.shape_cast %37 : vector<4x8xf32> to vector<4x8x1xf32>
    %39 = vector.broadcast %38 : vector<4x8x1xf32> to vector<4x8x8xf32>
    %40 = arith.subf %36, %39 : vector<4x8x8xf32>
    %41 = math.exp %40 : vector<4x8x8xf32>
    %cst_25 = arith.constant dense<0.000000e+00> : vector<4x8xf32>
    %42 = vector.multi_reduction <add>, %41, %cst_25 [2] : vector<4x8x8xf32> to vector<4x8xf32>
    %43 = vector.shape_cast %42 : vector<4x8xf32> to vector<4x8x1xf32>
    %44 = tpu.reciprocal %43 : vector<4x8x1xf32> -> vector<4x8x1xf32>
    %45 = vector.broadcast %44 : vector<4x8x1xf32> to vector<4x8x8xf32>
    %46 = arith.mulf %41, %45 : vector<4x8x8xf32>
    %cst_26 = arith.constant dense<0.000000e+00> : vector<8x8xf32>
    %47 = vector.multi_reduction <add>, %46, %cst_26 [0] : vector<4x8x8xf32> to vector<8x8xf32>
    %cst_27 = arith.constant 2.500000e-01 : f32
    %48 = vector.broadcast %cst_27 : f32 to vector<8x8xf32>
    %49 = arith.mulf %47, %48 : vector<8x8xf32>
    %c0_28 = arith.constant 0 : index
    %c0_29 = arith.constant 0 : index
    %c0_30 = arith.constant 0 : index
    %50 = vector.load %arg12[%c0_28, %c0_29, %c0_30] : memref<1x8x8xf32, #tpu.memory_space<vmem>>, vector<1x8x8xf32>
    %51 = vector.shape_cast %50 : vector<1x8x8xf32> to vector<8x8xf32>
    %52 = vector.shape_cast %49 : vector<8x8xf32> to vector<1x8x8xf32>
    tpu.vector_store %arg12[%c0_28, %c0_29, %c0_30], %52 {strides = array<i32>} : memref<1x8x8xf32, #tpu.memory_space<vmem>>, vector<1x8x8xf32>,
    "tpu.trace_start"() <{level = 10 : i32, message = "hqk,hkd->hqd"}> : () -> ()
    %cst_31 = arith.constant dense<0.000000e+00> : vector<4x8x8xf32>
    %53 = tpu.matmul %46, %35, %cst_31 {dimension_numbers = #tpu.dot_dimension_numbers<[2], [1], [1], [2], [0, 0, 0, 1, 1, 2], [0], [0]>} : vector<4x8x8xf32>, vector<4x8x8xf32>, vector<4x8x8xf32> -> vector<4x8x8xf32>
    "tpu.trace_stop"() : () -> ()
    %54 = tpu.transpose %53, [1, 0, 2] : vector<4x8x8xf32> -> vector<8x4x8xf32>
    %55 = vector.shape_cast %54 : vector<8x4x8xf32> to vector<8x32xf32>
    %cst_32 = arith.constant dense<0.000000e+00> : vector<8x32xf32>
    %56 = tpu.matmul %55, %3, %cst_32 {dimension_numbers = #tpu.dot_dimension_numbers<[1], [0], [0], [1], [0, 0, 1, 1], [], []>} : vector<8x32xf32>, vector<32x32xf32>, vector<8x32xf32> -> vector<8x32xf32>
    %57 = vector.broadcast %11 : vector<1x32xf32> to vector<8x32xf32>
    %58 = arith.addf %56, %57 : vector<8x32xf32>
    %59 = arith.addf %18, %58 : vector<8x32xf32>
    %cst_33 = arith.constant dense<0.000000e+00> : vector<8xf32>
    %60 = vector.multi_reduction <add>, %59, %cst_33 [1] : vector<8x32xf32> to vector<8xf32>
    %61 = vector.shape_cast %60 : vector<8xf32> to vector<8x1xf32>
    %cst_34 = arith.constant 3.200000e+01 : f32
    %62 = vector.broadcast %cst_34 : f32 to vector<8x1xf32>
    %63 = arith.divf %61, %62 : vector<8x1xf32>
    %64 = vector.broadcast %63 : vector<8x1xf32> to vector<8x32xf32>
    %65 = arith.subf %59, %64 : vector<8x32xf32>
    %66 = arith.mulf %65, %65 : vector<8x32xf32>
    %cst_35 = arith.constant dense<0.000000e+00> : vector<8xf32>
    %67 = vector.multi_reduction <add>, %66, %cst_35 [1] : vector<8x32xf32> to vector<8xf32>
    %68 = vector.shape_cast %67 : vector<8xf32> to vector<8x1xf32>
    %cst_36 = arith.constant 3.200000e+01 : f32
    %69 = vector.broadcast %cst_36 : f32 to vector<8x1xf32>
    %70 = arith.divf %68, %69 : vector<8x1xf32>
    %71 = vector.broadcast %63 : vector<8x1xf32> to vector<8x32xf32>
    %72 = arith.subf %59, %71 : vector<8x32xf32>
    %cst_37 = arith.constant 9.99999974E-6 : f32
    %73 = vector.broadcast %cst_37 : f32 to vector<8x1xf32>
    %74 = arith.addf %70, %73 : vector<8x1xf32>
    %75 = math.rsqrt %74 : vector<8x1xf32>
    %76 = vector.broadcast %75 : vector<8x1xf32> to vector<8x32xf32>
    %77 = arith.mulf %72, %76 : vector<8x32xf32>
    %78 = vector.broadcast %13 : vector<1x32xf32> to vector<8x32xf32>
    %79 = arith.mulf %77, %78 : vector<8x32xf32>
    %80 = vector.broadcast %14 : vector<1x32xf32> to vector<8x32xf32>
    %81 = arith.addf %79, %80 : vector<8x32xf32>
    %cst_38 = arith.constant dense<0.000000e+00> : vector<8x64xf32>
    %82 = tpu.matmul %81, %4, %cst_38 {dimension_numbers = #tpu.dot_dimension_numbers<[1], [0], [0], [1], [0, 0, 1, 1], [], []>} : vector<8x32xf32>, vector<32x64xf32>, vector<8x64xf32> -> vector<8x64xf32>
    %83 = vector.broadcast %6 : vector<1x64xf32> to vector<8x64xf32>
    %84 = arith.addf %82, %83 : vector<8x64xf32>
    %cst_39 = arith.constant 5.000000e-01 : f32
    %85 = vector.broadcast %cst_39 : f32 to vector<8x64xf32>
    %86 = arith.mulf %85, %84 : vector<8x64xf32>
    %cst_40 = arith.constant 0.707106769 : f32
    %87 = vector.broadcast %cst_40 : f32 to vector<8x64xf32>
    %88 = arith.mulf %84, %87 : vector<8x64xf32>
    %89 = math.erf %88 : vector<8x64xf32>
    %cst_41 = arith.constant 1.000000e+00 : f32
    %90 = vector.broadcast %cst_41 : f32 to vector<8x64xf32>
    %91 = arith.addf %90, %89 : vector<8x64xf32>
    %92 = arith.mulf %86, %91 : vector<8x64xf32>
    %cst_42 = arith.constant dense<0.000000e+00> : vector<8x32xf32>
    %93 = tpu.matmul %92, %5, %cst_42 {dimension_numbers = #tpu.dot_dimension_numbers<[1], [0], [0], [1], [0, 0, 1, 1], [], []>} : vector<8x64xf32>, vector<64x32xf32>, vector<8x32xf32> -> vector<8x32xf32>
    %94 = vector.broadcast %12 : vector<1x32xf32> to vector<8x32xf32>
    %95 = arith.addf %93, %94 : vector<8x32xf32>
    %96 = arith.addf %81, %95 : vector<8x32xf32>
    %cst_43 = arith.constant dense<0.000000e+00> : vector<8xf32>
    %97 = vector.multi_reduction <add>, %96, %cst_43 [1] : vector<8x32xf32> to vector<8xf32>
    %98 = vector.shape_cast %97 : vector<8xf32> to vector<8x1xf32>
    %cst_44 = arith.constant 3.200000e+01 : f32
    %99 = vector.broadcast %cst_44 : f32 to vector<8x1xf32>
    %100 = arith.divf %98, %99 : vector<8x1xf32>
    %101 = vector.broadcast %100 : vector<8x1xf32> to vector<8x32xf32>
    %102 = arith.subf %96, %101 : vector<8x32xf32>
    %103 = arith.mulf %102, %102 : vector<8x32xf32>
    %cst_45 = arith.constant dense<0.000000e+00> : vector<8xf32>
    %104 = vector.multi_reduction <add>, %103, %cst_45 [1] : vector<8x32xf32> to vector<8xf32>
    %105 = vector.shape_cast %104 : vector<8xf32> to vector<8x1xf32>
    %cst_46 = arith.constant 3.200000e+01 : f32
    %106 = vector.broadcast %cst_46 : f32 to vector<8x1xf32>
    %107 = arith.divf %105, %106 : vector<8x1xf32>
    %108 = vector.broadcast %100 : vector<8x1xf32> to vector<8x32xf32>
    %109 = arith.subf %96, %108 : vector<8x32xf32>
    %cst_47 = arith.constant 9.99999974E-6 : f32
    %110 = vector.broadcast %cst_47 : f32 to vector<8x1xf32>
    %111 = arith.addf %107, %110 : vector<8x1xf32>
    %112 = math.rsqrt %111 : vector<8x1xf32>
    %113 = vector.broadcast %112 : vector<8x1xf32> to vector<8x32xf32>
    %114 = arith.mulf %109, %113 : vector<8x32xf32>
    %115 = vector.broadcast %15 : vector<1x32xf32> to vector<8x32xf32>
    %116 = arith.mulf %114, %115 : vector<8x32xf32>
    %117 = vector.broadcast %16 : vector<1x32xf32> to vector<8x32xf32>
    %118 = arith.addf %116, %117 : vector<8x32xf32>
    %c0_48 = arith.constant 0 : index
    %c0_49 = arith.constant 0 : index
    %c0_50 = arith.constant 0 : index
    %119 = vector.load %arg11[%c0_48, %c0_49, %c0_50] : memref<1x8x32xf32, #tpu.memory_space<vmem>>, vector<1x8x32xf32>
    %120 = vector.shape_cast %119 : vector<1x8x32xf32> to vector<8x32xf32>
    %121 = vector.shape_cast %118 : vector<8x32xf32> to vector<1x8x32xf32>
    tpu.vector_store %arg11[%c0_48, %c0_49, %c0_50], %121 {strides = array<i32>} : memref<1x8x32xf32, #tpu.memory_space<vmem>>, vector<1x8x32xf32>,
    return
  }
  func.func @transform_0(%arg0: i32) -> (i32, i32, i32) {
    %c0_i32 = arith.constant 0 : i32
    %c0_i32_0 = arith.constant 0 : i32
    %c0_i32_1 = arith.constant 0 : i32
    return %arg0, %c0_i32, %c0_i32_0 : i32, i32, i32
  }
  func.func @transform_1(%arg0: i32) -> (i32, i32, i32) {
    %c0_i32 = arith.constant 0 : i32
    %c0_i32_0 = arith.constant 0 : i32
    %c0_i32_1 = arith.constant 0 : i32
    return %arg0, %c0_i32, %c0_i32_0 : i32, i32, i32
  }
  func.func @transform_2(%arg0: i32) -> (i32, i32) {
    %c0_i32 = arith.constant 0 : i32
    %c0_i32_0 = arith.constant 0 : i32
    %c0_i32_1 = arith.constant 0 : i32
    return %c0_i32, %c0_i32_0 : i32, i32
  }
  func.func @transform_3(%arg0: i32) -> (i32, i32) {
    %c0_i32 = arith.constant 0 : i32
    %c0_i32_0 = arith.constant 0 : i32
    %c0_i32_1 = arith.constant 0 : i32
    return %c0_i32, %c0_i32_0 : i32, i32
  }
  func.func @transform_4(%arg0: i32) -> (i32, i32) {
    %c0_i32 = arith.constant 0 : i32
    %c0_i32_0 = arith.constant 0 : i32
    %c0_i32_1 = arith.constant 0 : i32
    return %c0_i32, %c0_i32_0 : i32, i32
  }
  func.func @transform_5(%arg0: i32) -> (i32, i32) {
    %c0_i32 = arith.constant 0 : i32
    %c0_i32_0 = arith.constant 0 : i32
    %c0_i32_1 = arith.constant 0 : i32
    return %c0_i32, %c0_i32_0 : i32, i32
  }
  func.func @transform_6(%arg0: i32) -> (i32, i32) {
    %c0_i32 = arith.constant 0 : i32
    %c0_i32_0 = arith.constant 0 : i32
    %c0_i32_1 = arith.constant 0 : i32
    return %c0_i32, %c0_i32_0 : i32, i32
  }
  func.func @transform_7(%arg0: i32) -> (i32, i32) {
    %c0_i32 = arith.constant 0 : i32
    %c0_i32_0 = arith.constant 0 : i32
    %c0_i32_1 = arith.constant 0 : i32
    return %c0_i32, %c0_i32_0 : i32, i32
  }
  func.func @transform_8(%arg0: i32) -> (i32, i32) {
    %c0_i32 = arith.constant 0 : i32
    %c0_i32_0 = arith.constant 0 : i32
    %c0_i32_1 = arith.constant 0 : i32
    return %c0_i32, %c0_i32_0 : i32, i32
  }
  func.func @transform_9(%arg0: i32) -> (i32, i32) {
    %c0_i32 = arith.constant 0 : i32
    %c0_i32_0 = arith.constant 0 : i32
    %c0_i32_1 = arith.constant 0 : i32
    return %c0_i32, %c0_i32_0 : i32, i32
  }
  func.func @transform_10(%arg0: i32) -> (i32, i32, i32) {
    %c0_i32 = arith.constant 0 : i32
    %c0_i32_0 = arith.constant 0 : i32
    %c0_i32_1 = arith.constant 0 : i32
    return %arg0, %c0_i32, %c0_i32_0 : i32, i32, i32
  }
  func.func @transform_11(%arg0: i32) -> (i32, i32, i32) {
    %c0_i32 = arith.constant 0 : i32
    %c0_i32_0 = arith.constant 0 : i32
    %c0_i32_1 = arith.constant 0 : i32
    return %arg0, %c0_i32, %c0_i32_0 : i32, i32, i32
  }
}

</mosaic_0001>

<llo_original>
// kernel: tpu_custom_call.1
$region0: #{tpu_custom_call.1}
  #allocation0 [shape = 'u32[]', space=smem, size = 0x4, offset = 0x4, fixed_abs, tag = 'smem constant byte address 0x4 - core index']
  #allocation1 [shape = 'u32[144,128]{1,0:T(1,128)}', space=vmem, size = 0x12000, scoped, tag = 'internal scratch']
  %s0 = inlined_call_operand.hbm [shape: f32[2,8,32], index: 0, kind: input, shape index: {}]
  %s1 = inlined_call_operand.hbm [shape: f32[2,8,32], index: 1, kind: input, shape index: {}]
  %s2 = inlined_call_operand.vmem [shape: f32[32,32], index: 2, kind: input, shape index: {}]
  %s3 = inlined_call_operand.vmem [shape: f32[32,32], index: 3, kind: input, shape index: {}]
  %s4 = inlined_call_operand.vmem [shape: f32[32,32], index: 4, kind: input, shape index: {}]
  %s5 = inlined_call_operand.hbm [shape: f32[32,32], index: 5, kind: input, shape index: {}]
  %s6 = inlined_call_operand.hbm [shape: f32[32,64], index: 6, kind: input, shape index: {}]
  %s7 = inlined_call_operand.vmem [shape: f32[1,64], index: 7, kind: input, shape index: {}]
  %s8 = inlined_call_operand.vmem [shape: f32[64,32], index: 8, kind: input, shape index: {}]
  %s9 = inlined_call_operand.vmem [shape: f32[9,32], index: 9, kind: input, shape index: {}]
  %s10 = inlined_call_operand.hbm [shape: f32[2,8,32], index: 10, kind: output, shape index: {0}]
  %s11 = inlined_call_operand.hbm [shape: f32[2,8,8], index: 11, kind: output, shape index: {1}]
  %12 = xla_tuple %s10, %s11
  %s13 = sld [smem:[#allocation0]]
  $region97: #{tpu_custom_call.1} parent=0
    _
  %s15 = ssub.s32 1, %s13
  %s16 = scalar_select 0, %s15, %s13
  $region1: #{tpu_custom_call.1} parent=0
    #allocation2 [shape = 'u8[8192]{0}', space=vmem, size = 0x2000, scoped, tag = 'input window, operand 0']
    #allocation3 [shape = 's32[2]{0}', space=sflag, size = 0x8, scoped, tag = 'scoped memory for tpu_custom_call.1']
    #allocation4 [shape = 's32[2]{0}', space=sflag, size = 0x8, scoped, tag = 'scoped memory for tpu_custom_call.1']
    #allocation5 [shape = 'u8[8192]{0}', space=vmem, size = 0x2000, scoped, tag = 'input window, operand 1']
    #allocation6 [shape = 's32[2]{0}', space=sflag, size = 0x8, scoped, tag = 'scoped memory for tpu_custom_call.1']
    #allocation7 [shape = 'u8[16384]{0}', space=vmem, size = 0x4000, scoped, tag = 'input window, operand 5, single buffered']
    #allocation8 [shape = 'u8[16384]{0}', space=vmem, size = 0x4000, scoped, tag = 'input window, operand 6, single buffered']
    #allocation9 [shape = 's32[1]{0}', space=sflag, size = 0x4, scoped, tag = 'scoped memory for tpu_custom_call.1']
    #allocation10 [shape = 'u8[8192]{0}', space=vmem, size = 0x2000, scoped, tag = 'output window, operand 0']
    #allocation11 [shape = 'u8[8192]{0}', space=vmem, size = 0x2000, scoped, tag = 'output window, operand 1']
    #allocation12 [shape = 's32[2]{0}', space=sflag, size = 0x8, scoped, tag = 'scoped memory for tpu_custom_call.1']
    %17 = vsyncpa [#allocation3], 0
    %s18 = scalar_lea.sflag [#allocation3], 1
    %19 = vsyncpa %s18, 0
    %20 = vsyncpa [#allocation6], 0
    %s21 = scalar_lea.sflag [#allocation6], 1
    %22 = vsyncpa %s21, 0
    %23 = vsyncpa [#allocation9], 0
    %24 = vsyncpa [#allocation4], 0
    %s25 = scalar_lea.sflag [#allocation4], 1
    %26 = vsyncpa %s25, 0
    %27 = vsyncpa [#allocation12], 0
    %s28 = scalar_lea.sflag [#allocation12], 1
    %29 = vsyncpa %s28, 0
    loop: start=0, step=1, limit=4
    $region2: #{tpu_custom_call.1} parent=1 // loop_pre_header
      _
    $region3: #{tpu_custom_call.1} parent=1 // loop_header
      %s31 = sphi 0, %s35
      %p32 = scmp.ge.s32.totalorder %s31, 4
      %s41 = sphi 0, %s43
      %s44 = sphi 0, %s41
      %s45 = sphi 0, %s44
      %s61 = sphi 0, %s45
      %s67 = sphi 0, %s69
      %s70 = sphi 0, %s67
      %s71 = sphi 0, %s70
      %s87 = sphi 0, %s71
      %s91 = sphi 0, %s91
      %s93 = sphi 0, %s91
      %s94 = sphi 0, %s93
      %s108 = sphi 0, %s94
      %s112 = sphi 0, %s112
      %s114 = sphi 0, %s112
      %s115 = sphi 0, %s114
      %s129 = sphi 0, %s115
      %s133 = sphi 0, %s133
      %s135 = sphi 0, %s133
      %s136 = sphi 0, %s135
      %s150 = sphi 0, %s136
      %s154 = sphi 0, %s154
      %s156 = sphi 0, %s154
      %s157 = sphi 0, %s156
      %s171 = sphi 0, %s157
      %s175 = sphi 0, %s175
      %s177 = sphi 0, %s175
      %s178 = sphi 0, %s177
      %s192 = sphi 0, %s178
      %s196 = sphi 0, %s196
      %s198 = sphi 0, %s196
      %s199 = sphi 0, %s198
      %s213 = sphi 0, %s199
      %s217 = sphi 0, %s217
      %s219 = sphi 0, %s217
      %s220 = sphi 0, %s219
      %s234 = sphi 0, %s220
      %s238 = sphi 0, %s238
      %s240 = sphi 0, %s238
      %s241 = sphi 0, %s240
      %s255 = sphi 0, %s241
      %s261 = sphi 0, %s263
      %s264 = sphi 0, %s261
      %s265 = sphi 0, %s264
      %s281 = sphi 0, %s265
      %s287 = sphi 0, %s289
      %s290 = sphi 0, %s287
      %s291 = sphi 0, %s290
      %s307 = sphi 0, %s291
    $region4: #{tpu_custom_call.1} parent=1 // loop_header_branch
      %34 = sbr.rel (%p32) target = $region8
    $region5: #{tpu_custom_call.1} parent=1 // loop_body
      %s36 = ssub.s32 %s31, 1
      %s37 = ssub.s32 %s31, 2
      %s38 = sadd.s32 %s31, 1
      %s39 = ssub.s32 %s31, %s38
      %p40 = scmp.eq.s32.totalorder %s39, 0
      %s42 = sadd.s32 %s41, 1
      %s43 = scalar_select %p40, %s41, %s42
      %p46 = pneg %p40
      %p47 = scmp.eq.s32.totalorder %s31, 1
      %p48 = por %p46, %p47
      %p49 = scmp.ne.s32.totalorder %s41, %s44
      %p50 = scmp.eq.s32.totalorder %s31, 0
      %p51 = por %p49, %p50
      %p52 = scmp.ne.s32.totalorder %s41, %s44
      %p53 = scmp.eq.s32.totalorder %s36, 1
      %p54 = por %p52, %p53
      %p55 = scmp.ne.s32.totalorder %s44, %s45
      %p56 = scmp.eq.s32.totalorder %s36, 0
      %p57 = por %p55, %p56
      %p58 = scmp.ne.s32.totalorder %s44, %s45
      %p59 = scmp.eq.s32.totalorder %s37, 1
      %p60 = por %p58, %p59
      %p62 = scmp.ne.s32.totalorder %s45, %s61
      %p63 = scmp.eq.s32.totalorder %s37, 0
      %p64 = por %p62, %p63
      %s65 = ssub.s32 %s31, %s38
      %p66 = scmp.eq.s32.totalorder %s65, 0
      %s68 = sadd.s32 %s67, 1
      %s69 = scalar_select %p66, %s67, %s68
      %p72 = pneg %p66
      %p73 = scmp.eq.s32.totalorder %s31, 1
      %p74 = por %p72, %p73
      %p75 = scmp.ne.s32.totalorder %s67, %s70
      %p76 = scmp.eq.s32.totalorder %s31, 0
      %p77 = por %p75, %p76
      %p78 = scmp.ne.s32.totalorder %s67, %s70
      %p79 = scmp.eq.s32.totalorder %s36, 1
      %p80 = por %p78, %p79
      %p81 = scmp.ne.s32.totalorder %s70, %s71
      %p82 = scmp.eq.s32.totalorder %s36, 0
      %p83 = por %p81, %p82
      %p84 = scmp.ne.s32.totalorder %s70, %s71
      %p85 = scmp.eq.s32.totalorder %s37, 1
      %p86 = por %p84, %p85
      %p88 = scmp.ne.s32.totalorder %s71, %s87
      %p89 = scmp.eq.s32.totalorder %s37, 0
      %p90 = por %p88, %p89
      %s92 = sadd.s32 %s91, 1
      %p95 = scmp.eq.s32.totalorder %s31, 1
      %p96 = scmp.ne.s32.totalorder %s91, %s93
      %p97 = scmp.eq.s32.totalorder %s31, 0
      %p98 = por %p96, %p97
      %p99 = scmp.ne.s32.totalorder %s91, %s93
      %p100 = scmp.eq.s32.totalorder %s36, 1
      %p101 = por %p99, %p100
      %p102 = scmp.ne.s32.totalorder %s93, %s94
      %p103 = scmp.eq.s32.totalorder %s36, 0
      %p104 = por %p102, %p103
      %p105 = scmp.ne.s32.totalorder %s93, %s94
      %p106 = scmp.eq.s32.totalorder %s37, 1
      %p107 = por %p105, %p106
      %p109 = scmp.ne.s32.totalorder %s94, %s108
      %p110 = scmp.eq.s32.totalorder %s37, 0
      %p111 = por %p109, %p110
      %s113 = sadd.s32 %s112, 1
      %p116 = scmp.eq.s32.totalorder %s31, 1
      %p117 = scmp.ne.s32.totalorder %s112, %s114
      %p118 = scmp.eq.s32.totalorder %s31, 0
      %p119 = por %p117, %p118
      %p120 = scmp.ne.s32.totalorder %s112, %s114
      %p121 = scmp.eq.s32.totalorder %s36, 1
      %p122 = por %p120, %p121
      %p123 = scmp.ne.s32.totalorder %s114, %s115
      %p124 = scmp.eq.s32.totalorder %s36, 0
      %p125 = por %p123, %p124
      %p126 = scmp.ne.s32.totalorder %s114, %s115
      %p127 = scmp.eq.s32.totalorder %s37, 1
      %p128 = por %p126, %p127
      %p130 = scmp.ne.s32.totalorder %s115, %s129
      %p131 = scmp.eq.s32.totalorder %s37, 0
      %p132 = por %p130, %p131
      %s134 = sadd.s32 %s133, 1
      %p137 = scmp.eq.s32.totalorder %s31, 1
      %p138 = scmp.ne.s32.totalorder %s133, %s135
      %p139 = scmp.eq.s32.totalorder %s31, 0
      %p140 = por %p138, %p139
      %p141 = scmp.ne.s32.totalorder %s133, %s135
      %p142 = scmp.eq.s32.totalorder %s36, 1
      %p143 = por %p141, %p142
      %p144 = scmp.ne.s32.totalorder %s135, %s136
      %p145 = scmp.eq.s32.totalorder %s36, 0
      %p146 = por %p144, %p145
      %p147 = scmp.ne.s32.totalorder %s135, %s136
      %p148 = scmp.eq.s32.totalorder %s37, 1
      %p149 = por %p147, %p148
      %p151 = scmp.ne.s32.totalorder %s136, %s150
      %p152 = scmp.eq.s32.totalorder %s37, 0
      %p153 = por %p151, %p152
      %s155 = sadd.s32 %s154, 1
      %p158 = scmp.eq.s32.totalorder %s31, 1
      %p159 = scmp.ne.s32.totalorder %s154, %s156
      %p160 = scmp.eq.s32.totalorder %s31, 0
      %p161 = por %p159, %p160
      %p162 = scmp.ne.s32.totalorder %s154, %s156
      %p163 = scmp.eq.s32.totalorder %s36, 1
      %p164 = por %p162, %p163
      %p165 = scmp.ne.s32.totalorder %s156, %s157
      %p166 = scmp.eq.s32.totalorder %s36, 0
      %p167 = por %p165, %p166
      %p168 = scmp.ne.s32.totalorder %s156, %s157
      %p169 = scmp.eq.s32.totalorder %s37, 1
      %p170 = por %p168, %p169
      %p172 = scmp.ne.s32.totalorder %s157, %s171
      %p173 = scmp.eq.s32.totalorder %s37, 0
      %p174 = por %p172, %p173
      %s176 = sadd.s32 %s175, 1
      %p179 = scmp.eq.s32.totalorder %s31, 1
      %p180 = scmp.ne.s32.totalorder %s175, %s177
      %p181 = scmp.eq.s32.totalorder %s31, 0
      %p182 = por %p180, %p181
      %p183 = scmp.ne.s32.totalorder %s175, %s177
      %p184 = scmp.eq.s32.totalorder %s36, 1
      %p185 = por %p183, %p184
      %p186 = scmp.ne.s32.totalorder %s177, %s178
      %p187 = scmp.eq.s32.totalorder %s36, 0
      %p188 = por %p186, %p187
      %p189 = scmp.ne.s32.totalorder %s177, %s178
      %p190 = scmp.eq.s32.totalorder %s37, 1
      %p191 = por %p189, %p190
      %p193 = scmp.ne.s32.totalorder %s178, %s192
      %p194 = scmp.eq.s32.totalorder %s37, 0
      %p195 = por %p193, %p194
      %s197 = sadd.s32 %s196, 1
      %p200 = scmp.eq.s32.totalorder %s31, 1
      %p201 = scmp.ne.s32.totalorder %s196, %s198
      %p202 = scmp.eq.s32.totalorder %s31, 0
      %p203 = por %p201, %p202
      %p204 = scmp.ne.s32.totalorder %s196, %s198
      %p205 = scmp.eq.s32.totalorder %s36, 1
      %p206 = por %p204, %p205
      %p207 = scmp.ne.s32.totalorder %s198, %s199
      %p208 = scmp.eq.s32.totalorder %s36, 0
      %p209 = por %p207, %p208
      %p210 = scmp.ne.s32.totalorder %s198, %s199
      %p211 = scmp.eq.s32.totalorder %s37, 1
      %p212 = por %p210, %p211
      %p214 = scmp.ne.s32.totalorder %s199, %s213
      %p215 = scmp.eq.s32.totalorder %s37, 0
      %p216 = por %p214, %p215
      %s218 = sadd.s32 %s217, 1
      %p221 = scmp.eq.s32.totalorder %s31, 1
      %p222 = scmp.ne.s32.totalorder %s217, %s219
      %p223 = scmp.eq.s32.totalorder %s31, 0
      %p224 = por %p222, %p223
      %p225 = scmp.ne.s32.totalorder %s217, %s219
      %p226 = scmp.eq.s32.totalorder %s36, 1
      %p227 = por %p225, %p226
      %p228 = scmp.ne.s32.totalorder %s219, %s220
      %p229 = scmp.eq.s32.totalorder %s36, 0
      %p230 = por %p228, %p229
      %p231 = scmp.ne.s32.totalorder %s219, %s220
      %p232 = scmp.eq.s32.totalorder %s37, 1
      %p233 = por %p231, %p232
      %p235 = scmp.ne.s32.totalorder %s220, %s234
      %p236 = scmp.eq.s32.totalorder %s37, 0
      %p237 = por %p235, %p236
      %s239 = sadd.s32 %s238, 1
      %p242 = scmp.eq.s32.totalorder %s31, 1
      %p243 = scmp.ne.s32.totalorder %s238, %s240
      %p244 = scmp.eq.s32.totalorder %s31, 0
      %p245 = por %p243, %p244
      %p246 = scmp.ne.s32.totalorder %s238, %s240
      %p247 = scmp.eq.s32.totalorder %s36, 1
      %p248 = por %p246, %p247
      %p249 = scmp.ne.s32.totalorder %s240, %s241
      %p250 = scmp.eq.s32.totalorder %s36, 0
      %p251 = por %p249, %p250
      %p252 = scmp.ne.s32.totalorder %s240, %s241
      %p253 = scmp.eq.s32.totalorder %s37, 1
      %p254 = por %p252, %p253
      %p256 = scmp.ne.s32.totalorder %s241, %s255
      %p257 = scmp.eq.s32.totalorder %s37, 0
      %p258 = por %p256, %p257
      %s259 = ssub.s32 %s31, %s38
      %p260 = scmp.eq.s32.totalorder %s259, 0
      %s262 = sadd.s32 %s261, 1
      %s263 = scalar_select %p260, %s261, %s262
      %p266 = pneg %p260
      %p267 = scmp.eq.s32.totalorder %s31, 1
      %p268 = por %p266, %p267
      %p269 = scmp.ne.s32.totalorder %s261, %s264
      %p270 = scmp.eq.s32.totalorder %s31, 0
      %p271 = por %p269, %p270
      %p272 = scmp.ne.s32.totalorder %s261, %s264
      %p273 = scmp.eq.s32.totalorder %s36, 1
      %p274 = por %p272, %p273
      %p275 = scmp.ne.s32.totalorder %s264, %s265
      %p276 = scmp.eq.s32.totalorder %s36, 0
      %p277 = por %p275, %p276
      %p278 = scmp.ne.s32.totalorder %s264, %s265
      %p279 = scmp.eq.s32.totalorder %s37, 1
      %p280 = por %p278, %p279
      %p282 = scmp.ne.s32.totalorder %s265, %s281
      %p283 = scmp.eq.s32.totalorder %s37, 0
      %p284 = por %p282, %p283
      %s285 = ssub.s32 %s31, %s38
      %p286 = scmp.eq.s32.totalorder %s285, 0
      %s288 = sadd.s32 %s287, 1
      %s289 = scalar_select %p286, %s287, %s288
      %p292 = pneg %p286
      %p293 = scmp.eq.s32.totalorder %s31, 1
      %p294 = por %p292, %p293
      %p295 = scmp.ne.s32.totalorder %s287, %s290
      %p296 = scmp.eq.s32.totalorder %s31, 0
      %p297 = por %p295, %p296
      %p298 = scmp.ne.s32.totalorder %s287, %s290
      %p299 = scmp.eq.s32.totalorder %s36, 1
      %p300 = por %p298, %p299
      %p301 = scmp.ne.s32.totalorder %s290, %s291
      %p302 = scmp.eq.s32.totalorder %s36, 0
      %p303 = por %p301, %p302
      %p304 = scmp.ne.s32.totalorder %s290, %s291
      %p305 = scmp.eq.s32.totalorder %s37, 1
      %p306 = por %p304, %p305
      %p308 = scmp.ne.s32.totalorder %s291, %s307
      %p309 = scmp.eq.s32.totalorder %s37, 0
      %p310 = por %p308, %p309
      %p311 = scmp.le.s32.totalorder 1, %s31
      %p312 = scmp.lt.s32.totalorder %s31, 3
      %p313 = pnand %p311, %p312
      %p314 = pneg %p313
      // Predicated region
      $region9: #{tpu_custom_call.1} parent=5 // pred_check
        _
      $region10: #{tpu_custom_call.1} parent=5 // pred_check_branch
        %316 = sbr.rel (%p313) target = $region12
      $region11: #{tpu_custom_call.1} parent=5 // pred_region
        %s317 = ssub.s32 %s31, 1
        // Predicated region
        $region13: #{tpu_custom_call.1} parent=11 // pred_check
          %p318 = pneg %p104
        $region14: #{tpu_custom_call.1} parent=11 // pred_check_branch
          %320 = sbr.rel (%p318) target = $region16
        $region15: #{tpu_custom_call.1} parent=11 // pred_region
          _
        $region16: #{tpu_custom_call.1} parent=11 // pred_fallthru
          _
        // Predicated region
        $region17: #{tpu_custom_call.1} parent=11 // pred_check
          %p321 = pneg %p125
        $region18: #{tpu_custom_call.1} parent=11 // pred_check_branch
          %323 = sbr.rel (%p321) target = $region20
        $region19: #{tpu_custom_call.1} parent=11 // pred_region
          _
        $region20: #{tpu_custom_call.1} parent=11 // pred_fallthru
          _
        // Predicated region
        $region21: #{tpu_custom_call.1} parent=11 // pred_check
          %p324 = pneg %p146
        $region22: #{tpu_custom_call.1} parent=11 // pred_check_branch
          %326 = sbr.rel (%p324) target = $region24
        $region23: #{tpu_custom_call.1} parent=11 // pred_region
          _
        $region24: #{tpu_custom_call.1} parent=11 // pred_fallthru
          _
        // Predicated region
        $region25: #{tpu_custom_call.1} parent=11 // pred_check
          %p327 = pneg %p167
        $region26: #{tpu_custom_call.1} parent=11 // pred_check_branch
          %329 = sbr.rel (%p327) target = $region28
        $region27: #{tpu_custom_call.1} parent=11 // pred_region
          %s331 = ssub.s32 512, 512
          %332 = vsyncadd [#allocation6], %s331
          %s333 = sshll.u32 [#allocation7], 4
          %s334 = int_to_ptr.vmem [resolvable:$true] %s333
          %339 = dma.hbm_to_vmem [thread:$0]  %s5, 512, %s334, [#allocation6], 128, 128, 8
        $region28: #{tpu_custom_call.1} parent=11 // pred_fallthru
          _
        // Predicated region
        $region29: #{tpu_custom_call.1} parent=11 // pred_check
          %p340 = pneg %p188
        $region30: #{tpu_custom_call.1} parent=11 // pred_check_branch
          %342 = sbr.rel (%p340) target = $region32
        $region31: #{tpu_custom_call.1} parent=11 // pred_region
          %s344 = ssub.s32 512, 512
          %345 = vsyncadd [#allocation9], %s344
          %s346 = sshll.u32 [#allocation8], 4
          %s347 = int_to_ptr.vmem [resolvable:$true] %s346
          %352 = dma.hbm_to_vmem [thread:$0]  %s6, 512, %s347, [#allocation9], 128, 128, 8
        $region32: #{tpu_custom_call.1} parent=11 // pred_fallthru
          _
        // Predicated region
        $region33: #{tpu_custom_call.1} parent=11 // pred_check
          %p353 = pneg %p209
        $region34: #{tpu_custom_call.1} parent=11 // pred_check_branch
          %355 = sbr.rel (%p353) target = $region36
        $region35: #{tpu_custom_call.1} parent=11 // pred_region
          _
        $region36: #{tpu_custom_call.1} parent=11 // pred_fallthru
          _
        // Predicated region
        $region37: #{tpu_custom_call.1} parent=11 // pred_check
          %p356 = pneg %p230
        $region38: #{tpu_custom_call.1} parent=11 // pred_check_branch
          %358 = sbr.rel (%p356) target = $region40
        $region39: #{tpu_custom_call.1} parent=11 // pred_region
          _
        $region40: #{tpu_custom_call.1} parent=11 // pred_fallthru
          _
        // Predicated region
        $region41: #{tpu_custom_call.1} parent=11 // pred_check
          %p359 = pneg %p251
        $region42: #{tpu_custom_call.1} parent=11 // pred_check_branch
          %361 = sbr.rel (%p359) target = $region44
        $region43: #{tpu_custom_call.1} parent=11 // pred_region
          _
        $region44: #{tpu_custom_call.1} parent=11 // pred_fallthru
          _
      $region12: #{tpu_custom_call.1} parent=5 // pred_fallthru
        _
      %p362 = scmp.lt.s32.totalorder %s31, 2
      // Predicated region
      $region45: #{tpu_custom_call.1} parent=5 // pred_check
        %p363 = pneg %p362
      $region46: #{tpu_custom_call.1} parent=5 // pred_check_branch
        %365 = sbr.rel (%p363) target = $region48
      $region47: #{tpu_custom_call.1} parent=5 // pred_region
        // Predicated region
        $region49: #{tpu_custom_call.1} parent=47 // pred_check
          %p366 = pneg %p51
        $region50: #{tpu_custom_call.1} parent=47 // pred_check_branch
          %368 = sbr.rel (%p366) target = $region52
        $region51: #{tpu_custom_call.1} parent=47 // pred_region
          %s369 = sand.u32 %s41, 1
          %s370 = scalar_lea.sflag [#allocation3], %s369
          %s371 = sand.u32 %s41, 1
          %s372 = smul.addr %s371, 8
          %s373 = scalar_lea.vmem [#allocation2], %s372
          %s375 = ssub.s32 128, 128
          %376 = vsyncadd %s370, %s375
          %s377 = smul.addr %s31, 128
          %s378 = scalar_lea.hbm %s0, %s377
          %s380 = sshll.u32 %s373, 4
          %s381 = int_to_ptr.vmem [resolvable:$true] %s380
          %383 = dma.hbm_to_vmem [thread:$0]  %s378, 128, %s381, %s370
        $region52: #{tpu_custom_call.1} parent=47 // pred_fallthru
          _
        // Predicated region
        $region53: #{tpu_custom_call.1} parent=47 // pred_check
          %p384 = pneg %p77
        $region54: #{tpu_custom_call.1} parent=47 // pred_check_branch
          %386 = sbr.rel (%p384) target = $region56
        $region55: #{tpu_custom_call.1} parent=47 // pred_region
          %s387 = sand.u32 %s31, 1
          %s388 = scalar_lea.sflag [#allocation6], %s387
          %s389 = sand.u32 %s67, 1
          %s390 = smul.addr %s389, 8
          %s391 = scalar_lea.vmem [#allocation5], %s390
          %s393 = ssub.s32 128, 128
          %394 = vsyncadd %s388, %s393
          %s395 = smul.addr %s31, 128
          %s396 = scalar_lea.hbm %s1, %s395
          %s398 = sshll.u32 %s391, 4
          %s399 = int_to_ptr.vmem [resolvable:$true] %s398
          %401 = dma.hbm_to_vmem [thread:$0]  %s396, 128, %s399, %s388
        $region56: #{tpu_custom_call.1} parent=47 // pred_fallthru
          _
      $region48: #{tpu_custom_call.1} parent=5 // pred_fallthru
        _
      %p402 = scmp.le.s32.totalorder 1, %s31
      %p403 = scmp.lt.s32.totalorder %s31, 3
      %p404 = pnand %p402, %p403
      %p405 = pneg %p404
      // Predicated region
      $region57: #{tpu_custom_call.1} parent=5 // pred_check
        _
      $region58: #{tpu_custom_call.1} parent=5 // pred_check_branch
        %407 = sbr.rel (%p404) target = $region60
      $region59: #{tpu_custom_call.1} parent=5 // pred_region
        %s408 = ssub.s32 %s31, 1
        %s409 = sand.u32 %s44, 1
        %s410 = scalar_lea.sflag [#allocation3], %s409
        %s411 = sand.u32 %s44, 1
        %s412 = smul.addr %s411, 8
        %s413 = scalar_lea.vmem [#allocation2], %s412
        // Predicated region
        $region61: #{tpu_custom_call.1} parent=59 // pred_check
          %p414 = pneg %p57
        $region62: #{tpu_custom_call.1} parent=59 // pred_check_branch
          %416 = sbr.rel (%p414) target = $region64
        $region63: #{tpu_custom_call.1} parent=59 // pred_region
          %417 = dma.done %s410, 128
        $region64: #{tpu_custom_call.1} parent=59 // pred_fallthru
          _
        %s418 = sand.u32 %s36, 1
        %s419 = scalar_lea.sflag [#allocation6], %s418
        %s420 = sand.u32 %s70, 1
        %s421 = smul.addr %s420, 8
        %s422 = scalar_lea.vmem [#allocation5], %s421
        // Predicated region
        $region65: #{tpu_custom_call.1} parent=59 // pred_check
          %p423 = pneg %p83
        $region66: #{tpu_custom_call.1} parent=59 // pred_check_branch
          %425 = sbr.rel (%p423) target = $region68
        $region67: #{tpu_custom_call.1} parent=59 // pred_region
          %426 = dma.done %s419, 128
        $region68: #{tpu_custom_call.1} parent=59 // pred_fallthru
          _
        // Predicated region
        $region69: #{tpu_custom_call.1} parent=59 // pred_check
          %p427 = pneg %p167
        $region70: #{tpu_custom_call.1} parent=59 // pred_check_branch
          %429 = sbr.rel (%p427) target = $region72
        $region71: #{tpu_custom_call.1} parent=59 // pred_region
          %430 = dma.done [#allocation6], 512
        $region72: #{tpu_custom_call.1} parent=59 // pred_fallthru
          _
        // Predicated region
        $region73: #{tpu_custom_call.1} parent=59 // pred_check
          %p431 = pneg %p188
        $region74: #{tpu_custom_call.1} parent=59 // pred_check_branch
          %433 = sbr.rel (%p431) target = $region76
        $region75: #{tpu_custom_call.1} parent=59 // pred_region
          %434 = dma.done [#allocation9], 512
        $region76: #{tpu_custom_call.1} parent=59 // pred_fallthru
          _
        %s435 = sand.u32 %s44, 1
        %s436 = scalar_lea.sflag [#allocation3], %s435
        %s437 = sand.u32 %s44, 1
        %s438 = smul.addr %s437, 8
        %s439 = scalar_lea.vmem [#allocation2], %s438
        %p440 = pneg %p57
        %p441 = pneg %p54
        %s442 = sand.u32 %s36, 1
        %s443 = scalar_lea.sflag [#allocation6], %s442
        %s444 = sand.u32 %s70, 1
        %s445 = smul.addr %s444, 8
        %s446 = scalar_lea.vmem [#allocation5], %s445
        %p447 = pneg %p83
        %p448 = pneg %p80
        %p449 = pneg %p104
        %p450 = pneg %p101
        %p451 = pneg %p125
        %p452 = pneg %p122
        %p453 = pneg %p146
        %p454 = pneg %p143
        %p455 = pneg %p167
        %p456 = pneg %p164
        %p457 = pneg %p188
        %p458 = pneg %p185
        %p459 = pneg %p209
        %p460 = pneg %p206
        %p461 = pneg %p230
        %p462 = pneg %p227
        %p463 = pneg %p251
        %p464 = pneg %p248
        %p465 = pneg %p277
        %p466 = pneg %p274
        %s467 = sand.u32 %s264, 1
        %s468 = scalar_lea.sflag [#allocation4], %s467
        %s469 = sand.u32 %s264, 1
        %s470 = smul.addr %s469, 8
        %s471 = scalar_lea.vmem [#allocation10], %s470
        %p472 = pneg %p303
        %p473 = pneg %p300
        %s474 = sand.u32 %s290, 1
        %s475 = scalar_lea.sflag [#allocation12], %s474
        %s476 = sand.u32 %s290, 1
        %s477 = smul.addr %s476, 8
        %s478 = scalar_lea.vmem [#allocation11], %s477
        %v479 = vld [vmem:[%s2] sm:$0xff]
        %v480 = vld [vmem:[%s2 + $0x8] sm:$0xff]
        %v481 = vld [vmem:[%s2 + $0x10] sm:$0xff]
        %v482 = vld [vmem:[%s2 + $0x18] sm:$0xff]
        %v483 = vld [vmem:[%s3] sm:$0xff]
        %v484 = vld [vmem:[%s3 + $0x8] sm:$0xff]
        %v485 = vld [vmem:[%s3 + $0x10] sm:$0xff]
        %v486 = vld [vmem:[%s3 + $0x18] sm:$0xff]
        %v487 = vld [vmem:[%s4] sm:$0xff]
        %v488 = vld [vmem:[%s4 + $0x8] sm:$0xff]
        %v489 = vld [vmem:[%s4 + $0x10] sm:$0xff]
        %v490 = vld [vmem:[%s4 + $0x18] sm:$0xff]
        %v491 = vld [vmem:[#allocation7] sm:$0xff]
        %v492 = vld [vmem:[#allocation7 + $0x8] sm:$0xff]
        %v493 = vld [vmem:[#allocation7 + $0x10] sm:$0xff]
        %v494 = vld [vmem:[#allocation7 + $0x18] sm:$0xff]
        %v495 = vld [vmem:[#allocation8] sm:$0xff]
        %v496 = vld [vmem:[#allocation8 + $0x8] sm:$0xff]
        %v497 = vld [vmem:[#allocation8 + $0x10] sm:$0xff]
        %v498 = vld [vmem:[#allocation8 + $0x18] sm:$0xff]
        %v499 = vld [vmem:[%s8] sm:$0xff]
        %v500 = vld [vmem:[%s8 + $0x8] sm:$0xff]
        %v501 = vld [vmem:[%s8 + $0x10] sm:$0xff]
        %v502 = vld [vmem:[%s8 + $0x18] sm:$0xff]
        %v503 = vld [vmem:[%s8 + $0x20] sm:$0xff]
        %v504 = vld [vmem:[%s8 + $0x28] sm:$0xff]
        %v505 = vld [vmem:[%s8 + $0x30] sm:$0xff]
        %v506 = vld [vmem:[%s8 + $0x38] sm:$0xff]
        %v507 = vld [vmem:[%s7] sm:$0x1]
        %v508 = vld [vmem:[%s9] sm:$0xff]
        %v509 = vld [vmem:[%s9 + $0x8] sm:$0x1]
        %v510 = vld [vmem:[%s422] sm:$0xff]
        %v511 = vld [vmem:[%s413] sm:$0xff]
        %v512 = vlaneseq
        %v513 = vshrl.u32 %v512, 7
        %v514 = vsub.s32 0, %v513
        %v515 = vrot.slane %v508, %v514
        %vm516 = vcmask 261120
        %v518 = vsel %vm516, %v511, 0
        %520 = vmatprep.subr.mxu0 0.0
        %521 = vmatpush1.msra.mxu0 %v479
        %522 = vmatprep.subr.mxu0 0.0
        %523 = vmatpush1.msra.mxu0 %v480
        %524 = vmatprep.subr.mxu0 0.0
        %525 = vmatpush1.msra.mxu0 %v481
        %526 = vmatprep.subr.mxu0 0.0
        %527 = vmatpush1.msra.mxu0 %v482
        %528 = vmatprep.subr.mxu0 0.0
        %529 = vmatpush1.msra.mxu0 0.0
        %530 = vmatprep.subr.mxu0 0.0
        %531 = vmatpush1.msra.mxu0 0.0
        %532 = vmatprep.subr.mxu0 0.0
        %533 = vmatpush1.msra.mxu0 0.0
        %534 = vmatprep.subr.mxu0 0.0
        %535 = vmatpush1.msra.mxu0 0.0
        %536 = vmatprep.subr.mxu0 0.0
        %537 = vmatpush1.msra.mxu0 0.0
        %538 = vmatprep.subr.mxu0 0.0
        %539 = vmatpush1.msra.mxu0 0.0
        %540 = vmatprep.subr.mxu0 0.0
        %541 = vmatpush1.msra.mxu0 0.0
        %542 = vmatprep.subr.mxu0 0.0
        %543 = vmatpush1.msra.mxu0 0.0
        %544 = vmatprep.subr.mxu0 0.0
        %545 = vmatpush1.msra.mxu0 0.0
        %546 = vmatprep.subr.mxu0 0.0
        %547 = vmatpush1.msra.mxu0 0.0
        %548 = vmatprep.subr.mxu0 0.0
        %549 = vmatpush1.msra.mxu0 0.0
        %550 = vmatprep.subr.mxu0 0.0
        %551 = vmatpush1.msra.mxu0 0.0
        %552 = vmatprep.subr.mxu0 0.0
        %553 = vmatpush1.msra.mxu0 0.0
        %554 = vmatprep.subr.mxu0 0.0
        %555 = vmatpush1.msra.mxu0 0.0
        %556 = vmatprep.subr.mxu0 0.0
        %557 = vmatpush1.msra.mxu0 0.0
        %558 = vmatprep.subr.mxu0 0.0
        %559 = vmatpush1.msra.mxu0 0.0
        %560 = vmatprep.subr.mxu0 0.0
        %561 = vmatpush1.msra.mxu0 0.0
        %562 = vmatprep.subr.mxu0 0.0
        %563 = vmatpush1.msra.mxu0 0.0
        %564 = vmatprep.subr.mxu0 0.0
        %565 = vmatpush1.msra.mxu0 0.0
        %566 = vmatprep.subr.mxu0 0.0
        %567 = vmatpush1.msra.mxu0 0.0
        %568 = vmatprep.subr.mxu0 0.0
        %569 = vmatpush1.msra.mxu0 0.0
        %570 = vmatprep.subr.mxu0 0.0
        %571 = vmatpush1.msra.mxu0 0.0
        %572 = vmatprep.subr.mxu0 0.0
        %573 = vmatpush1.msra.mxu0 0.0
        %574 = vmatprep.subr.mxu0 0.0
        %575 = vmatpush1.msra.mxu0 0.0
        %576 = vmatprep.subr.mxu0 0.0
        %577 = vmatpush1.msra.mxu0 0.0
        %578 = vmatprep.subr.mxu0 0.0
        %579 = vmatpush1.msra.mxu0 0.0
        %580 = vmatprep.subr.mxu0 0.0
        %581 = vmatpush1.msra.mxu0 0.0
        %582 = vmatprep.subr.mxu0 0.0
        %583 = vmatpush1.msra.mxu0 0.0
        %584 = vmatprep.mubr.f32.mxu0 0.0
        %585 = vmatmul.mubr.f32.gmra.mrb[0].mxu0 %v518
        %v586 = vpop.f32.mrb[0].mxu0
        %v587 = vadd.f32 %v515, %v586
        %v588 = vpop.f32.mrb[0].mxu0
        %589 = vdwg.mxu0
        %v590 = vlaneseq
        %v591 = vshrl.u32 %v590, 7
        %v592 = vsub.s32 1, %v591
        %v593 = vrot.slane %v508, %v592
        %594 = vmatprep.subr.mxu0 0.0
        %595 = vmatpush1.msra.mxu0 %v483
        %596 = vmatprep.subr.mxu0 0.0
        %597 = vmatpush1.msra.mxu0 %v484
        %598 = vmatprep.subr.mxu0 0.0
        %599 = vmatpush1.msra.mxu0 %v485
        %600 = vmatprep.subr.mxu0 0.0
        %601 = vmatpush1.msra.mxu0 %v486
        %602 = vmatprep.subr.mxu0 0.0
        %603 = vmatpush1.msra.mxu0 0.0
        %604 = vmatprep.subr.mxu0 0.0
        %605 = vmatpush1.msra.mxu0 0.0
        %606 = vmatprep.subr.mxu0 0.0
        %607 = vmatpush1.msra.mxu0 0.0
        %608 = vmatprep.subr.mxu0 0.0
        %609 = vmatpush1.msra.mxu0 0.0
        %610 = vmatprep.subr.mxu0 0.0
        %611 = vmatpush1.msra.mxu0 0.0
        %612 = vmatprep.subr.mxu0 0.0
        %613 = vmatpush1.msra.mxu0 0.0
        %614 = vmatprep.subr.mxu0 0.0
        %615 = vmatpush1.msra.mxu0 0.0
        %616 = vmatprep.subr.mxu0 0.0
        %617 = vmatpush1.msra.mxu0 0.0
        %618 = vmatprep.subr.mxu0 0.0
        %619 = vmatpush1.msra.mxu0 0.0
        %620 = vmatprep.subr.mxu0 0.0
        %621 = vmatpush1.msra.mxu0 0.0
        %622 = vmatprep.subr.mxu0 0.0
        %623 = vmatpush1.msra.mxu0 0.0
        %624 = vmatprep.subr.mxu0 0.0
        %625 = vmatpush1.msra.mxu0 0.0
        %626 = vmatprep.subr.mxu0 0.0
        %627 = vmatpush1.msra.mxu0 0.0
        %628 = vmatprep.subr.mxu0 0.0
        %629 = vmatpush1.msra.mxu0 0.0
        %630 = vmatprep.subr.mxu0 0.0
        %631 = vmatpush1.msra.mxu0 0.0
        %632 = vmatprep.subr.mxu0 0.0
        %633 = vmatpush1.msra.mxu0 0.0
        %634 = vmatprep.subr.mxu0 0.0
        %635 = vmatpush1.msra.mxu0 0.0
        %636 = vmatprep.subr.mxu0 0.0
        %637 = vmatpush1.msra.mxu0 0.0
        %638 = vmatprep.subr.mxu0 0.0
        %639 = vmatpush1.msra.mxu0 0.0
        %640 = vmatprep.subr.mxu0 0.0
        %641 = vmatpush1.msra.mxu0 0.0
        %642 = vmatprep.subr.mxu0 0.0
        %643 = vmatpush1.msra.mxu0 0.0
        %644 = vmatprep.subr.mxu0 0.0
        %645 = vmatpush1.msra.mxu0 0.0
        %646 = vmatprep.subr.mxu0 0.0
        %647 = vmatpush1.msra.mxu0 0.0
        %648 = vmatprep.subr.mxu0 0.0
        %649 = vmatpush1.msra.mxu0 0.0
        %650 = vmatprep.subr.mxu0 0.0
        %651 = vmatpush1.msra.mxu0 0.0
        %652 = vmatprep.subr.mxu0 0.0
        %653 = vmatpush1.msra.mxu0 0.0
        %654 = vmatprep.subr.mxu0 0.0
        %655 = vmatpush1.msra.mxu0 0.0
        %656 = vmatprep.subr.mxu0 0.0
        %657 = vmatpush1.msra.mxu0 0.0
        %658 = vmatprep.mubr.f32.mxu0 0.0
        %659 = vmatmul.mubr.f32.gmra.mrb[0].mxu0 %v518
        %v660 = vpop.f32.mrb[0].mxu0
        %v661 = vadd.f32 %v593, %v660
        %v662 = vpop.f32.mrb[0].mxu0
        %663 = vdwg.mxu0
        %v664 = vlaneseq
        %v665 = vshrl.u32 %v664, 7
        %v666 = vsub.s32 2, %v665
        %v667 = vrot.slane %v508, %v666
        %v669 = vsel %vm516, %v510, 0
        %671 = vmatprep.subr.mxu0 0.0
        %672 = vmatpush1.msra.mxu0 %v487
        %673 = vmatprep.subr.mxu0 0.0
        %674 = vmatpush1.msra.mxu0 %v488
        %675 = vmatprep.subr.mxu0 0.0
        %676 = vmatpush1.msra.mxu0 %v489
        %677 = vmatprep.subr.mxu0 0.0
        %678 = vmatpush1.msra.mxu0 %v490
        %679 = vmatprep.subr.mxu0 0.0
        %680 = vmatpush1.msra.mxu0 0.0
        %681 = vmatprep.subr.mxu0 0.0
        %682 = vmatpush1.msra.mxu0 0.0
        %683 = vmatprep.subr.mxu0 0.0
        %684 = vmatpush1.msra.mxu0 0.0
        %685 = vmatprep.subr.mxu0 0.0
        %686 = vmatpush1.msra.mxu0 0.0
        %687 = vmatprep.subr.mxu0 0.0
        %688 = vmatpush1.msra.mxu0 0.0
        %689 = vmatprep.subr.mxu0 0.0
        %690 = vmatpush1.msra.mxu0 0.0
        %691 = vmatprep.subr.mxu0 0.0
        %692 = vmatpush1.msra.mxu0 0.0
        %693 = vmatprep.subr.mxu0 0.0
        %694 = vmatpush1.msra.mxu0 0.0
        %695 = vmatprep.subr.mxu0 0.0
        %696 = vmatpush1.msra.mxu0 0.0
        %697 = vmatprep.subr.mxu0 0.0
        %698 = vmatpush1.msra.mxu0 0.0
        %699 = vmatprep.subr.mxu0 0.0
        %700 = vmatpush1.msra.mxu0 0.0
        %701 = vmatprep.subr.mxu0 0.0
        %702 = vmatpush1.msra.mxu0 0.0
        %703 = vmatprep.subr.mxu0 0.0
        %704 = vmatpush1.msra.mxu0 0.0
        %705 = vmatprep.subr.mxu0 0.0
        %706 = vmatpush1.msra.mxu0 0.0
        %707 = vmatprep.subr.mxu0 0.0
        %708 = vmatpush1.msra.mxu0 0.0
        %709 = vmatprep.subr.mxu0 0.0
        %710 = vmatpush1.msra.mxu0 0.0
        %711 = vmatprep.subr.mxu0 0.0
        %712 = vmatpush1.msra.mxu0 0.0
        %713 = vmatprep.subr.mxu0 0.0
        %714 = vmatpush1.msra.mxu0 0.0
        %715 = vmatprep.subr.mxu0 0.0
        %716 = vmatpush1.msra.mxu0 0.0
        %717 = vmatprep.subr.mxu0 0.0
        %718 = vmatpush1.msra.mxu0 0.0
        %719 = vmatprep.subr.mxu0 0.0
        %720 = vmatpush1.msra.mxu0 0.0
        %721 = vmatprep.subr.mxu0 0.0
        %722 = vmatpush1.msra.mxu0 0.0
        %723 = vmatprep.subr.mxu0 0.0
        %724 = vmatpush1.msra.mxu0 0.0
        %725 = vmatprep.subr.mxu0 0.0
        %726 = vmatpush1.msra.mxu0 0.0
        %727 = vmatprep.subr.mxu0 0.0
        %728 = vmatpush1.msra.mxu0 0.0
        %729 = vmatprep.subr.mxu0 0.0
        %730 = vmatpush1.msra.mxu0 0.0
        %731 = vmatprep.subr.mxu0 0.0
        %732 = vmatpush1.msra.mxu0 0.0
        %733 = vmatprep.subr.mxu0 0.0
        %734 = vmatpush1.msra.mxu0 0.0
        %735 = vmatprep.mubr.f32.mxu0 0.0
        %736 = vmatmul.mubr.f32.gmra.mrb[0].mxu0 %v669
        %v737 = vpop.f32.mrb[0].mxu0
        %v738 = vadd.f32 %v667, %v737
        %v739 = vpop.f32.mrb[0].mxu0
        %740 = vdwg.mxu0
        %742 = vrot.lane.b32.xlu0 %v587, 120
        %v743 = vpop.permute.xlu0 %742
        %745 = vrot.lane.b32.xlu0 %v587, 112
        %v746 = vpop.permute.xlu0 %745
        %748 = vrot.lane.b32.xlu0 %v587, 104
        %v749 = vpop.permute.xlu0 %748
        %v751 = vcombine.low %v587, %v746
        %v752 = vcombine.high %v587, %v746
        %v754 = vunpack.c.l.s4 1983009808
        %v755 = vunpack.c.0.s8 %v754
        %v756 = vlaneseq
        %v757 = vshrl.u32 %v756, 7
        %v758 = vsub.s32 %v755, %v757
        %v759 = vrot.slane %v751, %v758
        %v761 = vunpack.c.l.s4 1983009808
        %v762 = vunpack.c.0.s8 %v761
        %v763 = vlaneseq
        %v764 = vshrl.u32 %v763, 7
        %v765 = vsub.s32 %v762, %v764
        %v766 = vrot.slane %v752, %v765
        %v767 = vcombine.low %v743, %v749
        %v768 = vcombine.high %v743, %v749
        %v770 = vunpack.c.l.s4 1983009808
        %v771 = vunpack.c.0.s8 %v770
        %v772 = vlaneseq
        %v773 = vshrl.u32 %v772, 7
        %v774 = vsub.s32 %v771, %v773
        %v775 = vrot.slane %v767, %v774
        %v777 = vunpack.c.l.s4 1983009808
        %v778 = vunpack.c.0.s8 %v777
        %v779 = vlaneseq
        %v780 = vshrl.u32 %v779, 7
        %v781 = vsub.s32 %v778, %v780
        %v782 = vrot.slane %v768, %v781
        %v783 = vcombine.low %v759, %v775
        %v784 = vcombine.high %v759, %v775
        %v786 = vunpack.c.l.s4 1934713408
        %v787 = vunpack.c.0.s8 %v786
        %v788 = vlaneseq
        %v789 = vshrl.u32 %v788, 7
        %v790 = vsub.s32 %v787, %v789
        %v791 = vrot.slane %v783, %v790
        %v793 = vunpack.c.l.s4 1934713408
        %v794 = vunpack.c.0.s8 %v793
        %v795 = vlaneseq
        %v796 = vshrl.u32 %v795, 7
        %v797 = vsub.s32 %v794, %v796
        %v798 = vrot.slane %v784, %v797
        %v799 = vcombine.low %v766, %v782
        %v800 = vcombine.high %v766, %v782
        %v802 = vunpack.c.l.s4 1934713408
        %v803 = vunpack.c.0.s8 %v802
        %v804 = vlaneseq
        %v805 = vshrl.u32 %v804, 7
        %v806 = vsub.s32 %v803, %v805
        %v807 = vrot.slane %v799, %v806
        %v809 = vunpack.c.l.s4 1934713408
        %v810 = vunpack.c.0.s8 %v809
        %v811 = vlaneseq
        %v812 = vshrl.u32 %v811, 7
        %v813 = vsub.s32 %v810, %v812
        %v814 = vrot.slane %v800, %v813
        %v815 = vcombine.high %v791, 0.0
        %v816 = vcombine.high %v798, 0.0
        %v817 = vcombine.high %v807, 0.0
        %v818 = vcombine.high %v814, 0.0
        %v819 = vcombine.low %v791, %v798
        %v821 = vunpack.c.l.s4 1983009808
        %v822 = vunpack.c.0.s8 %v821
        %v823 = vlaneseq
        %v824 = vshrl.u32 %v823, 7
        %v825 = vsub.s32 %v822, %v824
        %v826 = vrot.slane %v819, %v825
        %v827 = vcombine.low %v815, %v816
        %v829 = vunpack.c.l.s4 1983009808
        %v830 = vunpack.c.0.s8 %v829
        %v831 = vlaneseq
        %v832 = vshrl.u32 %v831, 7
        %v833 = vsub.s32 %v830, %v832
        %v834 = vrot.slane %v827, %v833
        %v835 = vcombine.low %v807, %v814
        %v837 = vunpack.c.l.s4 1983009808
        %v838 = vunpack.c.0.s8 %v837
        %v839 = vlaneseq
        %v840 = vshrl.u32 %v839, 7
        %v841 = vsub.s32 %v838, %v840
        %v842 = vrot.slane %v835, %v841
        %v843 = vcombine.low %v817, %v818
        %v845 = vunpack.c.l.s4 1983009808
        %v846 = vunpack.c.0.s8 %v845
        %v847 = vlaneseq
        %v848 = vshrl.u32 %v847, 7
        %v849 = vsub.s32 %v846, %v848
        %v850 = vrot.slane %v843, %v849
        %v851 = vcombine.low %v826, %v834
        %v852 = vcombine.high %v826, %v834
        %v854 = vunpack.c.l.s4 1934713408
        %v855 = vunpack.c.0.s8 %v854
        %v856 = vlaneseq
        %v857 = vshrl.u32 %v856, 7
        %v858 = vsub.s32 %v855, %v857
        %v859 = vrot.slane %v851, %v858
        %v861 = vunpack.c.l.s4 1934713408
        %v862 = vunpack.c.0.s8 %v861
        %v863 = vlaneseq
        %v864 = vshrl.u32 %v863, 7
        %v865 = vsub.s32 %v862, %v864
        %v866 = vrot.slane %v852, %v865
        %v867 = vcombine.low %v842, %v850
        %v868 = vcombine.high %v842, %v850
        %v870 = vunpack.c.l.s4 1934713408
        %v871 = vunpack.c.0.s8 %v870
        %v872 = vlaneseq
        %v873 = vshrl.u32 %v872, 7
        %v874 = vsub.s32 %v871, %v873
        %v875 = vrot.slane %v867, %v874
        %v877 = vunpack.c.l.s4 1934713408
        %v878 = vunpack.c.0.s8 %v877
        %v879 = vlaneseq
        %v880 = vshrl.u32 %v879, 7
        %v881 = vsub.s32 %v878, %v880
        %v882 = vrot.slane %v868, %v881
        %v883 = vcombine.low %v859, %v875
        %v884 = vcombine.high %v859, %v875
        %v885 = vcombine.low %v866, %v882
        %v886 = vcombine.high %v866, %v882
        %888 = vrot.lane.b32.xlu0 %v661, 120
        %v889 = vpop.permute.xlu0 %888
        %891 = vrot.lane.b32.xlu0 %v661, 112
        %v892 = vpop.permute.xlu0 %891
        %894 = vrot.lane.b32.xlu0 %v661, 104
        %v895 = vpop.permute.xlu0 %894
        %v897 = vcombine.low %v661, %v892
        %v898 = vcombine.high %v661, %v892
        %v900 = vunpack.c.l.s4 1983009808
        %v901 = vunpack.c.0.s8 %v900
        %v902 = vlaneseq
        %v903 = vshrl.u32 %v902, 7
        %v904 = vsub.s32 %v901, %v903
        %v905 = vrot.slane %v897, %v904
        %v907 = vunpack.c.l.s4 1983009808
        %v908 = vunpack.c.0.s8 %v907
        %v909 = vlaneseq
        %v910 = vshrl.u32 %v909, 7
        %v911 = vsub.s32 %v908, %v910
        %v912 = vrot.slane %v898, %v911
        %v913 = vcombine.low %v889, %v895
        %v914 = vcombine.high %v889, %v895
        %v916 = vunpack.c.l.s4 1983009808
        %v917 = vunpack.c.0.s8 %v916
        %v918 = vlaneseq
        %v919 = vshrl.u32 %v918, 7
        %v920 = vsub.s32 %v917, %v919
        %v921 = vrot.slane %v913, %v920
        %v923 = vunpack.c.l.s4 1983009808
        %v924 = vunpack.c.0.s8 %v923
        %v925 = vlaneseq
        %v926 = vshrl.u32 %v925, 7
        %v927 = vsub.s32 %v924, %v926
        %v928 = vrot.slane %v914, %v927
        %v929 = vcombine.low %v905, %v921
        %v930 = vcombine.high %v905, %v921
        %v932 = vunpack.c.l.s4 1934713408
        %v933 = vunpack.c.0.s8 %v932
        %v934 = vlaneseq
        %v935 = vshrl.u32 %v934, 7
        %v936 = vsub.s32 %v933, %v935
        %v937 = vrot.slane %v929, %v936
        %v939 = vunpack.c.l.s4 1934713408
        %v940 = vunpack.c.0.s8 %v939
        %v941 = vlaneseq
        %v942 = vshrl.u32 %v941, 7
        %v943 = vsub.s32 %v940, %v942
        %v944 = vrot.slane %v930, %v943
        %v945 = vcombine.low %v912, %v928
        %v946 = vcombine.high %v912, %v928
        %v948 = vunpack.c.l.s4 1934713408
        %v949 = vunpack.c.0.s8 %v948
        %v950 = vlaneseq
        %v951 = vshrl.u32 %v950, 7
        %v952 = vsub.s32 %v949, %v951
        %v953 = vrot.slane %v945, %v952
        %v955 = vunpack.c.l.s4 1934713408
        %v956 = vunpack.c.0.s8 %v955
        %v957 = vlaneseq
        %v958 = vshrl.u32 %v957, 7
        %v959 = vsub.s32 %v956, %v958
        %v960 = vrot.slane %v946, %v959
        %v961 = vcombine.high %v937, 0.0
        %v962 = vcombine.high %v944, 0.0
        %v963 = vcombine.high %v953, 0.0
        %v964 = vcombine.high %v960, 0.0
        %v965 = vcombine.low %v937, %v944
        %v967 = vunpack.c.l.s4 1983009808
        %v968 = vunpack.c.0.s8 %v967
        %v969 = vlaneseq
        %v970 = vshrl.u32 %v969, 7
        %v971 = vsub.s32 %v968, %v970
        %v972 = vrot.slane %v965, %v971
        %v973 = vcombine.low %v961, %v962
        %v975 = vunpack.c.l.s4 1983009808
        %v976 = vunpack.c.0.s8 %v975
        %v977 = vlaneseq
        %v978 = vshrl.u32 %v977, 7
        %v979 = vsub.s32 %v976, %v978
        %v980 = vrot.slane %v973, %v979
        %v981 = vcombine.low %v953, %v960
        %v983 = vunpack.c.l.s4 1983009808
        %v984 = vunpack.c.0.s8 %v983
        %v985 = vlaneseq
        %v986 = vshrl.u32 %v985, 7
        %v987 = vsub.s32 %v984, %v986
        %v988 = vrot.slane %v981, %v987
        %v989 = vcombine.low %v963, %v964
        %v991 = vunpack.c.l.s4 1983009808
        %v992 = vunpack.c.0.s8 %v991
        %v993 = vlaneseq
        %v994 = vshrl.u32 %v993, 7
        %v995 = vsub.s32 %v992, %v994
        %v996 = vrot.slane %v989, %v995
        %v997 = vcombine.low %v972, %v980
        %v998 = vcombine.high %v972, %v980
        %v1000 = vunpack.c.l.s4 1934713408
        %v1001 = vunpack.c.0.s8 %v1000
        %v1002 = vlaneseq
        %v1003 = vshrl.u32 %v1002, 7
        %v1004 = vsub.s32 %v1001, %v1003
        %v1005 = vrot.slane %v997, %v1004
        %v1007 = vunpack.c.l.s4 1934713408
        %v1008 = vunpack.c.0.s8 %v1007
        %v1009 = vlaneseq
        %v1010 = vshrl.u32 %v1009, 7
        %v1011 = vsub.s32 %v1008, %v1010
        %v1012 = vrot.slane %v998, %v1011
        %v1013 = vcombine.low %v988, %v996
        %v1014 = vcombine.high %v988, %v996
        %v1016 = vunpack.c.l.s4 1934713408
        %v1017 = vunpack.c.0.s8 %v1016
        %v1018 = vlaneseq
        %v1019 = vshrl.u32 %v1018, 7
        %v1020 = vsub.s32 %v1017, %v1019
        %v1021 = vrot.slane %v1013, %v1020
        %v1023 = vunpack.c.l.s4 1934713408
        %v1024 = vunpack.c.0.s8 %v1023
        %v1025 = vlaneseq
        %v1026 = vshrl.u32 %v1025, 7
        %v1027 = vsub.s32 %v1024, %v1026
        %v1028 = vrot.slane %v1014, %v1027
        %v1029 = vcombine.low %v1005, %v1021
        %v1030 = vcombine.high %v1005, %v1021
        %v1031 = vcombine.low %v1012, %v1028
        %v1032 = vcombine.high %v1012, %v1028
        %1034 = vrot.lane.b32.xlu0 %v738, 120
        %v1035 = vpop.permute.xlu0 %1034
        %1037 = vrot.lane.b32.xlu0 %v738, 112
        %v1038 = vpop.permute.xlu0 %1037
        %1040 = vrot.lane.b32.xlu0 %v738, 104
        %v1041 = vpop.permute.xlu0 %1040
        %v1043 = vcombine.low %v738, %v1038
        %v1044 = vcombine.high %v738, %v1038
        %v1046 = vunpack.c.l.s4 1983009808
        %v1047 = vunpack.c.0.s8 %v1046
        %v1048 = vlaneseq
        %v1049 = vshrl.u32 %v1048, 7
        %v1050 = vsub.s32 %v1047, %v1049
        %v1051 = vrot.slane %v1043, %v1050
        %v1053 = vunpack.c.l.s4 1983009808
        %v1054 = vunpack.c.0.s8 %v1053
        %v1055 = vlaneseq
        %v1056 = vshrl.u32 %v1055, 7
        %v1057 = vsub.s32 %v1054, %v1056
        %v1058 = vrot.slane %v1044, %v1057
        %v1059 = vcombine.low %v1035, %v1041
        %v1060 = vcombine.high %v1035, %v1041
        %v1062 = vunpack.c.l.s4 1983009808
        %v1063 = vunpack.c.0.s8 %v1062
        %v1064 = vlaneseq
        %v1065 = vshrl.u32 %v1064, 7
        %v1066 = vsub.s32 %v1063, %v1065
        %v1067 = vrot.slane %v1059, %v1066
        %v1069 = vunpack.c.l.s4 1983009808
        %v1070 = vunpack.c.0.s8 %v1069
        %v1071 = vlaneseq
        %v1072 = vshrl.u32 %v1071, 7
        %v1073 = vsub.s32 %v1070, %v1072
        %v1074 = vrot.slane %v1060, %v1073
        %v1075 = vcombine.low %v1051, %v1067
        %v1076 = vcombine.high %v1051, %v1067
        %v1078 = vunpack.c.l.s4 1934713408
        %v1079 = vunpack.c.0.s8 %v1078
        %v1080 = vlaneseq
        %v1081 = vshrl.u32 %v1080, 7
        %v1082 = vsub.s32 %v1079, %v1081
        %v1083 = vrot.slane %v1075, %v1082
        %v1085 = vunpack.c.l.s4 1934713408
        %v1086 = vunpack.c.0.s8 %v1085
        %v1087 = vlaneseq
        %v1088 = vshrl.u32 %v1087, 7
        %v1089 = vsub.s32 %v1086, %v1088
        %v1090 = vrot.slane %v1076, %v1089
        %v1091 = vcombine.low %v1058, %v1074
        %v1092 = vcombine.high %v1058, %v1074
        %v1094 = vunpack.c.l.s4 1934713408
        %v1095 = vunpack.c.0.s8 %v1094
        %v1096 = vlaneseq
        %v1097 = vshrl.u32 %v1096, 7
        %v1098 = vsub.s32 %v1095, %v1097
        %v1099 = vrot.slane %v1091, %v1098
        %v1101 = vunpack.c.l.s4 1934713408
        %v1102 = vunpack.c.0.s8 %v1101
        %v1103 = vlaneseq
        %v1104 = vshrl.u32 %v1103, 7
        %v1105 = vsub.s32 %v1102, %v1104
        %v1106 = vrot.slane %v1092, %v1105
        %v1107 = vcombine.high %v1083, 0.0
        %v1108 = vcombine.high %v1090, 0.0
        %v1109 = vcombine.high %v1099, 0.0
        %v1110 = vcombine.high %v1106, 0.0
        %v1111 = vcombine.low %v1083, %v1090
        %v1113 = vunpack.c.l.s4 1983009808
        %v1114 = vunpack.c.0.s8 %v1113
        %v1115 = vlaneseq
        %v1116 = vshrl.u32 %v1115, 7
        %v1117 = vsub.s32 %v1114, %v1116
        %v1118 = vrot.slane %v1111, %v1117
        %v1119 = vcombine.low %v1107, %v1108
        %v1121 = vunpack.c.l.s4 1983009808
        %v1122 = vunpack.c.0.s8 %v1121
        %v1123 = vlaneseq
        %v1124 = vshrl.u32 %v1123, 7
        %v1125 = vsub.s32 %v1122, %v1124
        %v1126 = vrot.slane %v1119, %v1125
        %v1127 = vcombine.low %v1099, %v1106
        %v1129 = vunpack.c.l.s4 1983009808
        %v1130 = vunpack.c.0.s8 %v1129
        %v1131 = vlaneseq
        %v1132 = vshrl.u32 %v1131, 7
        %v1133 = vsub.s32 %v1130, %v1132
        %v1134 = vrot.slane %v1127, %v1133
        %v1135 = vcombine.low %v1109, %v1110
        %v1137 = vunpack.c.l.s4 1983009808
        %v1138 = vunpack.c.0.s8 %v1137
        %v1139 = vlaneseq
        %v1140 = vshrl.u32 %v1139, 7
        %v1141 = vsub.s32 %v1138, %v1140
        %v1142 = vrot.slane %v1135, %v1141
        %v1143 = vcombine.low %v1118, %v1126
        %v1144 = vcombine.high %v1118, %v1126
        %v1146 = vunpack.c.l.s4 1934713408
        %v1147 = vunpack.c.0.s8 %v1146
        %v1148 = vlaneseq
        %v1149 = vshrl.u32 %v1148, 7
        %v1150 = vsub.s32 %v1147, %v1149
        %v1151 = vrot.slane %v1143, %v1150
        %v1153 = vunpack.c.l.s4 1934713408
        %v1154 = vunpack.c.0.s8 %v1153
        %v1155 = vlaneseq
        %v1156 = vshrl.u32 %v1155, 7
        %v1157 = vsub.s32 %v1154, %v1156
        %v1158 = vrot.slane %v1144, %v1157
        %v1159 = vcombine.low %v1134, %v1142
        %v1160 = vcombine.high %v1134, %v1142
        %v1162 = vunpack.c.l.s4 1934713408
        %v1163 = vunpack.c.0.s8 %v1162
        %v1164 = vlaneseq
        %v1165 = vshrl.u32 %v1164, 7
        %v1166 = vsub.s32 %v1163, %v1165
        %v1167 = vrot.slane %v1159, %v1166
        %v1169 = vunpack.c.l.s4 1934713408
        %v1170 = vunpack.c.0.s8 %v1169
        %v1171 = vlaneseq
        %v1172 = vshrl.u32 %v1171, 7
        %v1173 = vsub.s32 %v1170, %v1172
        %v1174 = vrot.slane %v1160, %v1173
        %v1175 = vcombine.low %v1151, %v1167
        %v1176 = vcombine.high %v1151, %v1167
        %v1177 = vcombine.low %v1158, %v1174
        %v1178 = vcombine.high %v1158, %v1174
        %vm1179 = vcmask 64512
        %v1181 = vsel %vm1179, %v883, 0
        %v1184 = vsel %vm1179, %v1029, 0
        %1186 = vmatprep.subr.mxu0 0.0
        %1187 = vmatpush1.xpose.msra.mxu0 %v1184
        %1188 = vmatprep.subr.mxu0 0.0
        %1189 = vmatpush1.xpose.msra.mxu0 0.0
        %1190 = vmatprep.subr.mxu0 0.0
        %1191 = vmatpush1.xpose.msra.mxu0 0.0
        %1192 = vmatprep.subr.mxu0 0.0
        %1193 = vmatpush1.xpose.msra.mxu0 0.0
        %1194 = vmatprep.subr.mxu0 0.0
        %1195 = vmatpush1.xpose.msra.mxu0 0.0
        %1196 = vmatprep.subr.mxu0 0.0
        %1197 = vmatpush1.xpose.msra.mxu0 0.0
        %1198 = vmatprep.subr.mxu0 0.0
        %1199 = vmatpush1.xpose.msra.mxu0 0.0
        %1200 = vmatprep.subr.mxu0 0.0
        %1201 = vmatpush1.xpose.msra.mxu0 0.0
        %1202 = vmatprep.subr.mxu0 0.0
        %1203 = vmatpush1.xpose.msra.mxu0 0.0
        %1204 = vmatprep.subr.mxu0 0.0
        %1205 = vmatpush1.xpose.msra.mxu0 0.0
        %1206 = vmatprep.subr.mxu0 0.0
        %1207 = vmatpush1.xpose.msra.mxu0 0.0
        %1208 = vmatprep.subr.mxu0 0.0
        %1209 = vmatpush1.xpose.msra.mxu0 0.0
        %1210 = vmatprep.subr.mxu0 0.0
        %1211 = vmatpush1.xpose.msra.mxu0 0.0
        %1212 = vmatprep.subr.mxu0 0.0
        %1213 = vmatpush1.xpose.msra.mxu0 0.0
        %1214 = vmatprep.subr.mxu0 0.0
        %1215 = vmatpush1.xpose.msra.mxu0 0.0
        %1216 = vmatprep.subr.mxu0 0.0
        %1217 = vmatpush1.xpose.msra.mxu0 0.0
        %1218 = vmatprep.subr.mxu0 0.0
        %1219 = vmatpush1.xpose.msra.mxu0 0.0
        %1220 = vmatprep.subr.mxu0 0.0
        %1221 = vmatpush1.xpose.msra.mxu0 0.0
        %1222 = vmatprep.subr.mxu0 0.0
        %1223 = vmatpush1.xpose.msra.mxu0 0.0
        %1224 = vmatprep.subr.mxu0 0.0
        %1225 = vmatpush1.xpose.msra.mxu0 0.0
        %1226 = vmatprep.subr.mxu0 0.0
        %1227 = vmatpush1.xpose.msra.mxu0 0.0
        %1228 = vmatprep.subr.mxu0 0.0
        %1229 = vmatpush1.xpose.msra.mxu0 0.0
        %1230 = vmatprep.subr.mxu0 0.0
        %1231 = vmatpush1.xpose.msra.mxu0 0.0
        %1232 = vmatprep.subr.mxu0 0.0
        %1233 = vmatpush1.xpose.msra.mxu0 0.0
        %1234 = vmatprep.subr.mxu0 0.0
        %1235 = vmatpush1.xpose.msra.mxu0 0.0
        %1236 = vmatprep.subr.mxu0 0.0
        %1237 = vmatpush1.xpose.msra.mxu0 0.0
        %1238 = vmatprep.subr.mxu0 0.0
        %1239 = vmatpush1.xpose.msra.mxu0 0.0
        %1240 = vmatprep.subr.mxu0 0.0
        %1241 = vmatpush1.xpose.msra.mxu0 0.0
        %1242 = vmatprep.subr.mxu0 0.0
        %1243 = vmatpush1.xpose.msra.mxu0 0.0
        %1244 = vmatprep.subr.mxu0 0.0
        %1245 = vmatpush1.xpose.msra.mxu0 0.0
        %1246 = vmatprep.subr.mxu0 0.0
        %1247 = vmatpush1.xpose.msra.mxu0 0.0
        %1248 = vmatprep.subr.mxu0 0.0
        %1249 = vmatpush1.xpose.msra.mxu0 0.0
        %1250 = vmatprep.mubr.f32.mxu0 0.0
        %1251 = vmatmul.mubr.f32.gmra.mrb[0].mxu0 %v1181
        %v1252 = vpop.f32.mrb[0].mxu0
        %v1253 = vadd.f32 0.0, %v1252
        %v1254 = vpop.f32.mrb[0].mxu0
        %1255 = vdwg.mxu0
        %v1257 = vsel %vm1179, %v884, 0
        %v1260 = vsel %vm1179, %v1030, 0
        %1262 = vmatprep.subr.mxu0 0.0
        %1263 = vmatpush1.xpose.msra.mxu0 %v1260
        %1264 = vmatprep.subr.mxu0 0.0
        %1265 = vmatpush1.xpose.msra.mxu0 0.0
        %1266 = vmatprep.subr.mxu0 0.0
        %1267 = vmatpush1.xpose.msra.mxu0 0.0
        %1268 = vmatprep.subr.mxu0 0.0
        %1269 = vmatpush1.xpose.msra.mxu0 0.0
        %1270 = vmatprep.subr.mxu0 0.0
        %1271 = vmatpush1.xpose.msra.mxu0 0.0
        %1272 = vmatprep.subr.mxu0 0.0
        %1273 = vmatpush1.xpose.msra.mxu0 0.0
        %1274 = vmatprep.subr.mxu0 0.0
        %1275 = vmatpush1.xpose.msra.mxu0 0.0
        %1276 = vmatprep.subr.mxu0 0.0
        %1277 = vmatpush1.xpose.msra.mxu0 0.0
        %1278 = vmatprep.subr.mxu0 0.0
        %1279 = vmatpush1.xpose.msra.mxu0 0.0
        %1280 = vmatprep.subr.mxu0 0.0
        %1281 = vmatpush1.xpose.msra.mxu0 0.0
        %1282 = vmatprep.subr.mxu0 0.0
        %1283 = vmatpush1.xpose.msra.mxu0 0.0
        %1284 = vmatprep.subr.mxu0 0.0
        %1285 = vmatpush1.xpose.msra.mxu0 0.0
        %1286 = vmatprep.subr.mxu0 0.0
        %1287 = vmatpush1.xpose.msra.mxu0 0.0
        %1288 = vmatprep.subr.mxu0 0.0
        %1289 = vmatpush1.xpose.msra.mxu0 0.0
        %1290 = vmatprep.subr.mxu0 0.0
        %1291 = vmatpush1.xpose.msra.mxu0 0.0
        %1292 = vmatprep.subr.mxu0 0.0
        %1293 = vmatpush1.xpose.msra.mxu0 0.0
        %1294 = vmatprep.subr.mxu0 0.0
        %1295 = vmatpush1.xpose.msra.mxu0 0.0
        %1296 = vmatprep.subr.mxu0 0.0
        %1297 = vmatpush1.xpose.msra.mxu0 0.0
        %1298 = vmatprep.subr.mxu0 0.0
        %1299 = vmatpush1.xpose.msra.mxu0 0.0
        %1300 = vmatprep.subr.mxu0 0.0
        %1301 = vmatpush1.xpose.msra.mxu0 0.0
        %1302 = vmatprep.subr.mxu0 0.0
        %1303 = vmatpush1.xpose.msra.mxu0 0.0
        %1304 = vmatprep.subr.mxu0 0.0
        %1305 = vmatpush1.xpose.msra.mxu0 0.0
        %1306 = vmatprep.subr.mxu0 0.0
        %1307 = vmatpush1.xpose.msra.mxu0 0.0
        %1308 = vmatprep.subr.mxu0 0.0
        %1309 = vmatpush1.xpose.msra.mxu0 0.0
        %1310 = vmatprep.subr.mxu0 0.0
        %1311 = vmatpush1.xpose.msra.mxu0 0.0
        %1312 = vmatprep.subr.mxu0 0.0
        %1313 = vmatpush1.xpose.msra.mxu0 0.0
        %1314 = vmatprep.subr.mxu0 0.0
        %1315 = vmatpush1.xpose.msra.mxu0 0.0
        %1316 = vmatprep.subr.mxu0 0.0
        %1317 = vmatpush1.xpose.msra.mxu0 0.0
        %1318 = vmatprep.subr.mxu0 0.0
        %1319 = vmatpush1.xpose.msra.mxu0 0.0
        %1320 = vmatprep.subr.mxu0 0.0
        %1321 = vmatpush1.xpose.msra.mxu0 0.0
        %1322 = vmatprep.subr.mxu0 0.0
        %1323 = vmatpush1.xpose.msra.mxu0 0.0
        %1324 = vmatprep.subr.mxu0 0.0
        %1325 = vmatpush1.xpose.msra.mxu0 0.0
        %1326 = vmatprep.mubr.f32.mxu0 0.0
        %1327 = vmatmul.mubr.f32.gmra.mrb[0].mxu0 %v1257
        %v1328 = vpop.f32.mrb[0].mxu0
        %v1329 = vadd.f32 0.0, %v1328
        %v1330 = vpop.f32.mrb[0].mxu0
        %1331 = vdwg.mxu0
        %v1333 = vsel %vm1179, %v885, 0
        %v1336 = vsel %vm1179, %v1031, 0
        %1338 = vmatprep.subr.mxu0 0.0
        %1339 = vmatpush1.xpose.msra.mxu0 %v1336
        %1340 = vmatprep.subr.mxu0 0.0
        %1341 = vmatpush1.xpose.msra.mxu0 0.0
        %1342 = vmatprep.subr.mxu0 0.0
        %1343 = vmatpush1.xpose.msra.mxu0 0.0
        %1344 = vmatprep.subr.mxu0 0.0
        %1345 = vmatpush1.xpose.msra.mxu0 0.0
        %1346 = vmatprep.subr.mxu0 0.0
        %1347 = vmatpush1.xpose.msra.mxu0 0.0
        %1348 = vmatprep.subr.mxu0 0.0
        %1349 = vmatpush1.xpose.msra.mxu0 0.0
        %1350 = vmatprep.subr.mxu0 0.0
        %1351 = vmatpush1.xpose.msra.mxu0 0.0
        %1352 = vmatprep.subr.mxu0 0.0
        %1353 = vmatpush1.xpose.msra.mxu0 0.0
        %1354 = vmatprep.subr.mxu0 0.0
        %1355 = vmatpush1.xpose.msra.mxu0 0.0
        %1356 = vmatprep.subr.mxu0 0.0
        %1357 = vmatpush1.xpose.msra.mxu0 0.0
        %1358 = vmatprep.subr.mxu0 0.0
        %1359 = vmatpush1.xpose.msra.mxu0 0.0
        %1360 = vmatprep.subr.mxu0 0.0
        %1361 = vmatpush1.xpose.msra.mxu0 0.0
        %1362 = vmatprep.subr.mxu0 0.0
        %1363 = vmatpush1.xpose.msra.mxu0 0.0
        %1364 = vmatprep.subr.mxu0 0.0
        %1365 = vmatpush1.xpose.msra.mxu0 0.0
        %1366 = vmatprep.subr.mxu0 0.0
        %1367 = vmatpush1.xpose.msra.mxu0 0.0
        %1368 = vmatprep.subr.mxu0 0.0
        %1369 = vmatpush1.xpose.msra.mxu0 0.0
        %1370 = vmatprep.subr.mxu0 0.0
        %1371 = vmatpush1.xpose.msra.mxu0 0.0
        %1372 = vmatprep.subr.mxu0 0.0
        %1373 = vmatpush1.xpose.msra.mxu0 0.0
        %1374 = vmatprep.subr.mxu0 0.0
        %1375 = vmatpush1.xpose.msra.mxu0 0.0
        %1376 = vmatprep.subr.mxu0 0.0
        %1377 = vmatpush1.xpose.msra.mxu0 0.0
        %1378 = vmatprep.subr.mxu0 0.0
        %1379 = vmatpush1.xpose.msra.mxu0 0.0
        %1380 = vmatprep.subr.mxu0 0.0
        %1381 = vmatpush1.xpose.msra.mxu0 0.0
        %1382 = vmatprep.subr.mxu0 0.0
        %1383 = vmatpush1.xpose.msra.mxu0 0.0
        %1384 = vmatprep.subr.mxu0 0.0
        %1385 = vmatpush1.xpose.msra.mxu0 0.0
        %1386 = vmatprep.subr.mxu0 0.0
        %1387 = vmatpush1.xpose.msra.mxu0 0.0
        %1388 = vmatprep.subr.mxu0 0.0
        %1389 = vmatpush1.xpose.msra.mxu0 0.0
        %1390 = vmatprep.subr.mxu0 0.0
        %1391 = vmatpush1.xpose.msra.mxu0 0.0
        %1392 = vmatprep.subr.mxu0 0.0
        %1393 = vmatpush1.xpose.msra.mxu0 0.0
        %1394 = vmatprep.subr.mxu0 0.0
        %1395 = vmatpush1.xpose.msra.mxu0 0.0
        %1396 = vmatprep.subr.mxu0 0.0
        %1397 = vmatpush1.xpose.msra.mxu0 0.0
        %1398 = vmatprep.subr.mxu0 0.0
        %1399 = vmatpush1.xpose.msra.mxu0 0.0
        %1400 = vmatprep.subr.mxu0 0.0
        %1401 = vmatpush1.xpose.msra.mxu0 0.0
        %1402 = vmatprep.mubr.f32.mxu0 0.0
        %1403 = vmatmul.mubr.f32.gmra.mrb[0].mxu0 %v1333
        %v1404 = vpop.f32.mrb[0].mxu0
        %v1405 = vadd.f32 0.0, %v1404
        %v1406 = vpop.f32.mrb[0].mxu0
        %1407 = vdwg.mxu0
        %v1409 = vsel %vm1179, %v886, 0
        %v1412 = vsel %vm1179, %v1032, 0
        %1414 = vmatprep.subr.mxu0 0.0
        %1415 = vmatpush1.xpose.msra.mxu0 %v1412
        %1416 = vmatprep.subr.mxu0 0.0
        %1417 = vmatpush1.xpose.msra.mxu0 0.0
        %1418 = vmatprep.subr.mxu0 0.0
        %1419 = vmatpush1.xpose.msra.mxu0 0.0
        %1420 = vmatprep.subr.mxu0 0.0
        %1421 = vmatpush1.xpose.msra.mxu0 0.0
        %1422 = vmatprep.subr.mxu0 0.0
        %1423 = vmatpush1.xpose.msra.mxu0 0.0
        %1424 = vmatprep.subr.mxu0 0.0
        %1425 = vmatpush1.xpose.msra.mxu0 0.0
        %1426 = vmatprep.subr.mxu0 0.0
        %1427 = vmatpush1.xpose.msra.mxu0 0.0
        %1428 = vmatprep.subr.mxu0 0.0
        %1429 = vmatpush1.xpose.msra.mxu0 0.0
        %1430 = vmatprep.subr.mxu0 0.0
        %1431 = vmatpush1.xpose.msra.mxu0 0.0
        %1432 = vmatprep.subr.mxu0 0.0
        %1433 = vmatpush1.xpose.msra.mxu0 0.0
        %1434 = vmatprep.subr.mxu0 0.0
        %1435 = vmatpush1.xpose.msra.mxu0 0.0
        %1436 = vmatprep.subr.mxu0 0.0
        %1437 = vmatpush1.xpose.msra.mxu0 0.0
        %1438 = vmatprep.subr.mxu0 0.0
        %1439 = vmatpush1.xpose.msra.mxu0 0.0
        %1440 = vmatprep.subr.mxu0 0.0
        %1441 = vmatpush1.xpose.msra.mxu0 0.0
        %1442 = vmatprep.subr.mxu0 0.0
        %1443 = vmatpush1.xpose.msra.mxu0 0.0
        %1444 = vmatprep.subr.mxu0 0.0
        %1445 = vmatpush1.xpose.msra.mxu0 0.0
        %1446 = vmatprep.subr.mxu0 0.0
        %1447 = vmatpush1.xpose.msra.mxu0 0.0
        %1448 = vmatprep.subr.mxu0 0.0
        %1449 = vmatpush1.xpose.msra.mxu0 0.0
        %1450 = vmatprep.subr.mxu0 0.0
        %1451 = vmatpush1.xpose.msra.mxu0 0.0
        %1452 = vmatprep.subr.mxu0 0.0
        %1453 = vmatpush1.xpose.msra.mxu0 0.0
        %1454 = vmatprep.subr.mxu0 0.0
        %1455 = vmatpush1.xpose.msra.mxu0 0.0
        %1456 = vmatprep.subr.mxu0 0.0
        %1457 = vmatpush1.xpose.msra.mxu0 0.0
        %1458 = vmatprep.subr.mxu0 0.0
        %1459 = vmatpush1.xpose.msra.mxu0 0.0
        %1460 = vmatprep.subr.mxu0 0.0
        %1461 = vmatpush1.xpose.msra.mxu0 0.0
        %1462 = vmatprep.subr.mxu0 0.0
        %1463 = vmatpush1.xpose.msra.mxu0 0.0
        %1464 = vmatprep.subr.mxu0 0.0
        %1465 = vmatpush1.xpose.msra.mxu0 0.0
        %1466 = vmatprep.subr.mxu0 0.0
        %1467 = vmatpush1.xpose.msra.mxu0 0.0
        %1468 = vmatprep.subr.mxu0 0.0
        %1469 = vmatpush1.xpose.msra.mxu0 0.0
        %1470 = vmatprep.subr.mxu0 0.0
        %1471 = vmatpush1.xpose.msra.mxu0 0.0
        %1472 = vmatprep.subr.mxu0 0.0
        %1473 = vmatpush1.xpose.msra.mxu0 0.0
        %1474 = vmatprep.subr.mxu0 0.0
        %1475 = vmatpush1.xpose.msra.mxu0 0.0
        %1476 = vmatprep.subr.mxu0 0.0
        %1477 = vmatpush1.xpose.msra.mxu0 0.0
        %1478 = vmatprep.mubr.f32.mxu0 0.0
        %1479 = vmatmul.mubr.f32.gmra.mrb[0].mxu0 %v1409
        %v1480 = vpop.f32.mrb[0].mxu0
        %v1481 = vadd.f32 0.0, %v1480
        %v1482 = vpop.f32.mrb[0].mxu0
        %1483 = vdwg.mxu0
        %v1484 = vsel %vm1179, %v1253, -inf
        %1485 = vmax.xlane.f32.xlu0 %v1484
        %v1486 = vpop.xlane.xlu0 %1485
        %v1487 = vsel %vm1179, %v1329, -inf
        %1488 = vmax.xlane.f32.xlu0 %v1487
        %v1489 = vpop.xlane.xlu0 %1488
        %v1490 = vsel %vm1179, %v1405, -inf
        %1491 = vmax.xlane.f32.xlu0 %v1490
        %v1492 = vpop.xlane.xlu0 %1491
        %v1493 = vsel %vm1179, %v1481, -inf
        %1494 = vmax.xlane.f32.xlu0 %v1493
        %v1495 = vpop.xlane.xlu0 %1494
        %v1496 = vsub.f32 %v1253, %v1486
        %v1497 = vsub.f32 %v1329, %v1489
        %v1498 = vsub.f32 %v1405, %v1492
        %v1499 = vsub.f32 %v1481, %v1495
        %v1500 = vmul.f32 %v1496, 1.442695
        %v1501 = vpow.pop %v1500
        %v1502 = vmul.f32 %v1497, 1.442695
        %v1503 = vpow.pop %v1502
        %v1504 = vmul.f32 %v1498, 1.442695
        %v1505 = vpow.pop %v1504
        %v1506 = vmul.f32 %v1499, 1.442695
        %v1507 = vpow.pop %v1506
        %v1508 = vsel %vm1179, %v1501, 0.0
        %1509 = vadd.xlane.f32.xlu0 %v1508
        %v1510 = vpop.xlane.xlu0 %1509
        %v1511 = vsel %vm1179, %v1503, 0.0
        %1512 = vadd.xlane.f32.xlu0 %v1511
        %v1513 = vpop.xlane.xlu0 %1512
        %v1514 = vsel %vm1179, %v1505, 0.0
        %1515 = vadd.xlane.f32.xlu0 %v1514
        %v1516 = vpop.xlane.xlu0 %1515
        %v1517 = vsel %vm1179, %v1507, 0.0
        %1518 = vadd.xlane.f32.xlu0 %v1517
        %v1519 = vpop.xlane.xlu0 %1518
        %v1520 = vrcp.pop %v1510
        %v1521 = vrcp.pop %v1513
        %v1522 = vrcp.pop %v1516
        %v1523 = vrcp.pop %v1519
        %v1524 = vmul.f32 %v1501, %v1520
        %v1525 = vmul.f32 %v1503, %v1521
        %v1526 = vmul.f32 %v1505, %v1522
        %v1527 = vmul.f32 %v1507, %v1523
        %v1528 = vsel %vm1179, %v1524, 0.0
        %v1529 = vsel %vm1179, %v1525, 0.0
        %v1530 = vadd.f32 %v1528, %v1529
        %v1531 = vsel %vm1179, %v1526, 0.0
        %v1532 = vadd.f32 %v1530, %v1531
        %v1533 = vsel %vm1179, %v1527, 0.0
        %v1534 = vadd.f32 %v1532, %v1533
        %v1535 = vmul.f32 %v1534, 0.25
        %1536 = vst.msk [vmem:[%s478] sm:$0xff] %vm1179, %v1535
        %v1538 = vsel %vm1179, %v1524, 0
        %1540 = vmatprep.subr.mxu0 0.0
        %1541 = vmatpush1.msra.mxu0 %v1175
        %1542 = vmatprep.subr.mxu0 0.0
        %1543 = vmatpush1.msra.mxu0 0.0
        %1544 = vmatprep.subr.mxu0 0.0
        %1545 = vmatpush1.msra.mxu0 0.0
        %1546 = vmatprep.subr.mxu0 0.0
        %1547 = vmatpush1.msra.mxu0 0.0
        %1548 = vmatprep.subr.mxu0 0.0
        %1549 = vmatpush1.msra.mxu0 0.0
        %1550 = vmatprep.subr.mxu0 0.0
        %1551 = vmatpush1.msra.mxu0 0.0
        %1552 = vmatprep.subr.mxu0 0.0
        %1553 = vmatpush1.msra.mxu0 0.0
        %1554 = vmatprep.subr.mxu0 0.0
        %1555 = vmatpush1.msra.mxu0 0.0
        %1556 = vmatprep.subr.mxu0 0.0
        %1557 = vmatpush1.msra.mxu0 0.0
        %1558 = vmatprep.subr.mxu0 0.0
        %1559 = vmatpush1.msra.mxu0 0.0
        %1560 = vmatprep.subr.mxu0 0.0
        %1561 = vmatpush1.msra.mxu0 0.0
        %1562 = vmatprep.subr.mxu0 0.0
        %1563 = vmatpush1.msra.mxu0 0.0
        %1564 = vmatprep.subr.mxu0 0.0
        %1565 = vmatpush1.msra.mxu0 0.0
        %1566 = vmatprep.subr.mxu0 0.0
        %1567 = vmatpush1.msra.mxu0 0.0
        %1568 = vmatprep.subr.mxu0 0.0
        %1569 = vmatpush1.msra.mxu0 0.0
        %1570 = vmatprep.subr.mxu0 0.0
        %1571 = vmatpush1.msra.mxu0 0.0
        %1572 = vmatprep.subr.mxu0 0.0
        %1573 = vmatpush1.msra.mxu0 0.0
        %1574 = vmatprep.subr.mxu0 0.0
        %1575 = vmatpush1.msra.mxu0 0.0
        %1576 = vmatprep.subr.mxu0 0.0
        %1577 = vmatpush1.msra.mxu0 0.0
        %1578 = vmatprep.subr.mxu0 0.0
        %1579 = vmatpush1.msra.mxu0 0.0
        %1580 = vmatprep.subr.mxu0 0.0
        %1581 = vmatpush1.msra.mxu0 0.0
        %1582 = vmatprep.subr.mxu0 0.0
        %1583 = vmatpush1.msra.mxu0 0.0
        %1584 = vmatprep.subr.mxu0 0.0
        %1585 = vmatpush1.msra.mxu0 0.0
        %1586 = vmatprep.subr.mxu0 0.0
        %1587 = vmatpush1.msra.mxu0 0.0
        %1588 = vmatprep.subr.mxu0 0.0
        %1589 = vmatpush1.msra.mxu0 0.0
        %1590 = vmatprep.subr.mxu0 0.0
        %1591 = vmatpush1.msra.mxu0 0.0
        %1592 = vmatprep.subr.mxu0 0.0
        %1593 = vmatpush1.msra.mxu0 0.0
        %1594 = vmatprep.subr.mxu0 0.0
        %1595 = vmatpush1.msra.mxu0 0.0
        %1596 = vmatprep.subr.mxu0 0.0
        %1597 = vmatpush1.msra.mxu0 0.0
        %1598 = vmatprep.subr.mxu0 0.0
        %1599 = vmatpush1.msra.mxu0 0.0
        %1600 = vmatprep.subr.mxu0 0.0
        %1601 = vmatpush1.msra.mxu0 0.0
        %1602 = vmatprep.subr.mxu0 0.0
        %1603 = vmatpush1.msra.mxu0 0.0
        %1604 = vmatprep.mubr.f32.mxu0 0.0
        %1605 = vmatmul.mubr.f32.gmra.mrb[0].mxu0 %v1538
        %v1606 = vpop.f32.mrb[0].mxu0
        %v1607 = vadd.f32 0.0, %v1606
        %v1608 = vpop.f32.mrb[0].mxu0
        %1609 = vdwg.mxu0
        %v1611 = vsel %vm1179, %v1525, 0
        %1613 = vmatprep.subr.mxu0 0.0
        %1614 = vmatpush1.msra.mxu0 %v1176
        %1615 = vmatprep.subr.mxu0 0.0
        %1616 = vmatpush1.msra.mxu0 0.0
        %1617 = vmatprep.subr.mxu0 0.0
        %1618 = vmatpush1.msra.mxu0 0.0
        %1619 = vmatprep.subr.mxu0 0.0
        %1620 = vmatpush1.msra.mxu0 0.0
        %1621 = vmatprep.subr.mxu0 0.0
        %1622 = vmatpush1.msra.mxu0 0.0
        %1623 = vmatprep.subr.mxu0 0.0
        %1624 = vmatpush1.msra.mxu0 0.0
        %1625 = vmatprep.subr.mxu0 0.0
        %1626 = vmatpush1.msra.mxu0 0.0
        %1627 = vmatprep.subr.mxu0 0.0
        %1628 = vmatpush1.msra.mxu0 0.0
        %1629 = vmatprep.subr.mxu0 0.0
        %1630 = vmatpush1.msra.mxu0 0.0
        %1631 = vmatprep.subr.mxu0 0.0
        %1632 = vmatpush1.msra.mxu0 0.0
        %1633 = vmatprep.subr.mxu0 0.0
        %1634 = vmatpush1.msra.mxu0 0.0
        %1635 = vmatprep.subr.mxu0 0.0
        %1636 = vmatpush1.msra.mxu0 0.0
        %1637 = vmatprep.subr.mxu0 0.0
        %1638 = vmatpush1.msra.mxu0 0.0
        %1639 = vmatprep.subr.mxu0 0.0
        %1640 = vmatpush1.msra.mxu0 0.0
        %1641 = vmatprep.subr.mxu0 0.0
        %1642 = vmatpush1.msra.mxu0 0.0
        %1643 = vmatprep.subr.mxu0 0.0
        %1644 = vmatpush1.msra.mxu0 0.0
        %1645 = vmatprep.subr.mxu0 0.0
        %1646 = vmatpush1.msra.mxu0 0.0
        %1647 = vmatprep.subr.mxu0 0.0
        %1648 = vmatpush1.msra.mxu0 0.0
        %1649 = vmatprep.subr.mxu0 0.0
        %1650 = vmatpush1.msra.mxu0 0.0
        %1651 = vmatprep.subr.mxu0 0.0
        %1652 = vmatpush1.msra.mxu0 0.0
        %1653 = vmatprep.subr.mxu0 0.0
        %1654 = vmatpush1.msra.mxu0 0.0
        %1655 = vmatprep.subr.mxu0 0.0
        %1656 = vmatpush1.msra.mxu0 0.0
        %1657 = vmatprep.subr.mxu0 0.0
        %1658 = vmatpush1.msra.mxu0 0.0
        %1659 = vmatprep.subr.mxu0 0.0
        %1660 = vmatpush1.msra.mxu0 0.0
        %1661 = vmatprep.subr.mxu0 0.0
        %1662 = vmatpush1.msra.mxu0 0.0
        %1663 = vmatprep.subr.mxu0 0.0
        %1664 = vmatpush1.msra.mxu0 0.0
        %1665 = vmatprep.subr.mxu0 0.0
        %1666 = vmatpush1.msra.mxu0 0.0
        %1667 = vmatprep.subr.mxu0 0.0
        %1668 = vmatpush1.msra.mxu0 0.0
        %1669 = vmatprep.subr.mxu0 0.0
        %1670 = vmatpush1.msra.mxu0 0.0
        %1671 = vmatprep.subr.mxu0 0.0
        %1672 = vmatpush1.msra.mxu0 0.0
        %1673 = vmatprep.subr.mxu0 0.0
        %1674 = vmatpush1.msra.mxu0 0.0
        %1675 = vmatprep.subr.mxu0 0.0
        %1676 = vmatpush1.msra.mxu0 0.0
        %1677 = vmatprep.mubr.f32.mxu0 0.0
        %1678 = vmatmul.mubr.f32.gmra.mrb[0].mxu0 %v1611
        %v1679 = vpop.f32.mrb[0].mxu0
        %v1680 = vadd.f32 0.0, %v1679
        %v1681 = vpop.f32.mrb[0].mxu0
        %1682 = vdwg.mxu0
        %v1684 = vsel %vm1179, %v1526, 0
        %1686 = vmatprep.subr.mxu0 0.0
        %1687 = vmatpush1.msra.mxu0 %v1177
        %1688 = vmatprep.subr.mxu0 0.0
        %1689 = vmatpush1.msra.mxu0 0.0
        %1690 = vmatprep.subr.mxu0 0.0
        %1691 = vmatpush1.msra.mxu0 0.0
        %1692 = vmatprep.subr.mxu0 0.0
        %1693 = vmatpush1.msra.mxu0 0.0
        %1694 = vmatprep.subr.mxu0 0.0
        %1695 = vmatpush1.msra.mxu0 0.0
        %1696 = vmatprep.subr.mxu0 0.0
        %1697 = vmatpush1.msra.mxu0 0.0
        %1698 = vmatprep.subr.mxu0 0.0
        %1699 = vmatpush1.msra.mxu0 0.0
        %1700 = vmatprep.subr.mxu0 0.0
        %1701 = vmatpush1.msra.mxu0 0.0
        %1702 = vmatprep.subr.mxu0 0.0
        %1703 = vmatpush1.msra.mxu0 0.0
        %1704 = vmatprep.subr.mxu0 0.0
        %1705 = vmatpush1.msra.mxu0 0.0
        %1706 = vmatprep.subr.mxu0 0.0
        %1707 = vmatpush1.msra.mxu0 0.0
        %1708 = vmatprep.subr.mxu0 0.0
        %1709 = vmatpush1.msra.mxu0 0.0
        %1710 = vmatprep.subr.mxu0 0.0
        %1711 = vmatpush1.msra.mxu0 0.0
        %1712 = vmatprep.subr.mxu0 0.0
        %1713 = vmatpush1.msra.mxu0 0.0
        %1714 = vmatprep.subr.mxu0 0.0
        %1715 = vmatpush1.msra.mxu0 0.0
        %1716 = vmatprep.subr.mxu0 0.0
        %1717 = vmatpush1.msra.mxu0 0.0
        %1718 = vmatprep.subr.mxu0 0.0
        %1719 = vmatpush1.msra.mxu0 0.0
        %1720 = vmatprep.subr.mxu0 0.0
        %1721 = vmatpush1.msra.mxu0 0.0
        %1722 = vmatprep.subr.mxu0 0.0
        %1723 = vmatpush1.msra.mxu0 0.0
        %1724 = vmatprep.subr.mxu0 0.0
        %1725 = vmatpush1.msra.mxu0 0.0
        %1726 = vmatprep.subr.mxu0 0.0
        %1727 = vmatpush1.msra.mxu0 0.0
        %1728 = vmatprep.subr.mxu0 0.0
        %1729 = vmatpush1.msra.mxu0 0.0
        %1730 = vmatprep.subr.mxu0 0.0
        %1731 = vmatpush1.msra.mxu0 0.0
        %1732 = vmatprep.subr.mxu0 0.0
        %1733 = vmatpush1.msra.mxu0 0.0
        %1734 = vmatprep.subr.mxu0 0.0
        %1735 = vmatpush1.msra.mxu0 0.0
        %1736 = vmatprep.subr.mxu0 0.0
        %1737 = vmatpush1.msra.mxu0 0.0
        %1738 = vmatprep.subr.mxu0 0.0
        %1739 = vmatpush1.msra.mxu0 0.0
        %1740 = vmatprep.subr.mxu0 0.0
        %1741 = vmatpush1.msra.mxu0 0.0
        %1742 = vmatprep.subr.mxu0 0.0
        %1743 = vmatpush1.msra.mxu0 0.0
        %1744 = vmatprep.subr.mxu0 0.0
        %1745 = vmatpush1.msra.mxu0 0.0
        %1746 = vmatprep.subr.mxu0 0.0
        %1747 = vmatpush1.msra.mxu0 0.0
        %1748 = vmatprep.subr.mxu0 0.0
        %1749 = vmatpush1.msra.mxu0 0.0
        %1750 = vmatprep.mubr.f32.mxu0 0.0
        %1751 = vmatmul.mubr.f32.gmra.mrb[0].mxu0 %v1684
        %v1752 = vpop.f32.mrb[0].mxu0
        %v1753 = vadd.f32 0.0, %v1752
        %v1754 = vpop.f32.mrb[0].mxu0
        %1755 = vdwg.mxu0
        %v1757 = vsel %vm1179, %v1527, 0
        %1759 = vmatprep.subr.mxu0 0.0
        %1760 = vmatpush1.msra.mxu0 %v1178
        %1761 = vmatprep.subr.mxu0 0.0
        %1762 = vmatpush1.msra.mxu0 0.0
        %1763 = vmatprep.subr.mxu0 0.0
        %1764 = vmatpush1.msra.mxu0 0.0
        %1765 = vmatprep.subr.mxu0 0.0
        %1766 = vmatpush1.msra.mxu0 0.0
        %1767 = vmatprep.subr.mxu0 0.0
        %1768 = vmatpush1.msra.mxu0 0.0
        %1769 = vmatprep.subr.mxu0 0.0
        %1770 = vmatpush1.msra.mxu0 0.0
        %1771 = vmatprep.subr.mxu0 0.0
        %1772 = vmatpush1.msra.mxu0 0.0
        %1773 = vmatprep.subr.mxu0 0.0
        %1774 = vmatpush1.msra.mxu0 0.0
        %1775 = vmatprep.subr.mxu0 0.0
        %1776 = vmatpush1.msra.mxu0 0.0
        %1777 = vmatprep.subr.mxu0 0.0
        %1778 = vmatpush1.msra.mxu0 0.0
        %1779 = vmatprep.subr.mxu0 0.0
        %1780 = vmatpush1.msra.mxu0 0.0
        %1781 = vmatprep.subr.mxu0 0.0
        %1782 = vmatpush1.msra.mxu0 0.0
        %1783 = vmatprep.subr.mxu0 0.0
        %1784 = vmatpush1.msra.mxu0 0.0
        %1785 = vmatprep.subr.mxu0 0.0
        %1786 = vmatpush1.msra.mxu0 0.0
        %1787 = vmatprep.subr.mxu0 0.0
        %1788 = vmatpush1.msra.mxu0 0.0
        %1789 = vmatprep.subr.mxu0 0.0
        %1790 = vmatpush1.msra.mxu0 0.0
        %1791 = vmatprep.subr.mxu0 0.0
        %1792 = vmatpush1.msra.mxu0 0.0
        %1793 = vmatprep.subr.mxu0 0.0
        %1794 = vmatpush1.msra.mxu0 0.0
        %1795 = vmatprep.subr.mxu0 0.0
        %1796 = vmatpush1.msra.mxu0 0.0
        %1797 = vmatprep.subr.mxu0 0.0
        %1798 = vmatpush1.msra.mxu0 0.0
        %1799 = vmatprep.subr.mxu0 0.0
        %1800 = vmatpush1.msra.mxu0 0.0
        %1801 = vmatprep.subr.mxu0 0.0
        %1802 = vmatpush1.msra.mxu0 0.0
        %1803 = vmatprep.subr.mxu0 0.0
        %1804 = vmatpush1.msra.mxu0 0.0
        %1805 = vmatprep.subr.mxu0 0.0
        %1806 = vmatpush1.msra.mxu0 0.0
        %1807 = vmatprep.subr.mxu0 0.0
        %1808 = vmatpush1.msra.mxu0 0.0
        %1809 = vmatprep.subr.mxu0 0.0
        %1810 = vmatpush1.msra.mxu0 0.0
        %1811 = vmatprep.subr.mxu0 0.0
        %1812 = vmatpush1.msra.mxu0 0.0
        %1813 = vmatprep.subr.mxu0 0.0
        %1814 = vmatpush1.msra.mxu0 0.0
        %1815 = vmatprep.subr.mxu0 0.0
        %1816 = vmatpush1.msra.mxu0 0.0
        %1817 = vmatprep.subr.mxu0 0.0
        %1818 = vmatpush1.msra.mxu0 0.0
        %1819 = vmatprep.subr.mxu0 0.0
        %1820 = vmatpush1.msra.mxu0 0.0
        %1821 = vmatprep.subr.mxu0 0.0
        %1822 = vmatpush1.msra.mxu0 0.0
        %1823 = vmatprep.mubr.f32.mxu0 0.0
        %1824 = vmatmul.mubr.f32.gmra.mrb[0].mxu0 %v1757
        %v1825 = vpop.f32.mrb[0].mxu0
        %v1826 = vadd.f32 0.0, %v1825
        %v1827 = vpop.f32.mrb[0].mxu0
        %1828 = vdwg.mxu0
        %v1829 = vcombine.low %v1607, %v1753
        %v1830 = vcombine.high %v1607, %v1753
        %v1832 = vunpack.c.l.s4 1983009808
        %v1833 = vunpack.c.0.s8 %v1832
        %v1834 = vlaneseq
        %v1835 = vshrl.u32 %v1834, 7
        %v1836 = vsub.s32 %v1833, %v1835
        %v1837 = vrot.slane %v1829, %v1836
        %v1839 = vunpack.c.l.s4 1983009808
        %v1840 = vunpack.c.0.s8 %v1839
        %v1841 = vlaneseq
        %v1842 = vshrl.u32 %v1841, 7
        %v1843 = vsub.s32 %v1840, %v1842
        %v1844 = vrot.slane %v1830, %v1843
        %v1845 = vcombine.low %v1680, %v1826
        %v1846 = vcombine.high %v1680, %v1826
        %v1848 = vunpack.c.l.s4 1983009808
        %v1849 = vunpack.c.0.s8 %v1848
        %v1850 = vlaneseq
        %v1851 = vshrl.u32 %v1850, 7
        %v1852 = vsub.s32 %v1849, %v1851
        %v1853 = vrot.slane %v1845, %v1852
        %v1855 = vunpack.c.l.s4 1983009808
        %v1856 = vunpack.c.0.s8 %v1855
        %v1857 = vlaneseq
        %v1858 = vshrl.u32 %v1857, 7
        %v1859 = vsub.s32 %v1856, %v1858
        %v1860 = vrot.slane %v1846, %v1859
        %v1861 = vcombine.low %v1837, %v1853
        %v1862 = vcombine.high %v1837, %v1853
        %v1864 = vunpack.c.l.s4 1934713408
        %v1865 = vunpack.c.0.s8 %v1864
        %v1866 = vlaneseq
        %v1867 = vshrl.u32 %v1866, 7
        %v1868 = vsub.s32 %v1865, %v1867
        %v1869 = vrot.slane %v1861, %v1868
        %v1871 = vunpack.c.l.s4 1934713408
        %v1872 = vunpack.c.0.s8 %v1871
        %v1873 = vlaneseq
        %v1874 = vshrl.u32 %v1873, 7
        %v1875 = vsub.s32 %v1872, %v1874
        %v1876 = vrot.slane %v1862, %v1875
        %v1877 = vcombine.low %v1844, %v1860
        %v1878 = vcombine.high %v1844, %v1860
        %v1880 = vunpack.c.l.s4 1934713408
        %v1881 = vunpack.c.0.s8 %v1880
        %v1882 = vlaneseq
        %v1883 = vshrl.u32 %v1882, 7
        %v1884 = vsub.s32 %v1881, %v1883
        %v1885 = vrot.slane %v1877, %v1884
        %v1887 = vunpack.c.l.s4 1934713408
        %v1888 = vunpack.c.0.s8 %v1887
        %v1889 = vlaneseq
        %v1890 = vshrl.u32 %v1889, 7
        %v1891 = vsub.s32 %v1888, %v1890
        %v1892 = vrot.slane %v1878, %v1891
        %v1893 = vcombine.high %v1869, 0.0
        %v1894 = vcombine.high %v1876, 0.0
        %v1895 = vcombine.high %v1885, 0.0
        %v1896 = vcombine.high %v1892, 0.0
        %v1897 = vcombine.low %v1869, %v1876
        %v1899 = vunpack.c.l.s4 1983009808
        %v1900 = vunpack.c.0.s8 %v1899
        %v1901 = vlaneseq
        %v1902 = vshrl.u32 %v1901, 7
        %v1903 = vsub.s32 %v1900, %v1902
        %v1904 = vrot.slane %v1897, %v1903
        %v1905 = vcombine.low %v1893, %v1894
        %v1907 = vunpack.c.l.s4 1983009808
        %v1908 = vunpack.c.0.s8 %v1907
        %v1909 = vlaneseq
        %v1910 = vshrl.u32 %v1909, 7
        %v1911 = vsub.s32 %v1908, %v1910
        %v1912 = vrot.slane %v1905, %v1911
        %v1913 = vcombine.low %v1885, %v1892
        %v1915 = vunpack.c.l.s4 1983009808
        %v1916 = vunpack.c.0.s8 %v1915
        %v1917 = vlaneseq
        %v1918 = vshrl.u32 %v1917, 7
        %v1919 = vsub.s32 %v1916, %v1918
        %v1920 = vrot.slane %v1913, %v1919
        %v1921 = vcombine.low %v1895, %v1896
        %v1923 = vunpack.c.l.s4 1983009808
        %v1924 = vunpack.c.0.s8 %v1923
        %v1925 = vlaneseq
        %v1926 = vshrl.u32 %v1925, 7
        %v1927 = vsub.s32 %v1924, %v1926
        %v1928 = vrot.slane %v1921, %v1927
        %v1929 = vcombine.low %v1904, %v1912
        %v1930 = vcombine.high %v1904, %v1912
        %v1932 = vunpack.c.l.s4 1934713408
        %v1933 = vunpack.c.0.s8 %v1932
        %v1934 = vlaneseq
        %v1935 = vshrl.u32 %v1934, 7
        %v1936 = vsub.s32 %v1933, %v1935
        %v1937 = vrot.slane %v1929, %v1936
        %v1939 = vunpack.c.l.s4 1934713408
        %v1940 = vunpack.c.0.s8 %v1939
        %v1941 = vlaneseq
        %v1942 = vshrl.u32 %v1941, 7
        %v1943 = vsub.s32 %v1940, %v1942
        %v1944 = vrot.slane %v1930, %v1943
        %v1945 = vcombine.low %v1920, %v1928
        %v1946 = vcombine.high %v1920, %v1928
        %v1948 = vunpack.c.l.s4 1934713408
        %v1949 = vunpack.c.0.s8 %v1948
        %v1950 = vlaneseq
        %v1951 = vshrl.u32 %v1950, 7
        %v1952 = vsub.s32 %v1949, %v1951
        %v1953 = vrot.slane %v1945, %v1952
        %v1955 = vunpack.c.l.s4 1934713408
        %v1956 = vunpack.c.0.s8 %v1955
        %v1957 = vlaneseq
        %v1958 = vshrl.u32 %v1957, 7
        %v1959 = vsub.s32 %v1956, %v1958
        %v1960 = vrot.slane %v1946, %v1959
        %v1961 = vcombine.low %v1937, %v1953
        %v1962 = vcombine.high %v1937, %v1953
        %v1963 = vcombine.low %v1944, %v1960
        %v1964 = vcombine.high %v1944, %v1960
        %1966 = vrot.lane.b32.xlu0 %v1962, 8
        %v1967 = vpop.permute.xlu0 %1966
        %1970 = vrot.lane.b32.xlu0 %v1963, 16
        %v1971 = vpop.permute.xlu0 %1970
        %1974 = vrot.lane.b32.xlu0 %v1964, 24
        %v1975 = vpop.permute.xlu0 %1974
        %v1977 = vsel %vm1179, %v1961, %v1967
        %vm1978 = vcmask 130048
        %v1979 = vsel %vm1978, %v1977, %v1971
        %vm1980 = vcmask 195584
        %v1981 = vsel %vm1980, %v1979, %v1975
        %v1982 = vlaneseq
        %v1983 = vshrl.u32 %v1982, 7
        %v1984 = vsub.s32 3, %v1983
        %v1985 = vrot.slane %v508, %v1984
        %v1987 = vsel %vm516, %v1981, 0
        %1989 = vmatprep.subr.mxu0 0.0
        %1990 = vmatpush1.msra.mxu0 %v491
        %1991 = vmatprep.subr.mxu0 0.0
        %1992 = vmatpush1.msra.mxu0 %v492
        %1993 = vmatprep.subr.mxu0 0.0
        %1994 = vmatpush1.msra.mxu0 %v493
        %1995 = vmatprep.subr.mxu0 0.0
        %1996 = vmatpush1.msra.mxu0 %v494
        %1997 = vmatprep.subr.mxu0 0.0
        %1998 = vmatpush1.msra.mxu0 0.0
        %1999 = vmatprep.subr.mxu0 0.0
        %2000 = vmatpush1.msra.mxu0 0.0
        %2001 = vmatprep.subr.mxu0 0.0
        %2002 = vmatpush1.msra.mxu0 0.0
        %2003 = vmatprep.subr.mxu0 0.0
        %2004 = vmatpush1.msra.mxu0 0.0
        %2005 = vmatprep.subr.mxu0 0.0
        %2006 = vmatpush1.msra.mxu0 0.0
        %2007 = vmatprep.subr.mxu0 0.0
        %2008 = vmatpush1.msra.mxu0 0.0
        %2009 = vmatprep.subr.mxu0 0.0
        %2010 = vmatpush1.msra.mxu0 0.0
        %2011 = vmatprep.subr.mxu0 0.0
        %2012 = vmatpush1.msra.mxu0 0.0
        %2013 = vmatprep.subr.mxu0 0.0
        %2014 = vmatpush1.msra.mxu0 0.0
        %2015 = vmatprep.subr.mxu0 0.0
        %2016 = vmatpush1.msra.mxu0 0.0
        %2017 = vmatprep.subr.mxu0 0.0
        %2018 = vmatpush1.msra.mxu0 0.0
        %2019 = vmatprep.subr.mxu0 0.0
        %2020 = vmatpush1.msra.mxu0 0.0
        %2021 = vmatprep.subr.mxu0 0.0
        %2022 = vmatpush1.msra.mxu0 0.0
        %2023 = vmatprep.subr.mxu0 0.0
        %2024 = vmatpush1.msra.mxu0 0.0
        %2025 = vmatprep.subr.mxu0 0.0
        %2026 = vmatpush1.msra.mxu0 0.0
        %2027 = vmatprep.subr.mxu0 0.0
        %2028 = vmatpush1.msra.mxu0 0.0
        %2029 = vmatprep.subr.mxu0 0.0
        %2030 = vmatpush1.msra.mxu0 0.0
        %2031 = vmatprep.subr.mxu0 0.0
        %2032 = vmatpush1.msra.mxu0 0.0
        %2033 = vmatprep.subr.mxu0 0.0
        %2034 = vmatpush1.msra.mxu0 0.0
        %2035 = vmatprep.subr.mxu0 0.0
        %2036 = vmatpush1.msra.mxu0 0.0
        %2037 = vmatprep.subr.mxu0 0.0
        %2038 = vmatpush1.msra.mxu0 0.0
        %2039 = vmatprep.subr.mxu0 0.0
        %2040 = vmatpush1.msra.mxu0 0.0
        %2041 = vmatprep.subr.mxu0 0.0
        %2042 = vmatpush1.msra.mxu0 0.0
        %2043 = vmatprep.subr.mxu0 0.0
        %2044 = vmatpush1.msra.mxu0 0.0
        %2045 = vmatprep.subr.mxu0 0.0
        %2046 = vmatpush1.msra.mxu0 0.0
        %2047 = vmatprep.subr.mxu0 0.0
        %2048 = vmatpush1.msra.mxu0 0.0
        %2049 = vmatprep.subr.mxu0 0.0
        %2050 = vmatpush1.msra.mxu0 0.0
        %2051 = vmatprep.subr.mxu0 0.0
        %2052 = vmatpush1.msra.mxu0 0.0
        %2053 = vmatprep.mubr.f32.mxu0 0.0
        %2054 = vmatmul.mubr.f32.gmra.mrb[0].mxu0 %v1987
        %v2055 = vpop.f32.mrb[0].mxu0
        %v2056 = vadd.f32 %v1985, %v2055
        %v2057 = vpop.f32.mrb[0].mxu0
        %2058 = vdwg.mxu0
        %v2059 = vadd.f32 %v510, %v2056
        %v2060 = vsel %vm516, %v2059, 0.0
        %2061 = vadd.xlane.f32.xlu0 %v2060
        %v2062 = vpop.xlane.xlu0 %2061
        %v2063 = vrcp.pop 32.0
        %v2064 = vmul.f32 %v2062, %v2063
        %v2065 = vsub.f32 %v2059, %v2064
        %v2066 = vmul.f32 %v2065, %v2065
        %v2067 = vsel %vm516, %v2066, 0.0
        %2068 = vadd.xlane.f32.xlu0 %v2067
        %v2069 = vpop.xlane.xlu0 %2068
        %v2070 = vmul.f32 %v2069, %v2063
        %v2071 = vadd.f32 %v2070, 1e-05
        %v2072 = vrsqrt.pop %v2071
        %v2073 = vmul.f32 %v2065, %v2072
        %v2074 = vlaneseq
        %v2075 = vshrl.u32 %v2074, 7
        %v2076 = vsub.s32 5, %v2075
        %v2077 = vrot.slane %v508, %v2076
        %v2078 = vmul.f32 %v2073, %v2077
        %v2079 = vlaneseq
        %v2080 = vshrl.u32 %v2079, 7
        %v2081 = vsub.s32 6, %v2080
        %v2082 = vrot.slane %v508, %v2081
        %v2083 = vadd.f32 %v2078, %v2082
        %v2085 = vlaneseq
        %v2086 = vshrl.u32 %v2085, 7
        %v2087 = vsub.s32 0, %v2086
        %v2088 = vrot.slane %v507, %v2087
        %v2091 = vsel %vm516, %v2083, 0
        %2093 = vmatprep.subr.mxu0 0.0
        %2094 = vmatpush1.msra.mxu0 %v495
        %2095 = vmatprep.subr.mxu0 0.0
        %2096 = vmatpush1.msra.mxu0 %v496
        %2097 = vmatprep.subr.mxu0 0.0
        %2098 = vmatpush1.msra.mxu0 %v497
        %2099 = vmatprep.subr.mxu0 0.0
        %2100 = vmatpush1.msra.mxu0 %v498
        %2101 = vmatprep.subr.mxu0 0.0
        %2102 = vmatpush1.msra.mxu0 0.0
        %2103 = vmatprep.subr.mxu0 0.0
        %2104 = vmatpush1.msra.mxu0 0.0
        %2105 = vmatprep.subr.mxu0 0.0
        %2106 = vmatpush1.msra.mxu0 0.0
        %2107 = vmatprep.subr.mxu0 0.0
        %2108 = vmatpush1.msra.mxu0 0.0
        %2109 = vmatprep.subr.mxu0 0.0
        %2110 = vmatpush1.msra.mxu0 0.0
        %2111 = vmatprep.subr.mxu0 0.0
        %2112 = vmatpush1.msra.mxu0 0.0
        %2113 = vmatprep.subr.mxu0 0.0
        %2114 = vmatpush1.msra.mxu0 0.0
        %2115 = vmatprep.subr.mxu0 0.0
        %2116 = vmatpush1.msra.mxu0 0.0
        %2117 = vmatprep.subr.mxu0 0.0
        %2118 = vmatpush1.msra.mxu0 0.0
        %2119 = vmatprep.subr.mxu0 0.0
        %2120 = vmatpush1.msra.mxu0 0.0
        %2121 = vmatprep.subr.mxu0 0.0
        %2122 = vmatpush1.msra.mxu0 0.0
        %2123 = vmatprep.subr.mxu0 0.0
        %2124 = vmatpush1.msra.mxu0 0.0
        %2125 = vmatprep.subr.mxu0 0.0
        %2126 = vmatpush1.msra.mxu0 0.0
        %2127 = vmatprep.subr.mxu0 0.0
        %2128 = vmatpush1.msra.mxu0 0.0
        %2129 = vmatprep.subr.mxu0 0.0
        %2130 = vmatpush1.msra.mxu0 0.0
        %2131 = vmatprep.subr.mxu0 0.0
        %2132 = vmatpush1.msra.mxu0 0.0
        %2133 = vmatprep.subr.mxu0 0.0
        %2134 = vmatpush1.msra.mxu0 0.0
        %2135 = vmatprep.subr.mxu0 0.0
        %2136 = vmatpush1.msra.mxu0 0.0
        %2137 = vmatprep.subr.mxu0 0.0
        %2138 = vmatpush1.msra.mxu0 0.0
        %2139 = vmatprep.subr.mxu0 0.0
        %2140 = vmatpush1.msra.mxu0 0.0
        %2141 = vmatprep.subr.mxu0 0.0
        %2142 = vmatpush1.msra.mxu0 0.0
        %2143 = vmatprep.subr.mxu0 0.0
        %2144 = vmatpush1.msra.mxu0 0.0
        %2145 = vmatprep.subr.mxu0 0.0
        %2146 = vmatpush1.msra.mxu0 0.0
        %2147 = vmatprep.subr.mxu0 0.0
        %2148 = vmatpush1.msra.mxu0 0.0
        %2149 = vmatprep.subr.mxu0 0.0
        %2150 = vmatpush1.msra.mxu0 0.0
        %2151 = vmatprep.subr.mxu0 0.0
        %2152 = vmatpush1.msra.mxu0 0.0
        %2153 = vmatprep.subr.mxu0 0.0
        %2154 = vmatpush1.msra.mxu0 0.0
        %2155 = vmatprep.subr.mxu0 0.0
        %2156 = vmatpush1.msra.mxu0 0.0
        %2157 = vmatprep.mubr.f32.mxu0 0.0
        %2158 = vmatmul.mubr.f32.gmra.mrb[0].mxu0 %v2091
        %v2159 = vpop.f32.mrb[0].mxu0
        %v2160 = vadd.f32 %v2088, %v2159
        %v2161 = vpop.f32.mrb[0].mxu0
        %2162 = vdwg.mxu0
        %v2163 = vmul.f32 %v2160, 0.5
        %v2164 = vmul.f32 %v2160, 0.70710677
        %v2165 = verf.f32.pop %v2164
        %v2166 = vadd.f32 %v2165, 1.0
        %v2167 = vmul.f32 %v2163, %v2166
        %v2168 = vlaneseq
        %v2169 = vshrl.u32 %v2168, 7
        %v2170 = vsub.s32 4, %v2169
        %v2171 = vrot.slane %v508, %v2170
        %vm2172 = vcmask 523264
        %v2174 = vsel %vm2172, %v2167, 0
        %2176 = vmatprep.subr.mxu0 0.0
        %2177 = vmatpush1.msra.mxu0 %v499
        %2178 = vmatprep.subr.mxu0 0.0
        %2179 = vmatpush1.msra.mxu0 %v500
        %2180 = vmatprep.subr.mxu0 0.0
        %2181 = vmatpush1.msra.mxu0 %v501
        %2182 = vmatprep.subr.mxu0 0.0
        %2183 = vmatpush1.msra.mxu0 %v502
        %2184 = vmatprep.subr.mxu0 0.0
        %2185 = vmatpush1.msra.mxu0 %v503
        %2186 = vmatprep.subr.mxu0 0.0
        %2187 = vmatpush1.msra.mxu0 %v504
        %2188 = vmatprep.subr.mxu0 0.0
        %2189 = vmatpush1.msra.mxu0 %v505
        %2190 = vmatprep.subr.mxu0 0.0
        %2191 = vmatpush1.msra.mxu0 %v506
        %2192 = vmatprep.subr.mxu0 0.0
        %2193 = vmatpush1.msra.mxu0 0.0
        %2194 = vmatprep.subr.mxu0 0.0
        %2195 = vmatpush1.msra.mxu0 0.0
        %2196 = vmatprep.subr.mxu0 0.0
        %2197 = vmatpush1.msra.mxu0 0.0
        %2198 = vmatprep.subr.mxu0 0.0
        %2199 = vmatpush1.msra.mxu0 0.0
        %2200 = vmatprep.subr.mxu0 0.0
        %2201 = vmatpush1.msra.mxu0 0.0
        %2202 = vmatprep.subr.mxu0 0.0
        %2203 = vmatpush1.msra.mxu0 0.0
        %2204 = vmatprep.subr.mxu0 0.0
        %2205 = vmatpush1.msra.mxu0 0.0
        %2206 = vmatprep.subr.mxu0 0.0
        %2207 = vmatpush1.msra.mxu0 0.0
        %2208 = vmatprep.subr.mxu0 0.0
        %2209 = vmatpush1.msra.mxu0 0.0
        %2210 = vmatprep.subr.mxu0 0.0
        %2211 = vmatpush1.msra.mxu0 0.0
        %2212 = vmatprep.subr.mxu0 0.0
        %2213 = vmatpush1.msra.mxu0 0.0
        %2214 = vmatprep.subr.mxu0 0.0
        %2215 = vmatpush1.msra.mxu0 0.0
        %2216 = vmatprep.subr.mxu0 0.0
        %2217 = vmatpush1.msra.mxu0 0.0
        %2218 = vmatprep.subr.mxu0 0.0
        %2219 = vmatpush1.msra.mxu0 0.0
        %2220 = vmatprep.subr.mxu0 0.0
        %2221 = vmatpush1.msra.mxu0 0.0
        %2222 = vmatprep.subr.mxu0 0.0
        %2223 = vmatpush1.msra.mxu0 0.0
        %2224 = vmatprep.subr.mxu0 0.0
        %2225 = vmatpush1.msra.mxu0 0.0
        %2226 = vmatprep.subr.mxu0 0.0
        %2227 = vmatpush1.msra.mxu0 0.0
        %2228 = vmatprep.subr.mxu0 0.0
        %2229 = vmatpush1.msra.mxu0 0.0
        %2230 = vmatprep.subr.mxu0 0.0
        %2231 = vmatpush1.msra.mxu0 0.0
        %2232 = vmatprep.subr.mxu0 0.0
        %2233 = vmatpush1.msra.mxu0 0.0
        %2234 = vmatprep.subr.mxu0 0.0
        %2235 = vmatpush1.msra.mxu0 0.0
        %2236 = vmatprep.subr.mxu0 0.0
        %2237 = vmatpush1.msra.mxu0 0.0
        %2238 = vmatprep.subr.mxu0 0.0
        %2239 = vmatpush1.msra.mxu0 0.0
        %2240 = vmatprep.mubr.f32.mxu0 0.0
        %2241 = vmatmul.mubr.f32.gmra.mrb[0].mxu0 %v2174
        %v2242 = vpop.f32.mrb[0].mxu0
        %v2243 = vadd.f32 %v2171, %v2242
        %v2244 = vpop.f32.mrb[0].mxu0
        %2245 = vdwg.mxu0
        %v2246 = vadd.f32 %v2083, %v2243
        %v2247 = vsel %vm516, %v2246, 0.0
        %2248 = vadd.xlane.f32.xlu0 %v2247
        %v2249 = vpop.xlane.xlu0 %2248
        %v2250 = vmul.f32 %v2249, %v2063
        %v2251 = vsub.f32 %v2246, %v2250
        %v2252 = vmul.f32 %v2251, %v2251
        %v2253 = vsel %vm516, %v2252, 0.0
        %2254 = vadd.xlane.f32.xlu0 %v2253
        %v2255 = vpop.xlane.xlu0 %2254
        %v2256 = vmul.f32 %v2255, %v2063
        %v2257 = vadd.f32 %v2256, 1e-05
        %v2258 = vrsqrt.pop %v2257
        %v2259 = vmul.f32 %v2251, %v2258
        %v2260 = vlaneseq
        %v2261 = vshrl.u32 %v2260, 7
        %v2262 = vsub.s32 7, %v2261
        %v2263 = vrot.slane %v508, %v2262
        %v2264 = vmul.f32 %v2259, %v2263
        %v2265 = vlaneseq
        %v2266 = vshrl.u32 %v2265, 7
        %v2267 = vsub.s32 0, %v2266
        %v2268 = vrot.slane %v509, %v2267
        %v2269 = vadd.f32 %v2264, %v2268
        %2270 = vst.msk [vmem:[%s471] sm:$0xff] %vm516, %v2269
        %s2271 = sand.u32 %s264, 1
        %s2272 = scalar_lea.sflag [#allocation4], %s2271
        %s2273 = sand.u32 %s264, 1
        %s2274 = smul.addr %s2273, 8
        %s2275 = scalar_lea.vmem [#allocation10], %s2274
        %s2276 = sand.u32 %s290, 1
        %s2277 = scalar_lea.sflag [#allocation12], %s2276
        %s2278 = sand.u32 %s290, 1
        %s2279 = smul.addr %s2278, 8
        %s2280 = scalar_lea.vmem [#allocation11], %s2279
        // Predicated region
        $region77: #{tpu_custom_call.1} parent=59 // pred_check
          %p2281 = pneg %p274
        $region78: #{tpu_custom_call.1} parent=59 // pred_check_branch
          %2283 = sbr.rel (%p2281) target = $region80
        $region79: #{tpu_custom_call.1} parent=59 // pred_region
          %s2285 = ssub.s32 128, 128
          %2286 = vsyncadd %s2272, %s2285
          %s2287 = smul.addr %s36, 128
          %s2288 = scalar_lea.hbm %s10, %s2287
          %s2290 = sshll.u32 %s2275, 4
          %s2291 = int_to_ptr.vmem [resolvable:$true] %s2290
          %2293 = dma.vmem_to_hbm [thread:$0]  %s2291, 128, %s2288, %s2272
        $region80: #{tpu_custom_call.1} parent=59 // pred_fallthru
          _
        // Predicated region
        $region81: #{tpu_custom_call.1} parent=59 // pred_check
          %p2294 = pneg %p300
        $region82: #{tpu_custom_call.1} parent=59 // pred_check_branch
          %2296 = sbr.rel (%p2294) target = $region84
        $region83: #{tpu_custom_call.1} parent=59 // pred_region
          %s2298 = ssub.s32 128, 128
          %2299 = vsyncadd %s2277, %s2298
          %s2300 = smul.addr %s36, 128
          %s2301 = scalar_lea.hbm %s11, %s2300
          %s2303 = sshll.u32 %s2280, 4
          %s2304 = int_to_ptr.vmem [resolvable:$true] %s2303
          %2306 = dma.vmem_to_hbm [thread:$0]  %s2304, 128, %s2301, %s2277
        $region84: #{tpu_custom_call.1} parent=59 // pred_fallthru
          _
      $region60: #{tpu_custom_call.1} parent=5 // pred_fallthru
        _
      %p2307 = scmp.le.s32.totalorder 2, %s31
      // Predicated region
      $region85: #{tpu_custom_call.1} parent=5 // pred_check
        %p2308 = pneg %p2307
      $region86: #{tpu_custom_call.1} parent=5 // pred_check_branch
        %2310 = sbr.rel (%p2308) target = $region88
      $region87: #{tpu_custom_call.1} parent=5 // pred_region
        %s2311 = ssub.s32 %s31, 2
        // Predicated region
        $region89: #{tpu_custom_call.1} parent=87 // pred_check
          %p2312 = pneg %p280
        $region90: #{tpu_custom_call.1} parent=87 // pred_check_branch
          %2314 = sbr.rel (%p2312) target = $region92
        $region91: #{tpu_custom_call.1} parent=87 // pred_region
          %s2315 = sand.u32 %s265, 1
          %s2316 = scalar_lea.sflag [#allocation4], %s2315
          %s2317 = sand.u32 %s265, 1
          %s2318 = smul.addr %s2317, 8
          %s2319 = scalar_lea.vmem [#allocation10], %s2318
          %2320 = dma.done %s2316, 128
        $region92: #{tpu_custom_call.1} parent=87 // pred_fallthru
          _
        // Predicated region
        $region93: #{tpu_custom_call.1} parent=87 // pred_check
          %p2321 = pneg %p306
        $region94: #{tpu_custom_call.1} parent=87 // pred_check_branch
          %2323 = sbr.rel (%p2321) target = $region96
        $region95: #{tpu_custom_call.1} parent=87 // pred_region
          %s2324 = sand.u32 %s291, 1
          %s2325 = scalar_lea.sflag [#allocation12], %s2324
          %s2326 = sand.u32 %s291, 1
          %s2327 = smul.addr %s2326, 8
          %s2328 = scalar_lea.vmem [#allocation11], %s2327
          %2329 = dma.done %s2325, 128
        $region96: #{tpu_custom_call.1} parent=87 // pred_fallthru
          _
      $region88: #{tpu_custom_call.1} parent=5 // pred_fallthru
        _
    $region6: #{tpu_custom_call.1} parent=1 // loop_footer
      %s35 = sadd.s32 1, %s31
    $region7: #{tpu_custom_call.1} parent=1 // loop_footer_branch
      %30 = sbr.rel target = $region3
    $region8: #{tpu_custom_call.1} parent=1 // loop_exit
      _
    %2330 = vsyncpa [#allocation3], 1
    %s2331 = scalar_lea.sflag [#allocation3], 1
    %2332 = vsyncpa %s2331, 1
    %2333 = vsyncpa [#allocation6], 1
    %s2334 = scalar_lea.sflag [#allocation6], 1
    %2335 = vsyncpa %s2334, 1
    %2336 = vsyncpa [#allocation9], 1
    %2337 = vsyncpa [#allocation4], 1
    %s2338 = scalar_lea.sflag [#allocation4], 1
    %2339 = vsyncpa %s2338, 1
    %2340 = vsyncpa [#allocation12], 1
    %s2341 = scalar_lea.sflag [#allocation12], 1
    %2342 = vsyncpa %s2341, 1

// kernel: tpu_custom_call.1
$region0: #{tpu_custom_call.1}
  #allocation0 [shape = 'u32[]', space=smem, size = 0x4, offset = 0x4, fixed_abs, tag = 'smem constant byte address 0x4 - core index']
  #allocation1 [shape = 'u32[144,128]{1,0:T(1,128)}', space=vmem, size = 0x12000, scoped, tag = 'internal scratch']
  %s0 = inlined_call_operand.hbm [shape: f32[2,8,32], index: 0, kind: input, shape index: {}]
  %s1 = inlined_call_operand.hbm [shape: f32[2,8,32], index: 1, kind: input, shape index: {}]
  %s2 = inlined_call_operand.vmem [shape: f32[32,32], index: 2, kind: input, shape index: {}]
  %s3 = inlined_call_operand.vmem [shape: f32[32,32], index: 3, kind: input, shape index: {}]
  %s4 = inlined_call_operand.vmem [shape: f32[32,32], index: 4, kind: input, shape index: {}]
  %s5 = inlined_call_operand.hbm [shape: f32[32,32], index: 5, kind: input, shape index: {}]
  %s6 = inlined_call_operand.hbm [shape: f32[32,64], index: 6, kind: input, shape index: {}]
  %s7 = inlined_call_operand.vmem [shape: f32[1,64], index: 7, kind: input, shape index: {}]
  %s8 = inlined_call_operand.vmem [shape: f32[64,32], index: 8, kind: input, shape index: {}]
  %s9 = inlined_call_operand.vmem [shape: f32[9,32], index: 9, kind: input, shape index: {}]
  %s10 = inlined_call_operand.hbm [shape: f32[2,8,32], index: 10, kind: output, shape index: {0}]
  %s11 = inlined_call_operand.hbm [shape: f32[2,8,8], index: 11, kind: output, shape index: {1}]
  %12 = xla_tuple %s10, %s11
  %s13 = sld [smem:[#allocation0]]
  $region97: #{tpu_custom_call.1} parent=0
    _
  %s15 = ssub.s32 1, %s13
  %s16 = scalar_select 0, %s15, %s13
  $region1: #{tpu_custom_call.1} parent=0
    #allocation2 [shape = 'u8[8192]{0}', space=vmem, size = 0x2000, scoped, tag = 'input window, operand 0']
    #allocation3 [shape = 's32[2]{0}', space=sflag, size = 0x8, scoped, tag = 'scoped memory for tpu_custom_call.1']
    #allocation4 [shape = 's32[2]{0}', space=sflag, size = 0x8, scoped, tag = 'scoped memory for tpu_custom_call.1']
    #allocation5 [shape = 'u8[8192]{0}', space=vmem, size = 0x2000, scoped, tag = 'input window, operand 1']
    #allocation6 [shape = 's32[2]{0}', space=sflag, size = 0x8, scoped, tag = 'scoped memory for tpu_custom_call.1']
    #allocation7 [shape = 'u8[16384]{0}', space=vmem, size = 0x4000, scoped, tag = 'input window, operand 5, single buffered']
    #allocation8 [shape = 'u8[16384]{0}', space=vmem, size = 0x4000, scoped, tag = 'input window, operand 6, single buffered']
    #allocation9 [shape = 's32[1]{0}', space=sflag, size = 0x4, scoped, tag = 'scoped memory for tpu_custom_call.1']
    #allocation10 [shape = 'u8[8192]{0}', space=vmem, size = 0x2000, scoped, tag = 'output window, operand 0']
    #allocation11 [shape = 'u8[8192]{0}', space=vmem, size = 0x2000, scoped, tag = 'output window, operand 1']
    #allocation12 [shape = 's32[2]{0}', space=sflag, size = 0x8, scoped, tag = 'scoped memory for tpu_custom_call.1']
    %17 = vsyncpa [#allocation3], 0
    %s18 = scalar_lea.sflag [#allocation3], 1
    %19 = vsyncpa %s18, 0
    %20 = vsyncpa [#allocation6], 0
    %s21 = scalar_lea.sflag [#allocation6], 1
    %22 = vsyncpa %s21, 0
    %23 = vsyncpa [#allocation9], 0
    %24 = vsyncpa [#allocation4], 0
    %s25 = scalar_lea.sflag [#allocation4], 1
    %26 = vsyncpa %s25, 0
    %27 = vsyncpa [#allocation12], 0
    %s28 = scalar_lea.sflag [#allocation12], 1
    %29 = vsyncpa %s28, 0
    loop: start=0, step=1, limit=4
    $region2: #{tpu_custom_call.1} parent=1 // loop_pre_header
      _
    $region3: #{tpu_custom_call.1} parent=1 // loop_header
      %s31 = sphi 0, %s35
      %p32 = scmp.ge.s32.totalorder %s31, 4
      %s41 = sphi 0, %s43
      %s44 = sphi 0, %s41
      %s45 = sphi 0, %s44
      %s61 = sphi 0, %s45
      %s67 = sphi 0, %s69
      %s70 = sphi 0, %s67
      %s71 = sphi 0, %s70
      %s87 = sphi 0, %s71
      %s91 = sphi 0, %s91
      %s93 = sphi 0, %s91
      %s94 = sphi 0, %s93
      %s108 = sphi 0, %s94
      %s112 = sphi 0, %s112
      %s114 = sphi 0, %s112
      %s115 = sphi 0, %s114
      %s129 = sphi 0, %s115
      %s133 = sphi 0, %s133
      %s135 = sphi 0, %s133
      %s136 = sphi 0, %s135
      %s150 = sphi 0, %s136
      %s154 = sphi 0, %s154
      %s156 = sphi 0, %s154
      %s157 = sphi 0, %s156
      %s171 = sphi 0, %s157
      %s175 = sphi 0, %s175
      %s177 = sphi 0, %s175
      %s178 = sphi 0, %s177
      %s192 = sphi 0, %s178
      %s196 = sphi 0, %s196
      %s198 = sphi 0, %s196
      %s199 = sphi 0, %s198
      %s213 = sphi 0, %s199
      %s217 = sphi 0, %s217
      %s219 = sphi 0, %s217
      %s220 = sphi 0, %s219
      %s234 = sphi 0, %s220
      %s238 = sphi 0, %s238
      %s240 = sphi 0, %s238
      %s241 = sphi 0, %s240
      %s255 = sphi 0, %s241
      %s261 = sphi 0, %s263
      %s264 = sphi 0, %s261
      %s265 = sphi 0, %s264
      %s281 = sphi 0, %s265
      %s287 = sphi 0, %s289
      %s290 = sphi 0, %s287
      %s291 = sphi 0, %s290
      %s307 = sphi 0, %s291
    $region4: #{tpu_custom_call.1} parent=1 // loop_header_branch
      %34 = sbr.rel (%p32) target = $region8
    $region5: #{tpu_custom_call.1} parent=1 // loop_body
      %s36 = ssub.s32 %s31, 1
      %s37 = ssub.s32 %s31, 2
      %s38 = sadd.s32 %s31, 1
      %s39 = ssub.s32 %s31, %s38
      %p40 = scmp.eq.s32.totalorder %s39, 0
      %s42 = sadd.s32 %s41, 1
      %s43 = scalar_select %p40, %s41, %s42
      %p46 = pneg %p40
      %p47 = scmp.eq.s32.totalorder %s31, 1
      %p48 = por %p46, %p47
      %p49 = scmp.ne.s32.totalorder %s41, %s44
      %p50 = scmp.eq.s32.totalorder %s31, 0
      %p51 = por %p49, %p50
      %p52 = scmp.ne.s32.totalorder %s41, %s44
      %p53 = scmp.eq.s32.totalorder %s36, 1
      %p54 = por %p52, %p53
      %p55 = scmp.ne.s32.totalorder %s44, %s45
      %p56 = scmp.eq.s32.totalorder %s36, 0
      %p57 = por %p55, %p56
      %p58 = scmp.ne.s32.totalorder %s44, %s45
      %p59 = scmp.eq.s32.totalorder %s37, 1
      %p60 = por %p58, %p59
      %p62 = scmp.ne.s32.totalorder %s45, %s61
      %p63 = scmp.eq.s32.totalorder %s37, 0
      %p64 = por %p62, %p63
      %s65 = ssub.s32 %s31, %s38
      %p66 = scmp.eq.s32.totalorder %s65, 0
      %s68 = sadd.s32 %s67, 1
      %s69 = scalar_select %p66, %s67, %s68
      %p72 = pneg %p66
      %p73 = scmp.eq.s32.totalorder %s31, 1
      %p74 = por %p72, %p73
      %p75 = scmp.ne.s32.totalorder %s67, %s70
      %p76 = scmp.eq.s32.totalorder %s31, 0
      %p77 = por %p75, %p76
      %p78 = scmp.ne.s32.totalorder %s67, %s70
      %p79 = scmp.eq.s32.totalorder %s36, 1
      %p80 = por %p78, %p79
      %p81 = scmp.ne.s32.totalorder %s70, %s71
      %p82 = scmp.eq.s32.totalorder %s36, 0
      %p83 = por %p81, %p82
      %p84 = scmp.ne.s32.totalorder %s70, %s71
      %p85 = scmp.eq.s32.totalorder %s37, 1
      %p86 = por %p84, %p85
      %p88 = scmp.ne.s32.totalorder %s71, %s87
      %p89 = scmp.eq.s32.totalorder %s37, 0
      %p90 = por %p88, %p89
      %s92 = sadd.s32 %s91, 1
      %p95 = scmp.eq.s32.totalorder %s31, 1
      %p96 = scmp.ne.s32.totalorder %s91, %s93
      %p97 = scmp.eq.s32.totalorder %s31, 0
      %p98 = por %p96, %p97
      %p99 = scmp.ne.s32.totalorder %s91, %s93
      %p100 = scmp.eq.s32.totalorder %s36, 1
      %p101 = por %p99, %p100
      %p102 = scmp.ne.s32.totalorder %s93, %s94
      %p103 = scmp.eq.s32.totalorder %s36, 0
      %p104 = por %p102, %p103
      %p105 = scmp.ne.s32.totalorder %s93, %s94
      %p106 = scmp.eq.s32.totalorder %s37, 1
      %p107 = por %p105, %p106
      %p109 = scmp.ne.s32.totalorder %s94, %s108
      %p110 = scmp.eq.s32.totalorder %s37, 0
      %p111 = por %p109, %p110
      %s113 = sadd.s32 %s112, 1
      %p116 = scmp.eq.s32.totalorder %s31, 1
      %p117 = scmp.ne.s32.totalorder %s112, %s114
      %p118 = scmp.eq.s32.totalorder %s31, 0
      %p119 = por %p117, %p118
      %p120 = scmp.ne.s32.totalorder %s112, %s114
      %p121 = scmp.eq.s32.totalorder %s36, 1
      %p122 = por %p120, %p121
      %p123 = scmp.ne.s32.totalorder %s114, %s115
      %p124 = scmp.eq.s32.totalorder %s36, 0
      %p125 = por %p123, %p124
      %p126 = scmp.ne.s32.totalorder %s114, %s115
      %p127 = scmp.eq.s32.totalorder %s37, 1
      %p128 = por %p126, %p127
      %p130 = scmp.ne.s32.totalorder %s115, %s129
      %p131 = scmp.eq.s32.totalorder %s37, 0
      %p132 = por %p130, %p131
      %s134 = sadd.s32 %s133, 1
      %p137 = scmp.eq.s32.totalorder %s31, 1
      %p138 = scmp.ne.s32.totalorder %s133, %s135
      %p139 = scmp.eq.s32.totalorder %s31, 0
      %p140 = por %p138, %p139
      %p141 = scmp.ne.s32.totalorder %s133, %s135
      %p142 = scmp.eq.s32.totalorder %s36, 1
      %p143 = por %p141, %p142
      %p144 = scmp.ne.s32.totalorder %s135, %s136
      %p145 = scmp.eq.s32.totalorder %s36, 0
      %p146 = por %p144, %p145
      %p147 = scmp.ne.s32.totalorder %s135, %s136
      %p148 = scmp.eq.s32.totalorder %s37, 1
      %p149 = por %p147, %p148
      %p151 = scmp.ne.s32.totalorder %s136, %s150
      %p152 = scmp.eq.s32.totalorder %s37, 0
      %p153 = por %p151, %p152
      %s155 = sadd.s32 %s154, 1
      %p158 = scmp.eq.s32.totalorder %s31, 1
      %p159 = scmp.ne.s32.totalorder %s154, %s156
      %p160 = scmp.eq.s32.totalorder %s31, 0
      %p161 = por %p159, %p160
      %p162 = scmp.ne.s32.totalorder %s154, %s156
      %p163 = scmp.eq.s32.totalorder %s36, 1
      %p164 = por %p162, %p163
      %p165 = scmp.ne.s32.totalorder %s156, %s157
      %p166 = scmp.eq.s32.totalorder %s36, 0
      %p167 = por %p165, %p166
      %p168 = scmp.ne.s32.totalorder %s156, %s157
      %p169 = scmp.eq.s32.totalorder %s37, 1
      %p170 = por %p168, %p169
      %p172 = scmp.ne.s32.totalorder %s157, %s171
      %p173 = scmp.eq.s32.totalorder %s37, 0
      %p174 = por %p172, %p173
      %s176 = sadd.s32 %s175, 1
      %p179 = scmp.eq.s32.totalorder %s31, 1
      %p180 = scmp.ne.s32.totalorder %s175, %s177
      %p181 = scmp.eq.s32.totalorder %s31, 0
      %p182 = por %p180, %p181
      %p183 = scmp.ne.s32.totalorder %s175, %s177
      %p184 = scmp.eq.s32.totalorder %s36, 1
      %p185 = por %p183, %p184
      %p186 = scmp.ne.s32.totalorder %s177, %s178
      %p187 = scmp.eq.s32.totalorder %s36, 0
      %p188 = por %p186, %p187
      %p189 = scmp.ne.s32.totalorder %s177, %s178
      %p190 = scmp.eq.s32.totalorder %s37, 1
      %p191 = por %p189, %p190
      %p193 = scmp.ne.s32.totalorder %s178, %s192
      %p194 = scmp.eq.s32.totalorder %s37, 0
      %p195 = por %p193, %p194
      %s197 = sadd.s32 %s196, 1
      %p200 = scmp.eq.s32.totalorder %s31, 1
      %p201 = scmp.ne.s32.totalorder %s196, %s198
      %p202 = scmp.eq.s32.totalorder %s31, 0
      %p203 = por %p201, %p202
      %p204 = scmp.ne.s32.totalorder %s196, %s198
      %p205 = scmp.eq.s32.totalorder %s36, 1
      %p206 = por %p204, %p205
      %p207 = scmp.ne.s32.totalorder %s198, %s199
      %p208 = scmp.eq.s32.totalorder %s36, 0
      %p209 = por %p207, %p208
      %p210 = scmp.ne.s32.totalorder %s198, %s199
      %p211 = scmp.eq.s32.totalorder %s37, 1
      %p212 = por %p210, %p211
      %p214 = scmp.ne.s32.totalorder %s199, %s213
      %p215 = scmp.eq.s32.totalorder %s37, 0
      %p216 = por %p214, %p215
      %s218 = sadd.s32 %s217, 1
      %p221 = scmp.eq.s32.totalorder %s31, 1
      %p222 = scmp.ne.s32.totalorder %s217, %s219
      %p223 = scmp.eq.s32.totalorder %s31, 0
      %p224 = por %p222, %p223
      %p225 = scmp.ne.s32.totalorder %s217, %s219
      %p226 = scmp.eq.s32.totalorder %s36, 1
      %p227 = por %p225, %p226
      %p228 = scmp.ne.s32.totalorder %s219, %s220
      %p229 = scmp.eq.s32.totalorder %s36, 0
      %p230 = por %p228, %p229
      %p231 = scmp.ne.s32.totalorder %s219, %s220
      %p232 = scmp.eq.s32.totalorder %s37, 1
      %p233 = por %p231, %p232
      %p235 = scmp.ne.s32.totalorder %s220, %s234
      %p236 = scmp.eq.s32.totalorder %s37, 0
      %p237 = por %p235, %p236
      %s239 = sadd.s32 %s238, 1
      %p242 = scmp.eq.s32.totalorder %s31, 1
      %p243 = scmp.ne.s32.totalorder %s238, %s240
      %p244 = scmp.eq.s32.totalorder %s31, 0
      %p245 = por %p243, %p244
      %p246 = scmp.ne.s32.totalorder %s238, %s240
      %p247 = scmp.eq.s32.totalorder %s36, 1
      %p248 = por %p246, %p247
      %p249 = scmp.ne.s32.totalorder %s240, %s241
      %p250 = scmp.eq.s32.totalorder %s36, 0
      %p251 = por %p249, %p250
      %p252 = scmp.ne.s32.totalorder %s240, %s241
      %p253 = scmp.eq.s32.totalorder %s37, 1
      %p254 = por %p252, %p253
      %p256 = scmp.ne.s32.totalorder %s241, %s255
      %p257 = scmp.eq.s32.totalorder %s37, 0
      %p258 = por %p256, %p257
      %s259 = ssub.s32 %s31, %s38
      %p260 = scmp.eq.s32.totalorder %s259, 0
      %s262 = sadd.s32 %s261, 1
      %s263 = scalar_select %p260, %s261, %s262
      %p266 = pneg %p260
      %p267 = scmp.eq.s32.totalorder %s31, 1
      %p268 = por %p266, %p267
      %p269 = scmp.ne.s32.totalorder %s261, %s264
      %p270 = scmp.eq.s32.totalorder %s31, 0
      %p271 = por %p269, %p270
      %p272 = scmp.ne.s32.totalorder %s261, %s264
      %p273 = scmp.eq.s32.totalorder %s36, 1
      %p274 = por %p272, %p273
      %p275 = scmp.ne.s32.totalorder %s264, %s265
      %p276 = scmp.eq.s32.totalorder %s36, 0
      %p277 = por %p275, %p276
      %p278 = scmp.ne.s32.totalorder %s264, %s265
      %p279 = scmp.eq.s32.totalorder %s37, 1
      %p280 = por %p278, %p279
      %p282 = scmp.ne.s32.totalorder %s265, %s281
      %p283 = scmp.eq.s32.totalorder %s37, 0
      %p284 = por %p282, %p283
      %s285 = ssub.s32 %s31, %s38
      %p286 = scmp.eq.s32.totalorder %s285, 0
      %s288 = sadd.s32 %s287, 1
      %s289 = scalar_select %p286, %s287, %s288
      %p292 = pneg %p286
      %p293 = scmp.eq.s32.totalorder %s31, 1
      %p294 = por %p292, %p293
      %p295 = scmp.ne.s32.totalorder %s287, %s290
      %p296 = scmp.eq.s32.totalorder %s31, 0
      %p297 = por %p295, %p296
      %p298 = scmp.ne.s32.totalorder %s287, %s290
      %p299 = scmp.eq.s32.totalorder %s36, 1
      %p300 = por %p298, %p299
      %p301 = scmp.ne.s32.totalorder %s290, %s291
      %p302 = scmp.eq.s32.totalorder %s36, 0
      %p303 = por %p301, %p302
      %p304 = scmp.ne.s32.totalorder %s290, %s291
      %p305 = scmp.eq.s32.totalorder %s37, 1
      %p306 = por %p304, %p305
      %p308 = scmp.ne.s32.totalorder %s291, %s307
      %p309 = scmp.eq.s32.totalorder %s37, 0
      %p310 = por %p308, %p309
      %p311 = scmp.le.s32.totalorder 1, %s31
      %p312 = scmp.lt.s32.totalorder %s31, 3
      %p313 = pnand %p311, %p312
      %p314 = pneg %p313
      // Predicated region
      $region9: #{tpu_custom_call.1} parent=5 // pred_check
        _
      $region10: #{tpu_custom_call.1} parent=5 // pred_check_branch
        %316 = sbr.rel (%p313) target = $region12
      $region11: #{tpu_custom_call.1} parent=5 // pred_region
        %s317 = ssub.s32 %s31, 1
        // Predicated region
        $region13: #{tpu_custom_call.1} parent=11 // pred_check
          %p318 = pneg %p104
        $region14: #{tpu_custom_call.1} parent=11 // pred_check_branch
          %320 = sbr.rel (%p318) target = $region16
        $region15: #{tpu_custom_call.1} parent=11 // pred_region
          _
        $region16: #{tpu_custom_call.1} parent=11 // pred_fallthru
          _
        // Predicated region
        $region17: #{tpu_custom_call.1} parent=11 // pred_check
          %p321 = pneg %p125
        $region18: #{tpu_custom_call.1} parent=11 // pred_check_branch
          %323 = sbr.rel (%p321) target = $region20
        $region19: #{tpu_custom_call.1} parent=11 // pred_region
          _
        $region20: #{tpu_custom_call.1} parent=11 // pred_fallthru
          _
        // Predicated region
        $region21: #{tpu_custom_call.1} parent=11 // pred_check
          %p324 = pneg %p146
        $region22: #{tpu_custom_call.1} parent=11 // pred_check_branch
          %326 = sbr.rel (%p324) target = $region24
        $region23: #{tpu_custom_call.1} parent=11 // pred_region
          _
        $region24: #{tpu_custom_call.1} parent=11 // pred_fallthru
          _
        // Predicated region
        $region25: #{tpu_custom_call.1} parent=11 // pred_check
          %p327 = pneg %p167
        $region26: #{tpu_custom_call.1} parent=11 // pred_check_branch
          %329 = sbr.rel (%p327) target = $region28
        $region27: #{tpu_custom_call.1} parent=11 // pred_region
          %s331 = ssub.s32 512, 512
          %332 = vsyncadd [#allocation6], %s331
          %s333 = sshll.u32 [#allocation7], 4
          %s334 = int_to_ptr.vmem [resolvable:$true] %s333
          %339 = dma.hbm_to_vmem [thread:$0]  %s5, 512, %s334, [#allocation6], 128, 128, 8
        $region28: #{tpu_custom_call.1} parent=11 // pred_fallthru
          _
        // Predicated region
        $region29: #{tpu_custom_call.1} parent=11 // pred_check
          %p340 = pneg %p188
        $region30: #{tpu_custom_call.1} parent=11 // pred_check_branch
          %342 = sbr.rel (%p340) target = $region32
        $region31: #{tpu_custom_call.1} parent=11 // pred_region
          %s344 = ssub.s32 512, 512
          %345 = vsyncadd [#allocation9], %s344
          %s346 = sshll.u32 [#allocation8], 4
          %s347 = int_to_ptr.vmem [resolvable:$true] %s346
          %352 = dma.hbm_to_vmem [thread:$0]  %s6, 512, %s347, [#allocation9], 128, 128, 8
        $region32: #{tpu_custom_call.1} parent=11 // pred_fallthru
          _
        // Predicated region
        $region33: #{tpu_custom_call.1} parent=11 // pred_check
          %p353 = pneg %p209
        $region34: #{tpu_custom_call.1} parent=11 // pred_check_branch
          %355 = sbr.rel (%p353) target = $region36
        $region35: #{tpu_custom_call.1} parent=11 // pred_region
          _
        $region36: #{tpu_custom_call.1} parent=11 // pred_fallthru
          _
        // Predicated region
        $region37: #{tpu_custom_call.1} parent=11 // pred_check
          %p356 = pneg %p230
        $region38: #{tpu_custom_call.1} parent=11 // pred_check_branch
          %358 = sbr.rel (%p356) target = $region40
        $region39: #{tpu_custom_call.1} parent=11 // pred_region
          _
        $region40: #{tpu_custom_call.1} parent=11 // pred_fallthru
          _
        // Predicated region
        $region41: #{tpu_custom_call.1} parent=11 // pred_check
          %p359 = pneg %p251
        $region42: #{tpu_custom_call.1} parent=11 // pred_check_branch
          %361 = sbr.rel (%p359) target = $region44
        $region43: #{tpu_custom_call.1} parent=11 // pred_region
          _
        $region44: #{tpu_custom_call.1} parent=11 // pred_fallthru
          _
      $region12: #{tpu_custom_call.1} parent=5 // pred_fallthru
        _
      %p362 = scmp.lt.s32.totalorder %s31, 2
      // Predicated region
      $region45: #{tpu_custom_call.1} parent=5 // pred_check
        %p363 = pneg %p362
      $region46: #{tpu_custom_call.1} parent=5 // pred_check_branch
        %365 = sbr.rel (%p363) target = $region48
      $region47: #{tpu_custom_call.1} parent=5 // pred_region
        // Predicated region
        $region49: #{tpu_custom_call.1} parent=47 // pred_check
          %p366 = pneg %p51
        $region50: #{tpu_custom_call.1} parent=47 // pred_check_branch
          %368 = sbr.rel (%p366) target = $region52
        $region51: #{tpu_custom_call.1} parent=47 // pred_region
          %s369 = sand.u32 %s41, 1
          %s370 = scalar_lea.sflag [#allocation3], %s369
          %s371 = sand.u32 %s41, 1
          %s372 = smul.addr %s371, 8
          %s373 = scalar_lea.vmem [#allocation2], %s372
          %s375 = ssub.s32 128, 128
          %376 = vsyncadd %s370, %s375
          %s377 = smul.addr %s31, 128
          %s378 = scalar_lea.hbm %s0, %s377
          %s380 = sshll.u32 %s373, 4
          %s381 = int_to_ptr.vmem [resolvable:$true] %s380
          %383 = dma.hbm_to_vmem [thread:$0]  %s378, 128, %s381, %s370
        $region52: #{tpu_custom_call.1} parent=47 // pred_fallthru
          _
        // Predicated region
        $region53: #{tpu_custom_call.1} parent=47 // pred_check
          %p384 = pneg %p77
        $region54: #{tpu_custom_call.1} parent=47 // pred_check_branch
          %386 = sbr.rel (%p384) target = $region56
        $region55: #{tpu_custom_call.1} parent=47 // pred_region
          %s387 = sand.u32 %s31, 1
          %s388 = scalar_lea.sflag [#allocation6], %s387
          %s389 = sand.u32 %s67, 1
          %s390 = smul.addr %s389, 8
          %s391 = scalar_lea.vmem [#allocation5], %s390
          %s393 = ssub.s32 128, 128
          %394 = vsyncadd %s388, %s393
          %s395 = smul.addr %s31, 128
          %s396 = scalar_lea.hbm %s1, %s395
          %s398 = sshll.u32 %s391, 4
          %s399 = int_to_ptr.vmem [resolvable:$true] %s398
          %401 = dma.hbm_to_vmem [thread:$0]  %s396, 128, %s399, %s388
        $region56: #{tpu_custom_call.1} parent=47 // pred_fallthru
          _
      $region48: #{tpu_custom_call.1} parent=5 // pred_fallthru
        _
      %p402 = scmp.le.s32.totalorder 1, %s31
      %p403 = scmp.lt.s32.totalorder %s31, 3
      %p404 = pnand %p402, %p403
      %p405 = pneg %p404
      // Predicated region
      $region57: #{tpu_custom_call.1} parent=5 // pred_check
        _
      $region58: #{tpu_custom_call.1} parent=5 // pred_check_branch
        %407 = sbr.rel (%p404) target = $region60
      $region59: #{tpu_custom_call.1} parent=5 // pred_region
        %s408 = ssub.s32 %s31, 1
        %s409 = sand.u32 %s44, 1
        %s410 = scalar_lea.sflag [#allocation3], %s409
        %s411 = sand.u32 %s44, 1
        %s412 = smul.addr %s411, 8
        %s413 = scalar_lea.vmem [#allocation2], %s412
        // Predicated region
        $region61: #{tpu_custom_call.1} parent=59 // pred_check
          %p414 = pneg %p57
        $region62: #{tpu_custom_call.1} parent=59 // pred_check_branch
          %416 = sbr.rel (%p414) target = $region64
        $region63: #{tpu_custom_call.1} parent=59 // pred_region
          %417 = dma.done %s410, 128
        $region64: #{tpu_custom_call.1} parent=59 // pred_fallthru
          _
        %s418 = sand.u32 %s36, 1
        %s419 = scalar_lea.sflag [#allocation6], %s418
        %s420 = sand.u32 %s70, 1
        %s421 = smul.addr %s420, 8
        %s422 = scalar_lea.vmem [#allocation5], %s421
        // Predicated region
        $region65: #{tpu_custom_call.1} parent=59 // pred_check
          %p423 = pneg %p83
        $region66: #{tpu_custom_call.1} parent=59 // pred_check_branch
          %425 = sbr.rel (%p423) target = $region68
        $region67: #{tpu_custom_call.1} parent=59 // pred_region
          %426 = dma.done %s419, 128
        $region68: #{tpu_custom_call.1} parent=59 // pred_fallthru
          _
        // Predicated region
        $region69: #{tpu_custom_call.1} parent=59 // pred_check
          %p427 = pneg %p167
        $region70: #{tpu_custom_call.1} parent=59 // pred_check_branch
          %429 = sbr.rel (%p427) target = $region72
        $region71: #{tpu_custom_call.1} parent=59 // pred_region
          %430 = dma.done [#allocation6], 512
        $region72: #{tpu_custom_call.1} parent=59 // pred_fallthru
          _
        // Predicated region
        $region73: #{tpu_custom_call.1} parent=59 // pred_check
          %p431 = pneg %p188
        $region74: #{tpu_custom_call.1} parent=59 // pred_check_branch
          %433 = sbr.rel (%p431) target = $region76
        $region75: #{tpu_custom_call.1} parent=59 // pred_region
          %434 = dma.done [#allocation9], 512
        $region76: #{tpu_custom_call.1} parent=59 // pred_fallthru
          _
        %s435 = sand.u32 %s44, 1
        %s436 = scalar_lea.sflag [#allocation3], %s435
        %s437 = sand.u32 %s44, 1
        %s438 = smul.addr %s437, 8
        %s439 = scalar_lea.vmem [#allocation2], %s438
        %p440 = pneg %p57
        %p441 = pneg %p54
        %s442 = sand.u32 %s36, 1
        %s443 = scalar_lea.sflag [#allocation6], %s442
        %s444 = sand.u32 %s70, 1
        %s445 = smul.addr %s444, 8
        %s446 = scalar_lea.vmem [#allocation5], %s445
        %p447 = pneg %p83
        %p448 = pneg %p80
        %p449 = pneg %p104
        %p450 = pneg %p101
        %p451 = pneg %p125
        %p452 = pneg %p122
        %p453 = pneg %p146
        %p454 = pneg %p143
        %p455 = pneg %p167
        %p456 = pneg %p164
        %p457 = pneg %p188
        %p458 = pneg %p185
        %p459 = pneg %p209
        %p460 = pneg %p206
        %p461 = pneg %p230
        %p462 = pneg %p227
        %p463 = pneg %p251
        %p464 = pneg %p248
        %p465 = pneg %p277
        %p466 = pneg %p274
        %s467 = sand.u32 %s264, 1
        %s468 = scalar_lea.sflag [#allocation4], %s467
        %s469 = sand.u32 %s264, 1
        %s470 = smul.addr %s469, 8
        %s471 = scalar_lea.vmem [#allocation10], %s470
        %p472 = pneg %p303
        %p473 = pneg %p300
        %s474 = sand.u32 %s290, 1
        %s475 = scalar_lea.sflag [#allocation12], %s474
        %s476 = sand.u32 %s290, 1
        %s477 = smul.addr %s476, 8
        %s478 = scalar_lea.vmem [#allocation11], %s477
        %v479 = vld [vmem:[%s2] sm:$0xff]
        %v480 = vld [vmem:[%s2 + $0x8] sm:$0xff]
        %v481 = vld [vmem:[%s2 + $0x10] sm:$0xff]
        %v482 = vld [vmem:[%s2 + $0x18] sm:$0xff]
        %v483 = vld [vmem:[%s3] sm:$0xff]
        %v484 = vld [vmem:[%s3 + $0x8] sm:$0xff]
        %v485 = vld [vmem:[%s3 + $0x10] sm:$0xff]
        %v486 = vld [vmem:[%s3 + $0x18] sm:$0xff]
        %v487 = vld [vmem:[%s4] sm:$0xff]
        %v488 = vld [vmem:[%s4 + $0x8] sm:$0xff]
        %v489 = vld [vmem:[%s4 + $0x10] sm:$0xff]
        %v490 = vld [vmem:[%s4 + $0x18] sm:$0xff]
        %v491 = vld [vmem:[#allocation7] sm:$0xff]
        %v492 = vld [vmem:[#allocation7 + $0x8] sm:$0xff]
        %v493 = vld [vmem:[#allocation7 + $0x10] sm:$0xff]
        %v494 = vld [vmem:[#allocation7 + $0x18] sm:$0xff]
        %v495 = vld [vmem:[#allocation8] sm:$0xff]
        %v496 = vld [vmem:[#allocation8 + $0x8] sm:$0xff]
        %v497 = vld [vmem:[#allocation8 + $0x10] sm:$0xff]
        %v498 = vld [vmem:[#allocation8 + $0x18] sm:$0xff]
        %v499 = vld [vmem:[%s8] sm:$0xff]
        %v500 = vld [vmem:[%s8 + $0x8] sm:$0xff]
        %v501 = vld [vmem:[%s8 + $0x10] sm:$0xff]
        %v502 = vld [vmem:[%s8 + $0x18] sm:$0xff]
        %v503 = vld [vmem:[%s8 + $0x20] sm:$0xff]
        %v504 = vld [vmem:[%s8 + $0x28] sm:$0xff]
        %v505 = vld [vmem:[%s8 + $0x30] sm:$0xff]
        %v506 = vld [vmem:[%s8 + $0x38] sm:$0xff]
        %v507 = vld [vmem:[%s7] sm:$0x1]
        %v508 = vld [vmem:[%s9] sm:$0xff]
        %v509 = vld [vmem:[%s9 + $0x8] sm:$0x1]
        %v510 = vld [vmem:[%s422] sm:$0xff]
        %v511 = vld [vmem:[%s413] sm:$0xff]
        %v512 = vlaneseq
        %v513 = vshrl.u32 %v512, 7
        %v514 = vsub.s32 0, %v513
        %v515 = vrot.slane %v508, %v514
        %vm516 = vcmask 261120
        %v518 = vsel %vm516, %v511, 0
        %520 = vmatprep.subr.mxu0 0.0
        %521 = vmatpush1.msra.mxu0 %v479
        %522 = vmatprep.subr.mxu0 0.0
        %523 = vmatpush1.msra.mxu0 %v480
        %524 = vmatprep.subr.mxu0 0.0
        %525 = vmatpush1.msra.mxu0 %v481
        %526 = vmatprep.subr.mxu0 0.0
        %527 = vmatpush1.msra.mxu0 %v482
        %528 = vmatprep.subr.mxu0 0.0
        %529 = vmatpush1.msra.mxu0 0.0
        %530 = vmatprep.subr.mxu0 0.0
        %531 = vmatpush1.msra.mxu0 0.0
        %532 = vmatprep.subr.mxu0 0.0
        %533 = vmatpush1.msra.mxu0 0.0
        %534 = vmatprep.subr.mxu0 0.0
        %535 = vmatpush1.msra.mxu0 0.0
        %536 = vmatprep.subr.mxu0 0.0
        %537 = vmatpush1.msra.mxu0 0.0
        %538 = vmatprep.subr.mxu0 0.0
        %539 = vmatpush1.msra.mxu0 0.0
        %540 = vmatprep.subr.mxu0 0.0
        %541 = vmatpush1.msra.mxu0 0.0
        %542 = vmatprep.subr.mxu0 0.0
        %543 = vmatpush1.msra.mxu0 0.0
        %544 = vmatprep.subr.mxu0 0.0
        %545 = vmatpush1.msra.mxu0 0.0
        %546 = vmatprep.subr.mxu0 0.0
        %547 = vmatpush1.msra.mxu0 0.0
        %548 = vmatprep.subr.mxu0 0.0
        %549 = vmatpush1.msra.mxu0 0.0
        %550 = vmatprep.subr.mxu0 0.0
        %551 = vmatpush1.msra.mxu0 0.0
        %552 = vmatprep.subr.mxu0 0.0
        %553 = vmatpush1.msra.mxu0 0.0
        %554 = vmatprep.subr.mxu0 0.0
        %555 = vmatpush1.msra.mxu0 0.0
        %556 = vmatprep.subr.mxu0 0.0
        %557 = vmatpush1.msra.mxu0 0.0
        %558 = vmatprep.subr.mxu0 0.0
        %559 = vmatpush1.msra.mxu0 0.0
        %560 = vmatprep.subr.mxu0 0.0
        %561 = vmatpush1.msra.mxu0 0.0
        %562 = vmatprep.subr.mxu0 0.0
        %563 = vmatpush1.msra.mxu0 0.0
        %564 = vmatprep.subr.mxu0 0.0
        %565 = vmatpush1.msra.mxu0 0.0
        %566 = vmatprep.subr.mxu0 0.0
        %567 = vmatpush1.msra.mxu0 0.0
        %568 = vmatprep.subr.mxu0 0.0
        %569 = vmatpush1.msra.mxu0 0.0
        %570 = vmatprep.subr.mxu0 0.0
        %571 = vmatpush1.msra.mxu0 0.0
        %572 = vmatprep.subr.mxu0 0.0
        %573 = vmatpush1.msra.mxu0 0.0
        %574 = vmatprep.subr.mxu0 0.0
        %575 = vmatpush1.msra.mxu0 0.0
        %576 = vmatprep.subr.mxu0 0.0
        %577 = vmatpush1.msra.mxu0 0.0
        %578 = vmatprep.subr.mxu0 0.0
        %579 = vmatpush1.msra.mxu0 0.0
        %580 = vmatprep.subr.mxu0 0.0
        %581 = vmatpush1.msra.mxu0 0.0
        %582 = vmatprep.subr.mxu0 0.0
        %583 = vmatpush1.msra.mxu0 0.0
        %584 = vmatprep.mubr.f32.mxu0 0.0
        %585 = vmatmul.mubr.f32.gmra.mrb[0].mxu0 %v518
        %v586 = vpop.f32.mrb[0].mxu0
        %v587 = vadd.f32 %v515, %v586
        %v588 = vpop.f32.mrb[0].mxu0
        %589 = vdwg.mxu0
        %v590 = vlaneseq
        %v591 = vshrl.u32 %v590, 7
        %v592 = vsub.s32 1, %v591
        %v593 = vrot.slane %v508, %v592
        %594 = vmatprep.subr.mxu0 0.0
        %595 = vmatpush1.msra.mxu0 %v483
        %596 = vmatprep.subr.mxu0 0.0
        %597 = vmatpush1.msra.mxu0 %v484
        %598 = vmatprep.subr.mxu0 0.0
        %599 = vmatpush1.msra.mxu0 %v485
        %600 = vmatprep.subr.mxu0 0.0
        %601 = vmatpush1.msra.mxu0 %v486
        %602 = vmatprep.subr.mxu0 0.0
        %603 = vmatpush1.msra.mxu0 0.0
        %604 = vmatprep.subr.mxu0 0.0
        %605 = vmatpush1.msra.mxu0 0.0
        %606 = vmatprep.subr.mxu0 0.0
        %607 = vmatpush1.msra.mxu0 0.0
        %608 = vmatprep.subr.mxu0 0.0
        %609 = vmatpush1.msra.mxu0 0.0
        %610 = vmatprep.subr.mxu0 0.0
        %611 = vmatpush1.msra.mxu0 0.0
        %612 = vmatprep.subr.mxu0 0.0
        %613 = vmatpush1.msra.mxu0 0.0
        %614 = vmatprep.subr.mxu0 0.0
        %615 = vmatpush1.msra.mxu0 0.0
        %616 = vmatprep.subr.mxu0 0.0
        %617 = vmatpush1.msra.mxu0 0.0
        %618 = vmatprep.subr.mxu0 0.0
        %619 = vmatpush1.msra.mxu0 0.0
        %620 = vmatprep.subr.mxu0 0.0
        %621 = vmatpush1.msra.mxu0 0.0
        %622 = vmatprep.subr.mxu0 0.0
        %623 = vmatpush1.msra.mxu0 0.0
        %624 = vmatprep.subr.mxu0 0.0
        %625 = vmatpush1.msra.mxu0 0.0
        %626 = vmatprep.subr.mxu0 0.0
        %627 = vmatpush1.msra.mxu0 0.0
        %628 = vmatprep.subr.mxu0 0.0
        %629 = vmatpush1.msra.mxu0 0.0
        %630 = vmatprep.subr.mxu0 0.0
        %631 = vmatpush1.msra.mxu0 0.0
        %632 = vmatprep.subr.mxu0 0.0
        %633 = vmatpush1.msra.mxu0 0.0
        %634 = vmatprep.subr.mxu0 0.0
        %635 = vmatpush1.msra.mxu0 0.0
        %636 = vmatprep.subr.mxu0 0.0
        %637 = vmatpush1.msra.mxu0 0.0
        %638 = vmatprep.subr.mxu0 0.0
        %639 = vmatpush1.msra.mxu0 0.0
        %640 = vmatprep.subr.mxu0 0.0
        %641 = vmatpush1.msra.mxu0 0.0
        %642 = vmatprep.subr.mxu0 0.0
        %643 = vmatpush1.msra.mxu0 0.0
        %644 = vmatprep.subr.mxu0 0.0
        %645 = vmatpush1.msra.mxu0 0.0
        %646 = vmatprep.subr.mxu0 0.0
        %647 = vmatpush1.msra.mxu0 0.0
        %648 = vmatprep.subr.mxu0 0.0
        %649 = vmatpush1.msra.mxu0 0.0
        %650 = vmatprep.subr.mxu0 0.0
        %651 = vmatpush1.msra.mxu0 0.0
        %652 = vmatprep.subr.mxu0 0.0
        %653 = vmatpush1.msra.mxu0 0.0
        %654 = vmatprep.subr.mxu0 0.0
        %655 = vmatpush1.msra.mxu0 0.0
        %656 = vmatprep.subr.mxu0 0.0
        %657 = vmatpush1.msra.mxu0 0.0
        %658 = vmatprep.mubr.f32.mxu0 0.0
        %659 = vmatmul.mubr.f32.gmra.mrb[0].mxu0 %v518
        %v660 = vpop.f32.mrb[0].mxu0
        %v661 = vadd.f32 %v593, %v660
        %v662 = vpop.f32.mrb[0].mxu0
        %663 = vdwg.mxu0
        %v664 = vlaneseq
        %v665 = vshrl.u32 %v664, 7
        %v666 = vsub.s32 2, %v665
        %v667 = vrot.slane %v508, %v666
        %v669 = vsel %vm516, %v510, 0
        %671 = vmatprep.subr.mxu0 0.0
        %672 = vmatpush1.msra.mxu0 %v487
        %673 = vmatprep.subr.mxu0 0.0
        %674 = vmatpush1.msra.mxu0 %v488
        %675 = vmatprep.subr.mxu0 0.0
        %676 = vmatpush1.msra.mxu0 %v489
        %677 = vmatprep.subr.mxu0 0.0
        %678 = vmatpush1.msra.mxu0 %v490
        %679 = vmatprep.subr.mxu0 0.0
        %680 = vmatpush1.msra.mxu0 0.0
        %681 = vmatprep.subr.mxu0 0.0
        %682 = vmatpush1.msra.mxu0 0.0
        %683 = vmatprep.subr.mxu0 0.0
        %684 = vmatpush1.msra.mxu0 0.0
        %685 = vmatprep.subr.mxu0 0.0
        %686 = vmatpush1.msra.mxu0 0.0
        %687 = vmatprep.subr.mxu0 0.0
        %688 = vmatpush1.msra.mxu0 0.0
        %689 = vmatprep.subr.mxu0 0.0
        %690 = vmatpush1.msra.mxu0 0.0
        %691 = vmatprep.subr.mxu0 0.0
        %692 = vmatpush1.msra.mxu0 0.0
        %693 = vmatprep.subr.mxu0 0.0
        %694 = vmatpush1.msra.mxu0 0.0
        %695 = vmatprep.subr.mxu0 0.0
        %696 = vmatpush1.msra.mxu0 0.0
        %697 = vmatprep.subr.mxu0 0.0
        %698 = vmatpush1.msra.mxu0 0.0
        %699 = vmatprep.subr.mxu0 0.0
        %700 = vmatpush1.msra.mxu0 0.0
        %701 = vmatprep.subr.mxu0 0.0
        %702 = vmatpush1.msra.mxu0 0.0
        %703 = vmatprep.subr.mxu0 0.0
        %704 = vmatpush1.msra.mxu0 0.0
        %705 = vmatprep.subr.mxu0 0.0
        %706 = vmatpush1.msra.mxu0 0.0
        %707 = vmatprep.subr.mxu0 0.0
        %708 = vmatpush1.msra.mxu0 0.0
        %709 = vmatprep.subr.mxu0 0.0
        %710 = vmatpush1.msra.mxu0 0.0
        %711 = vmatprep.subr.mxu0 0.0
        %712 = vmatpush1.msra.mxu0 0.0
        %713 = vmatprep.subr.mxu0 0.0
        %714 = vmatpush1.msra.mxu0 0.0
        %715 = vmatprep.subr.mxu0 0.0
        %716 = vmatpush1.msra.mxu0 0.0
        %717 = vmatprep.subr.mxu0 0.0
        %718 = vmatpush1.msra.mxu0 0.0
        %719 = vmatprep.subr.mxu0 0.0
        %720 = vmatpush1.msra.mxu0 0.0
        %721 = vmatprep.subr.mxu0 0.0
        %722 = vmatpush1.msra.mxu0 0.0
        %723 = vmatprep.subr.mxu0 0.0
        %724 = vmatpush1.msra.mxu0 0.0
        %725 = vmatprep.subr.mxu0 0.0
        %726 = vmatpush1.msra.mxu0 0.0
        %727 = vmatprep.subr.mxu0 0.0
        %728 = vmatpush1.msra.mxu0 0.0
        %729 = vmatprep.subr.mxu0 0.0
        %730 = vmatpush1.msra.mxu0 0.0
        %731 = vmatprep.subr.mxu0 0.0
        %732 = vmatpush1.msra.mxu0 0.0
        %733 = vmatprep.subr.mxu0 0.0
        %734 = vmatpush1.msra.mxu0 0.0
        %735 = vmatprep.mubr.f32.mxu0 0.0
        %736 = vmatmul.mubr.f32.gmra.mrb[0].mxu0 %v669
        %v737 = vpop.f32.mrb[0].mxu0
        %v738 = vadd.f32 %v667, %v737
        %v739 = vpop.f32.mrb[0].mxu0
        %740 = vdwg.mxu0
        %742 = vrot.lane.b32.xlu0 %v587, 120
        %v743 = vpop.permute.xlu0 %742
        %745 = vrot.lane.b32.xlu0 %v587, 112
        %v746 = vpop.permute.xlu0 %745
        %748 = vrot.lane.b32.xlu0 %v587, 104
        %v749 = vpop.permute.xlu0 %748
        %v751 = vcombine.low %v587, %v746
        %v752 = vcombine.high %v587, %v746
        %v754 = vunpack.c.l.s4 1983009808
        %v755 = vunpack.c.0.s8 %v754
        %v756 = vlaneseq
        %v757 = vshrl.u32 %v756, 7
        %v758 = vsub.s32 %v755, %v757
        %v759 = vrot.slane %v751, %v758
        %v761 = vunpack.c.l.s4 1983009808
        %v762 = vunpack.c.0.s8 %v761
        %v763 = vlaneseq
        %v764 = vshrl.u32 %v763, 7
        %v765 = vsub.s32 %v762, %v764
        %v766 = vrot.slane %v752, %v765
        %v767 = vcombine.low %v743, %v749
        %v768 = vcombine.high %v743, %v749
        %v770 = vunpack.c.l.s4 1983009808
        %v771 = vunpack.c.0.s8 %v770
        %v772 = vlaneseq
        %v773 = vshrl.u32 %v772, 7
        %v774 = vsub.s32 %v771, %v773
        %v775 = vrot.slane %v767, %v774
        %v777 = vunpack.c.l.s4 1983009808
        %v778 = vunpack.c.0.s8 %v777
        %v779 = vlaneseq
        %v780 = vshrl.u32 %v779, 7
        %v781 = vsub.s32 %v778, %v780
        %v782 = vrot.slane %v768, %v781
        %v783 = vcombine.low %v759, %v775
        %v784 = vcombine.high %v759, %v775
        %v786 = vunpack.c.l.s4 1934713408
        %v787 = vunpack.c.0.s8 %v786
        %v788 = vlaneseq
        %v789 = vshrl.u32 %v788, 7
        %v790 = vsub.s32 %v787, %v789
        %v791 = vrot.slane %v783, %v790
        %v793 = vunpack.c.l.s4 1934713408
        %v794 = vunpack.c.0.s8 %v793
        %v795 = vlaneseq
        %v796 = vshrl.u32 %v795, 7
        %v797 = vsub.s32 %v794, %v796
        %v798 = vrot.slane %v784, %v797
        %v799 = vcombine.low %v766, %v782
        %v800 = vcombine.high %v766, %v782
        %v802 = vunpack.c.l.s4 1934713408
        %v803 = vunpack.c.0.s8 %v802
        %v804 = vlaneseq
        %v805 = vshrl.u32 %v804, 7
        %v806 = vsub.s32 %v803, %v805
        %v807 = vrot.slane %v799, %v806
        %v809 = vunpack.c.l.s4 1934713408
        %v810 = vunpack.c.0.s8 %v809
        %v811 = vlaneseq
        %v812 = vshrl.u32 %v811, 7
        %v813 = vsub.s32 %v810, %v812
        %v814 = vrot.slane %v800, %v813
        %v815 = vcombine.high %v791, 0.0
        %v816 = vcombine.high %v798, 0.0
        %v817 = vcombine.high %v807, 0.0
        %v818 = vcombine.high %v814, 0.0
        %v819 = vcombine.low %v791, %v798
        %v821 = vunpack.c.l.s4 1983009808
        %v822 = vunpack.c.0.s8 %v821
        %v823 = vlaneseq
        %v824 = vshrl.u32 %v823, 7
        %v825 = vsub.s32 %v822, %v824
        %v826 = vrot.slane %v819, %v825
        %v827 = vcombine.low %v815, %v816
        %v829 = vunpack.c.l.s4 1983009808
        %v830 = vunpack.c.0.s8 %v829
        %v831 = vlaneseq
        %v832 = vshrl.u32 %v831, 7
        %v833 = vsub.s32 %v830, %v832
        %v834 = vrot.slane %v827, %v833
        %v835 = vcombine.low %v807, %v814
        %v837 = vunpack.c.l.s4 1983009808
        %v838 = vunpack.c.0.s8 %v837
        %v839 = vlaneseq
        %v840 = vshrl.u32 %v839, 7
        %v841 = vsub.s32 %v838, %v840
        %v842 = vrot.slane %v835, %v841
        %v843 = vcombine.low %v817, %v818
        %v845 = vunpack.c.l.s4 1983009808
        %v846 = vunpack.c.0.s8 %v845
        %v847 = vlaneseq
        %v848 = vshrl.u32 %v847, 7
        %v849 = vsub.s32 %v846, %v848
        %v850 = vrot.slane %v843, %v849
        %v851 = vcombine.low %v826, %v834
        %v852 = vcombine.high %v826, %v834
        %v854 = vunpack.c.l.s4 1934713408
        %v855 = vunpack.c.0.s8 %v854
        %v856 = vlaneseq
        %v857 = vshrl.u32 %v856, 7
        %v858 = vsub.s32 %v855, %v857
        %v859 = vrot.slane %v851, %v858
        %v861 = vunpack.c.l.s4 1934713408
        %v862 = vunpack.c.0.s8 %v861
        %v863 = vlaneseq
        %v864 = vshrl.u32 %v863, 7
        %v865 = vsub.s32 %v862, %v864
        %v866 = vrot.slane %v852, %v865
        %v867 = vcombine.low %v842, %v850
        %v868 = vcombine.high %v842, %v850
        %v870 = vunpack.c.l.s4 1934713408
        %v871 = vunpack.c.0.s8 %v870
        %v872 = vlaneseq
        %v873 = vshrl.u32 %v872, 7
        %v874 = vsub.s32 %v871, %v873
        %v875 = vrot.slane %v867, %v874
        %v877 = vunpack.c.l.s4 1934713408
        %v878 = vunpack.c.0.s8 %v877
        %v879 = vlaneseq
        %v880 = vshrl.u32 %v879, 7
        %v881 = vsub.s32 %v878, %v880
        %v882 = vrot.slane %v868, %v881
        %v883 = vcombine.low %v859, %v875
        %v884 = vcombine.high %v859, %v875
        %v885 = vcombine.low %v866, %v882
        %v886 = vcombine.high %v866, %v882
        %888 = vrot.lane.b32.xlu0 %v661, 120
        %v889 = vpop.permute.xlu0 %888
        %891 = vrot.lane.b32.xlu0 %v661, 112
        %v892 = vpop.permute.xlu0 %891
        %894 = vrot.lane.b32.xlu0 %v661, 104
        %v895 = vpop.permute.xlu0 %894
        %v897 = vcombine.low %v661, %v892
        %v898 = vcombine.high %v661, %v892
        %v900 = vunpack.c.l.s4 1983009808
        %v901 = vunpack.c.0.s8 %v900
        %v902 = vlaneseq
        %v903 = vshrl.u32 %v902, 7
        %v904 = vsub.s32 %v901, %v903
        %v905 = vrot.slane %v897, %v904
        %v907 = vunpack.c.l.s4 1983009808
        %v908 = vunpack.c.0.s8 %v907
        %v909 = vlaneseq
        %v910 = vshrl.u32 %v909, 7
        %v911 = vsub.s32 %v908, %v910
        %v912 = vrot.slane %v898, %v911
        %v913 = vcombine.low %v889, %v895
        %v914 = vcombine.high %v889, %v895
        %v916 = vunpack.c.l.s4 1983009808
        %v917 = vunpack.c.0.s8 %v916
        %v918 = vlaneseq
        %v919 = vshrl.u32 %v918, 7
        %v920 = vsub.s32 %v917, %v919
        %v921 = vrot.slane %v913, %v920
        %v923 = vunpack.c.l.s4 1983009808
        %v924 = vunpack.c.0.s8 %v923
        %v925 = vlaneseq
        %v926 = vshrl.u32 %v925, 7
        %v927 = vsub.s32 %v924, %v926
        %v928 = vrot.slane %v914, %v927
        %v929 = vcombine.low %v905, %v921
        %v930 = vcombine.high %v905, %v921
        %v932 = vunpack.c.l.s4 1934713408
        %v933 = vunpack.c.0.s8 %v932
        %v934 = vlaneseq
        %v935 = vshrl.u32 %v934, 7
        %v936 = vsub.s32 %v933, %v935
        %v937 = vrot.slane %v929, %v936
        %v939 = vunpack.c.l.s4 1934713408
        %v940 = vunpack.c.0.s8 %v939
        %v941 = vlaneseq
        %v942 = vshrl.u32 %v941, 7
        %v943 = vsub.s32 %v940, %v942
        %v944 = vrot.slane %v930, %v943
        %v945 = vcombine.low %v912, %v928
        %v946 = vcombine.high %v912, %v928
        %v948 = vunpack.c.l.s4 1934713408
        %v949 = vunpack.c.0.s8 %v948
        %v950 = vlaneseq
        %v951 = vshrl.u32 %v950, 7
        %v952 = vsub.s32 %v949, %v951
        %v953 = vrot.slane %v945, %v952
        %v955 = vunpack.c.l.s4 1934713408
        %v956 = vunpack.c.0.s8 %v955
        %v957 = vlaneseq
        %v958 = vshrl.u32 %v957, 7
        %v959 = vsub.s32 %v956, %v958
        %v960 = vrot.slane %v946, %v959
        %v961 = vcombine.high %v937, 0.0
        %v962 = vcombine.high %v944, 0.0
        %v963 = vcombine.high %v953, 0.0
        %v964 = vcombine.high %v960, 0.0
        %v965 = vcombine.low %v937, %v944
        %v967 = vunpack.c.l.s4 1983009808
        %v968 = vunpack.c.0.s8 %v967
        %v969 = vlaneseq
        %v970 = vshrl.u32 %v969, 7
        %v971 = vsub.s32 %v968, %v970
        %v972 = vrot.slane %v965, %v971
        %v973 = vcombine.low %v961, %v962
        %v975 = vunpack.c.l.s4 1983009808
        %v976 = vunpack.c.0.s8 %v975
        %v977 = vlaneseq
        %v978 = vshrl.u32 %v977, 7
        %v979 = vsub.s32 %v976, %v978
        %v980 = vrot.slane %v973, %v979
        %v981 = vcombine.low %v953, %v960
        %v983 = vunpack.c.l.s4 1983009808
        %v984 = vunpack.c.0.s8 %v983
        %v985 = vlaneseq
        %v986 = vshrl.u32 %v985, 7
        %v987 = vsub.s32 %v984, %v986
        %v988 = vrot.slane %v981, %v987
        %v989 = vcombine.low %v963, %v964
        %v991 = vunpack.c.l.s4 1983009808
        %v992 = vunpack.c.0.s8 %v991
        %v993 = vlaneseq
        %v994 = vshrl.u32 %v993, 7
        %v995 = vsub.s32 %v992, %v994
        %v996 = vrot.slane %v989, %v995
        %v997 = vcombine.low %v972, %v980
        %v998 = vcombine.high %v972, %v980
        %v1000 = vunpack.c.l.s4 1934713408
        %v1001 = vunpack.c.0.s8 %v1000
        %v1002 = vlaneseq
        %v1003 = vshrl.u32 %v1002, 7
        %v1004 = vsub.s32 %v1001, %v1003
        %v1005 = vrot.slane %v997, %v1004
        %v1007 = vunpack.c.l.s4 1934713408
        %v1008 = vunpack.c.0.s8 %v1007
        %v1009 = vlaneseq
        %v1010 = vshrl.u32 %v1009, 7
        %v1011 = vsub.s32 %v1008, %v1010
        %v1012 = vrot.slane %v998, %v1011
        %v1013 = vcombine.low %v988, %v996
        %v1014 = vcombine.high %v988, %v996
        %v1016 = vunpack.c.l.s4 1934713408
        %v1017 = vunpack.c.0.s8 %v1016
        %v1018 = vlaneseq
        %v1019 = vshrl.u32 %v1018, 7
        %v1020 = vsub.s32 %v1017, %v1019
        %v1021 = vrot.slane %v1013, %v1020
        %v1023 = vunpack.c.l.s4 1934713408
        %v1024 = vunpack.c.0.s8 %v1023
        %v1025 = vlaneseq
        %v1026 = vshrl.u32 %v1025, 7
        %v1027 = vsub.s32 %v1024, %v1026
        %v1028 = vrot.slane %v1014, %v1027
        %v1029 = vcombine.low %v1005, %v1021
        %v1030 = vcombine.high %v1005, %v1021
        %v1031 = vcombine.low %v1012, %v1028
        %v1032 = vcombine.high %v1012, %v1028
        %1034 = vrot.lane.b32.xlu0 %v738, 120
        %v1035 = vpop.permute.xlu0 %1034
        %1037 = vrot.lane.b32.xlu0 %v738, 112
        %v1038 = vpop.permute.xlu0 %1037
        %1040 = vrot.lane.b32.xlu0 %v738, 104
        %v1041 = vpop.permute.xlu0 %1040
        %v1043 = vcombine.low %v738, %v1038
        %v1044 = vcombine.high %v738, %v1038
        %v1046 = vunpack.c.l.s4 1983009808
        %v1047 = vunpack.c.0.s8 %v1046
        %v1048 = vlaneseq
        %v1049 = vshrl.u32 %v1048, 7
        %v1050 = vsub.s32 %v1047, %v1049
        %v1051 = vrot.slane %v1043, %v1050
        %v1053 = vunpack.c.l.s4 1983009808
        %v1054 = vunpack.c.0.s8 %v1053
        %v1055 = vlaneseq
        %v1056 = vshrl.u32 %v1055, 7
        %v1057 = vsub.s32 %v1054, %v1056
        %v1058 = vrot.slane %v1044, %v1057
        %v1059 = vcombine.low %v1035, %v1041
        %v1060 = vcombine.high %v1035, %v1041
        %v1062 = vunpack.c.l.s4 1983009808
        %v1063 = vunpack.c.0.s8 %v1062
        %v1064 = vlaneseq
        %v1065 = vshrl.u32 %v1064, 7
        %v1066 = vsub.s32 %v1063, %v1065
        %v1067 = vrot.slane %v1059, %v1066
        %v1069 = vunpack.c.l.s4 1983009808
        %v1070 = vunpack.c.0.s8 %v1069
        %v1071 = vlaneseq
        %v1072 = vshrl.u32 %v1071, 7
        %v1073 = vsub.s32 %v1070, %v1072
        %v1074 = vrot.slane %v1060, %v1073
        %v1075 = vcombine.low %v1051, %v1067
        %v1076 = vcombine.high %v1051, %v1067
        %v1078 = vunpack.c.l.s4 1934713408
        %v1079 = vunpack.c.0.s8 %v1078
        %v1080 = vlaneseq
        %v1081 = vshrl.u32 %v1080, 7
        %v1082 = vsub.s32 %v1079, %v1081
        %v1083 = vrot.slane %v1075, %v1082
        %v1085 = vunpack.c.l.s4 1934713408
        %v1086 = vunpack.c.0.s8 %v1085
        %v1087 = vlaneseq
        %v1088 = vshrl.u32 %v1087, 7
        %v1089 = vsub.s32 %v1086, %v1088
        %v1090 = vrot.slane %v1076, %v1089
        %v1091 = vcombine.low %v1058, %v1074
        %v1092 = vcombine.high %v1058, %v1074
        %v1094 = vunpack.c.l.s4 1934713408
        %v1095 = vunpack.c.0.s8 %v1094
        %v1096 = vlaneseq
        %v1097 = vshrl.u32 %v1096, 7
        %v1098 = vsub.s32 %v1095, %v1097
        %v1099 = vrot.slane %v1091, %v1098
        %v1101 = vunpack.c.l.s4 1934713408
        %v1102 = vunpack.c.0.s8 %v1101
        %v1103 = vlaneseq
        %v1104 = vshrl.u32 %v1103, 7
        %v1105 = vsub.s32 %v1102, %v1104
        %v1106 = vrot.slane %v1092, %v1105
        %v1107 = vcombine.high %v1083, 0.0
        %v1108 = vcombine.high %v1090, 0.0
        %v1109 = vcombine.high %v1099, 0.0
        %v1110 = vcombine.high %v1106, 0.0
        %v1111 = vcombine.low %v1083, %v1090
        %v1113 = vunpack.c.l.s4 1983009808
        %v1114 = vunpack.c.0.s8 %v1113
        %v1115 = vlaneseq
        %v1116 = vshrl.u32 %v1115, 7
        %v1117 = vsub.s32 %v1114, %v1116
        %v1118 = vrot.slane %v1111, %v1117
        %v1119 = vcombine.low %v1107, %v1108
        %v1121 = vunpack.c.l.s4 1983009808
        %v1122 = vunpack.c.0.s8 %v1121
        %v1123 = vlaneseq
        %v1124 = vshrl.u32 %v1123, 7
        %v1125 = vsub.s32 %v1122, %v1124
        %v1126 = vrot.slane %v1119, %v1125
        %v1127 = vcombine.low %v1099, %v1106
        %v1129 = vunpack.c.l.s4 1983009808
        %v1130 = vunpack.c.0.s8 %v1129
        %v1131 = vlaneseq
        %v1132 = vshrl.u32 %v1131, 7
        %v1133 = vsub.s32 %v1130, %v1132
        %v1134 = vrot.slane %v1127, %v1133
        %v1135 = vcombine.low %v1109, %v1110
        %v1137 = vunpack.c.l.s4 1983009808
        %v1138 = vunpack.c.0.s8 %v1137
        %v1139 = vlaneseq
        %v1140 = vshrl.u32 %v1139, 7
        %v1141 = vsub.s32 %v1138, %v1140
        %v1142 = vrot.slane %v1135, %v1141
        %v1143 = vcombine.low %v1118, %v1126
        %v1144 = vcombine.high %v1118, %v1126
        %v1146 = vunpack.c.l.s4 1934713408
        %v1147 = vunpack.c.0.s8 %v1146
        %v1148 = vlaneseq
        %v1149 = vshrl.u32 %v1148, 7
        %v1150 = vsub.s32 %v1147, %v1149
        %v1151 = vrot.slane %v1143, %v1150
        %v1153 = vunpack.c.l.s4 1934713408
        %v1154 = vunpack.c.0.s8 %v1153
        %v1155 = vlaneseq
        %v1156 = vshrl.u32 %v1155, 7
        %v1157 = vsub.s32 %v1154, %v1156
        %v1158 = vrot.slane %v1144, %v1157
        %v1159 = vcombine.low %v1134, %v1142
        %v1160 = vcombine.high %v1134, %v1142
        %v1162 = vunpack.c.l.s4 1934713408
        %v1163 = vunpack.c.0.s8 %v1162
        %v1164 = vlaneseq
        %v1165 = vshrl.u32 %v1164, 7
        %v1166 = vsub.s32 %v1163, %v1165
        %v1167 = vrot.slane %v1159, %v1166
        %v1169 = vunpack.c.l.s4 1934713408
        %v1170 = vunpack.c.0.s8 %v1169
        %v1171 = vlaneseq
        %v1172 = vshrl.u32 %v1171, 7
        %v1173 = vsub.s32 %v1170, %v1172
        %v1174 = vrot.slane %v1160, %v1173
        %v1175 = vcombine.low %v1151, %v1167
        %v1176 = vcombine.high %v1151, %v1167
        %v1177 = vcombine.low %v1158, %v1174
        %v1178 = vcombine.high %v1158, %v1174
        %vm1179 = vcmask 64512
        %v1181 = vsel %vm1179, %v883, 0
        %v1184 = vsel %vm1179, %v1029, 0
        %1186 = vmatprep.subr.mxu0 0.0
        %1187 = vmatpush1.xpose.msra.mxu0 %v1184
        %1188 = vmatprep.subr.mxu0 0.0
        %1189 = vmatpush1.xpose.msra.mxu0 0.0
        %1190 = vmatprep.subr.mxu0 0.0
        %1191 = vmatpush1.xpose.msra.mxu0 0.0
        %1192 = vmatprep.subr.mxu0 0.0
        %1193 = vmatpush1.xpose.msra.mxu0 0.0
        %1194 = vmatprep.subr.mxu0 0.0
        %1195 = vmatpush1.xpose.msra.mxu0 0.0
        %1196 = vmatprep.subr.mxu0 0.0
        %1197 = vmatpush1.xpose.msra.mxu0 0.0
        %1198 = vmatprep.subr.mxu0 0.0
        %1199 = vmatpush1.xpose.msra.mxu0 0.0
        %1200 = vmatprep.subr.mxu0 0.0
        %1201 = vmatpush1.xpose.msra.mxu0 0.0
        %1202 = vmatprep.subr.mxu0 0.0
        %1203 = vmatpush1.xpose.msra.mxu0 0.0
        %1204 = vmatprep.subr.mxu0 0.0
        %1205 = vmatpush1.xpose.msra.mxu0 0.0
        %1206 = vmatprep.subr.mxu0 0.0
        %1207 = vmatpush1.xpose.msra.mxu0 0.0
        %1208 = vmatprep.subr.mxu0 0.0
        %1209 = vmatpush1.xpose.msra.mxu0 0.0
        %1210 = vmatprep.subr.mxu0 0.0
        %1211 = vmatpush1.xpose.msra.mxu0 0.0
        %1212 = vmatprep.subr.mxu0 0.0
        %1213 = vmatpush1.xpose.msra.mxu0 0.0
        %1214 = vmatprep.subr.mxu0 0.0
        %1215 = vmatpush1.xpose.msra.mxu0 0.0
        %1216 = vmatprep.subr.mxu0 0.0
        %1217 = vmatpush1.xpose.msra.mxu0 0.0
        %1218 = vmatprep.subr.mxu0 0.0
        %1219 = vmatpush1.xpose.msra.mxu0 0.0
        %1220 = vmatprep.subr.mxu0 0.0
        %1221 = vmatpush1.xpose.msra.mxu0 0.0
        %1222 = vmatprep.subr.mxu0 0.0
        %1223 = vmatpush1.xpose.msra.mxu0 0.0
        %1224 = vmatprep.subr.mxu0 0.0
        %1225 = vmatpush1.xpose.msra.mxu0 0.0
        %1226 = vmatprep.subr.mxu0 0.0
        %1227 = vmatpush1.xpose.msra.mxu0 0.0
        %1228 = vmatprep.subr.mxu0 0.0
        %1229 = vmatpush1.xpose.msra.mxu0 0.0
        %1230 = vmatprep.subr.mxu0 0.0
        %1231 = vmatpush1.xpose.msra.mxu0 0.0
        %1232 = vmatprep.subr.mxu0 0.0
        %1233 = vmatpush1.xpose.msra.mxu0 0.0
        %1234 = vmatprep.subr.mxu0 0.0
        %1235 = vmatpush1.xpose.msra.mxu0 0.0
        %1236 = vmatprep.subr.mxu0 0.0
        %1237 = vmatpush1.xpose.msra.mxu0 0.0
        %1238 = vmatprep.subr.mxu0 0.0
        %1239 = vmatpush1.xpose.msra.mxu0 0.0
        %1240 = vmatprep.subr.mxu0 0.0
        %1241 = vmatpush1.xpose.msra.mxu0 0.0
        %1242 = vmatprep.subr.mxu0 0.0
        %1243 = vmatpush1.xpose.msra.mxu0 0.0
        %1244 = vmatprep.subr.mxu0 0.0
        %1245 = vmatpush1.xpose.msra.mxu0 0.0
        %1246 = vmatprep.subr.mxu0 0.0
        %1247 = vmatpush1.xpose.msra.mxu0 0.0
        %1248 = vmatprep.subr.mxu0 0.0
        %1249 = vmatpush1.xpose.msra.mxu0 0.0
        %1250 = vmatprep.mubr.f32.mxu0 0.0
        %1251 = vmatmul.mubr.f32.gmra.mrb[0].mxu0 %v1181
        %v1252 = vpop.f32.mrb[0].mxu0
        %v1253 = vadd.f32 0.0, %v1252
        %v1254 = vpop.f32.mrb[0].mxu0
        %1255 = vdwg.mxu0
        %v1257 = vsel %vm1179, %v884, 0
        %v1260 = vsel %vm1179, %v1030, 0
        %1262 = vmatprep.subr.mxu0 0.0
        %1263 = vmatpush1.xpose.msra.mxu0 %v1260
        %1264 = vmatprep.subr.mxu0 0.0
        %1265 = vmatpush1.xpose.msra.mxu0 0.0
        %1266 = vmatprep.subr.mxu0 0.0
        %1267 = vmatpush1.xpose.msra.mxu0 0.0
        %1268 = vmatprep.subr.mxu0 0.0
        %1269 = vmatpush1.xpose.msra.mxu0 0.0
        %1270 = vmatprep.subr.mxu0 0.0
        %1271 = vmatpush1.xpose.msra.mxu0 0.0
        %1272 = vmatprep.subr.mxu0 0.0
        %1273 = vmatpush1.xpose.msra.mxu0 0.0
        %1274 = vmatprep.subr.mxu0 0.0
        %1275 = vmatpush1.xpose.msra.mxu0 0.0
        %1276 = vmatprep.subr.mxu0 0.0
        %1277 = vmatpush1.xpose.msra.mxu0 0.0
        %1278 = vmatprep.subr.mxu0 0.0
        %1279 = vmatpush1.xpose.msra.mxu0 0.0
        %1280 = vmatprep.subr.mxu0 0.0
        %1281 = vmatpush1.xpose.msra.mxu0 0.0
        %1282 = vmatprep.subr.mxu0 0.0
        %1283 = vmatpush1.xpose.msra.mxu0 0.0
        %1284 = vmatprep.subr.mxu0 0.0
        %1285 = vmatpush1.xpose.msra.mxu0 0.0
        %1286 = vmatprep.subr.mxu0 0.0
        %1287 = vmatpush1.xpose.msra.mxu0 0.0
        %1288 = vmatprep.subr.mxu0 0.0
        %1289 = vmatpush1.xpose.msra.mxu0 0.0
        %1290 = vmatprep.subr.mxu0 0.0
        %1291 = vmatpush1.xpose.msra.mxu0 0.0
        %1292 = vmatprep.subr.mxu0 0.0
        %1293 = vmatpush1.xpose.msra.mxu0 0.0
        %1294 = vmatprep.subr.mxu0 0.0
        %1295 = vmatpush1.xpose.msra.mxu0 0.0
        %1296 = vmatprep.subr.mxu0 0.0
        %1297 = vmatpush1.xpose.msra.mxu0 0.0
        %1298 = vmatprep.subr.mxu0 0.0
        %1299 = vmatpush1.xpose.msra.mxu0 0.0
        %1300 = vmatprep.subr.mxu0 0.0
        %1301 = vmatpush1.xpose.msra.mxu0 0.0
        %1302 = vmatprep.subr.mxu0 0.0
        %1303 = vmatpush1.xpose.msra.mxu0 0.0
        %1304 = vmatprep.subr.mxu0 0.0
        %1305 = vmatpush1.xpose.msra.mxu0 0.0
        %1306 = vmatprep.subr.mxu0 0.0
        %1307 = vmatpush1.xpose.msra.mxu0 0.0
        %1308 = vmatprep.subr.mxu0 0.0
        %1309 = vmatpush1.xpose.msra.mxu0 0.0
        %1310 = vmatprep.subr.mxu0 0.0
        %1311 = vmatpush1.xpose.msra.mxu0 0.0
        %1312 = vmatprep.subr.mxu0 0.0
        %1313 = vmatpush1.xpose.msra.mxu0 0.0
        %1314 = vmatprep.subr.mxu0 0.0
        %1315 = vmatpush1.xpose.msra.mxu0 0.0
        %1316 = vmatprep.subr.mxu0 0.0
        %1317 = vmatpush1.xpose.msra.mxu0 0.0
        %1318 = vmatprep.subr.mxu0 0.0
        %1319 = vmatpush1.xpose.msra.mxu0 0.0
        %1320 = vmatprep.subr.mxu0 0.0
        %1321 = vmatpush1.xpose.msra.mxu0 0.0
        %1322 = vmatprep.subr.mxu0 0.0
        %1323 = vmatpush1.xpose.msra.mxu0 0.0
        %1324 = vmatprep.subr.mxu0 0.0
        %1325 = vmatpush1.xpose.msra.mxu0 0.0
        %1326 = vmatprep.mubr.f32.mxu0 0.0
        %1327 = vmatmul.mubr.f32.gmra.mrb[0].mxu0 %v1257
        %v1328 = vpop.f32.mrb[0].mxu0
        %v1329 = vadd.f32 0.0, %v1328
        %v1330 = vpop.f32.mrb[0].mxu0
        %1331 = vdwg.mxu0
        %v1333 = vsel %vm1179, %v885, 0
        %v1336 = vsel %vm1179, %v1031, 0
        %1338 = vmatprep.subr.mxu0 0.0
        %1339 = vmatpush1.xpose.msra.mxu0 %v1336
        %1340 = vmatprep.subr.mxu0 0.0
        %1341 = vmatpush1.xpose.msra.mxu0 0.0
        %1342 = vmatprep.subr.mxu0 0.0
        %1343 = vmatpush1.xpose.msra.mxu0 0.0
        %1344 = vmatprep.subr.mxu0 0.0
        %1345 = vmatpush1.xpose.msra.mxu0 0.0
        %1346 = vmatprep.subr.mxu0 0.0
        %1347 = vmatpush1.xpose.msra.mxu0 0.0
        %1348 = vmatprep.subr.mxu0 0.0
        %1349 = vmatpush1.xpose.msra.mxu0 0.0
        %1350 = vmatprep.subr.mxu0 0.0
        %1351 = vmatpush1.xpose.msra.mxu0 0.0
        %1352 = vmatprep.subr.mxu0 0.0
        %1353 = vmatpush1.xpose.msra.mxu0 0.0
        %1354 = vmatprep.subr.mxu0 0.0
        %1355 = vmatpush1.xpose.msra.mxu0 0.0
        %1356 = vmatprep.subr.mxu0 0.0
        %1357 = vmatpush1.xpose.msra.mxu0 0.0
        %1358 = vmatprep.subr.mxu0 0.0
        %1359 = vmatpush1.xpose.msra.mxu0 0.0
        %1360 = vmatprep.subr.mxu0 0.0
        %1361 = vmatpush1.xpose.msra.mxu0 0.0
        %1362 = vmatprep.subr.mxu0 0.0
        %1363 = vmatpush1.xpose.msra.mxu0 0.0
        %1364 = vmatprep.subr.mxu0 0.0
        %1365 = vmatpush1.xpose.msra.mxu0 0.0
        %1366 = vmatprep.subr.mxu0 0.0
        %1367 = vmatpush1.xpose.msra.mxu0 0.0
        %1368 = vmatprep.subr.mxu0 0.0
        %1369 = vmatpush1.xpose.msra.mxu0 0.0
        %1370 = vmatprep.subr.mxu0 0.0
        %1371 = vmatpush1.xpose.msra.mxu0 0.0
        %1372 = vmatprep.subr.mxu0 0.0
        %1373 = vmatpush1.xpose.msra.mxu0 0.0
        %1374 = vmatprep.subr.mxu0 0.0
        %1375 = vmatpush1.xpose.msra.mxu0 0.0
        %1376 = vmatprep.subr.mxu0 0.0
        %1377 = vmatpush1.xpose.msra.mxu0 0.0
        %1378 = vmatprep.subr.mxu0 0.0
        %1379 = vmatpush1.xpose.msra.mxu0 0.0
        %1380 = vmatprep.subr.mxu0 0.0
        %1381 = vmatpush1.xpose.msra.mxu0 0.0
        %1382 = vmatprep.subr.mxu0 0.0
        %1383 = vmatpush1.xpose.msra.mxu0 0.0
        %1384 = vmatprep.subr.mxu0 0.0
        %1385 = vmatpush1.xpose.msra.mxu0 0.0
        %1386 = vmatprep.subr.mxu0 0.0
        %1387 = vmatpush1.xpose.msra.mxu0 0.0
        %1388 = vmatprep.subr.mxu0 0.0
        %1389 = vmatpush1.xpose.msra.mxu0 0.0
        %1390 = vmatprep.subr.mxu0 0.0
        %1391 = vmatpush1.xpose.msra.mxu0 0.0
        %1392 = vmatprep.subr.mxu0 0.0
        %1393 = vmatpush1.xpose.msra.mxu0 0.0
        %1394 = vmatprep.subr.mxu0 0.0
        %1395 = vmatpush1.xpose.msra.mxu0 0.0
        %1396 = vmatprep.subr.mxu0 0.0
        %1397 = vmatpush1.xpose.msra.mxu0 0.0
        %1398 = vmatprep.subr.mxu0 0.0
        %1399 = vmatpush1.xpose.msra.mxu0 0.0
        %1400 = vmatprep.subr.mxu0 0.0
        %1401 = vmatpush1.xpose.msra.mxu0 0.0
        %1402 = vmatprep.mubr.f32.mxu0 0.0
        %1403 = vmatmul.mubr.f32.gmra.mrb[0].mxu0 %v1333
        %v1404 = vpop.f32.mrb[0].mxu0
        %v1405 = vadd.f32 0.0, %v1404
        %v1406 = vpop.f32.mrb[0].mxu0
        %1407 = vdwg.mxu0
        %v1409 = vsel %vm1179, %v886, 0
        %v1412 = vsel %vm1179, %v1032, 0
        %1414 = vmatprep.subr.mxu0 0.0
        %1415 = vmatpush1.xpose.msra.mxu0 %v1412
        %1416 = vmatprep.subr.mxu0 0.0
        %1417 = vmatpush1.xpose.msra.mxu0 0.0
        %1418 = vmatprep.subr.mxu0 0.0
        %1419 = vmatpush1.xpose.msra.mxu0 0.0
        %1420 = vmatprep.subr.mxu0 0.0
        %1421 = vmatpush1.xpose.msra.mxu0 0.0
        %1422 = vmatprep.subr.mxu0 0.0
        %1423 = vmatpush1.xpose.msra.mxu0 0.0
        %1424 = vmatprep.subr.mxu0 0.0
        %1425 = vmatpush1.xpose.msra.mxu0 0.0
        %1426 = vmatprep.subr.mxu0 0.0
        %1427 = vmatpush1.xpose.msra.mxu0 0.0
        %1428 = vmatprep.subr.mxu0 0.0
        %1429 = vmatpush1.xpose.msra.mxu0 0.0
        %1430 = vmatprep.subr.mxu0 0.0
        %1431 = vmatpush1.xpose.msra.mxu0 0.0
        %1432 = vmatprep.subr.mxu0 0.0
        %1433 = vmatpush1.xpose.msra.mxu0 0.0
        %1434 = vmatprep.subr.mxu0 0.0
        %1435 = vmatpush1.xpose.msra.mxu0 0.0
        %1436 = vmatprep.subr.mxu0 0.0
        %1437 = vmatpush1.xpose.msra.mxu0 0.0
        %1438 = vmatprep.subr.mxu0 0.0
        %1439 = vmatpush1.xpose.msra.mxu0 0.0
        %1440 = vmatprep.subr.mxu0 0.0
        %1441 = vmatpush1.xpose.msra.mxu0 0.0
        %1442 = vmatprep.subr.mxu0 0.0
        %1443 = vmatpush1.xpose.msra.mxu0 0.0
        %1444 = vmatprep.subr.mxu0 0.0
        %1445 = vmatpush1.xpose.msra.mxu0 0.0
        %1446 = vmatprep.subr.mxu0 0.0
        %1447 = vmatpush1.xpose.msra.mxu0 0.0
        %1448 = vmatprep.subr.mxu0 0.0
        %1449 = vmatpush1.xpose.msra.mxu0 0.0
        %1450 = vmatprep.subr.mxu0 0.0
        %1451 = vmatpush1.xpose.msra.mxu0 0.0
        %1452 = vmatprep.subr.mxu0 0.0
        %1453 = vmatpush1.xpose.msra.mxu0 0.0
        %1454 = vmatprep.subr.mxu0 0.0
        %1455 = vmatpush1.xpose.msra.mxu0 0.0
        %1456 = vmatprep.subr.mxu0 0.0
        %1457 = vmatpush1.xpose.msra.mxu0 0.0
        %1458 = vmatprep.subr.mxu0 0.0
        %1459 = vmatpush1.xpose.msra.mxu0 0.0
        %1460 = vmatprep.subr.mxu0 0.0
        %1461 = vmatpush1.xpose.msra.mxu0 0.0
        %1462 = vmatprep.subr.mxu0 0.0
        %1463 = vmatpush1.xpose.msra.mxu0 0.0
        %1464 = vmatprep.subr.mxu0 0.0
        %1465 = vmatpush1.xpose.msra.mxu0 0.0
        %1466 = vmatprep.subr.mxu0 0.0
        %1467 = vmatpush1.xpose.msra.mxu0 0.0
        %1468 = vmatprep.subr.mxu0 0.0
        %1469 = vmatpush1.xpose.msra.mxu0 0.0
        %1470 = vmatprep.subr.mxu0 0.0
        %1471 = vmatpush1.xpose.msra.mxu0 0.0
        %1472 = vmatprep.subr.mxu0 0.0
        %1473 = vmatpush1.xpose.msra.mxu0 0.0
        %1474 = vmatprep.subr.mxu0 0.0
        %1475 = vmatpush1.xpose.msra.mxu0 0.0
        %1476 = vmatprep.subr.mxu0 0.0
        %1477 = vmatpush1.xpose.msra.mxu0 0.0
        %1478 = vmatprep.mubr.f32.mxu0 0.0
        %1479 = vmatmul.mubr.f32.gmra.mrb[0].mxu0 %v1409
        %v1480 = vpop.f32.mrb[0].mxu0
        %v1481 = vadd.f32 0.0, %v1480
        %v1482 = vpop.f32.mrb[0].mxu0
        %1483 = vdwg.mxu0
        %v1484 = vsel %vm1179, %v1253, -inf
        %1485 = vmax.xlane.f32.xlu0 %v1484
        %v1486 = vpop.xlane.xlu0 %1485
        %v1487 = vsel %vm1179, %v1329, -inf
        %1488 = vmax.xlane.f32.xlu0 %v1487
        %v1489 = vpop.xlane.xlu0 %1488
        %v1490 = vsel %vm1179, %v1405, -inf
        %1491 = vmax.xlane.f32.xlu0 %v1490
        %v1492 = vpop.xlane.xlu0 %1491
        %v1493 = vsel %vm1179, %v1481, -inf
        %1494 = vmax.xlane.f32.xlu0 %v1493
        %v1495 = vpop.xlane.xlu0 %1494
        %v1496 = vsub.f32 %v1253, %v1486
        %v1497 = vsub.f32 %v1329, %v1489
        %v1498 = vsub.f32 %v1405, %v1492
        %v1499 = vsub.f32 %v1481, %v1495
        %v1500 = vmul.f32 %v1496, 1.442695
        %v1501 = vpow.pop %v1500
        %v1502 = vmul.f32 %v1497, 1.442695
        %v1503 = vpow.pop %v1502
        %v1504 = vmul.f32 %v1498, 1.442695
        %v1505 = vpow.pop %v1504
        %v1506 = vmul.f32 %v1499, 1.442695
        %v1507 = vpow.pop %v1506
        %v1508 = vsel %vm1179, %v1501, 0.0
        %1509 = vadd.xlane.f32.xlu0 %v1508
        %v1510 = vpop.xlane.xlu0 %1509
        %v1511 = vsel %vm1179, %v1503, 0.0
        %1512 = vadd.xlane.f32.xlu0 %v1511
        %v1513 = vpop.xlane.xlu0 %1512
        %v1514 = vsel %vm1179, %v1505, 0.0
        %1515 = vadd.xlane.f32.xlu0 %v1514
        %v1516 = vpop.xlane.xlu0 %1515
        %v1517 = vsel %vm1179, %v1507, 0.0
        %1518 = vadd.xlane.f32.xlu0 %v1517
        %v1519 = vpop.xlane.xlu0 %1518
        %v1520 = vrcp.pop %v1510
        %v1521 = vrcp.pop %v1513
        %v1522 = vrcp.pop %v1516
        %v1523 = vrcp.pop %v1519
        %v1524 = vmul.f32 %v1501, %v1520
        %v1525 = vmul.f32 %v1503, %v1521
        %v1526 = vmul.f32 %v1505, %v1522
        %v1527 = vmul.f32 %v1507, %v1523
        %v1528 = vsel %vm1179, %v1524, 0.0
        %v1529 = vsel %vm1179, %v1525, 0.0
        %v1530 = vadd.f32 %v1528, %v1529
        %v1531 = vsel %vm1179, %v1526, 0.0
        %v1532 = vadd.f32 %v1530, %v1531
        %v1533 = vsel %vm1179, %v1527, 0.0
        %v1534 = vadd.f32 %v1532, %v1533
        %v1535 = vmul.f32 %v1534, 0.25
        %1536 = vst.msk [vmem:[%s478] sm:$0xff] %vm1179, %v1535
        %v1538 = vsel %vm1179, %v1524, 0
        %1540 = vmatprep.subr.mxu0 0.0
        %1541 = vmatpush1.msra.mxu0 %v1175
        %1542 = vmatprep.subr.mxu0 0.0
        %1543 = vmatpush1.msra.mxu0 0.0
        %1544 = vmatprep.subr.mxu0 0.0
        %1545 = vmatpush1.msra.mxu0 0.0
        %1546 = vmatprep.subr.mxu0 0.0
        %1547 = vmatpush1.msra.mxu0 0.0
        %1548 = vmatprep.subr.mxu0 0.0
        %1549 = vmatpush1.msra.mxu0 0.0
        %1550 = vmatprep.subr.mxu0 0.0
        %1551 = vmatpush1.msra.mxu0 0.0
        %1552 = vmatprep.subr.mxu0 0.0
        %1553 = vmatpush1.msra.mxu0 0.0
        %1554 = vmatprep.subr.mxu0 0.0
        %1555 = vmatpush1.msra.mxu0 0.0
        %1556 = vmatprep.subr.mxu0 0.0
        %1557 = vmatpush1.msra.mxu0 0.0
        %1558 = vmatprep.subr.mxu0 0.0
        %1559 = vmatpush1.msra.mxu0 0.0
        %1560 = vmatprep.subr.mxu0 0.0
        %1561 = vmatpush1.msra.mxu0 0.0
        %1562 = vmatprep.subr.mxu0 0.0
        %1563 = vmatpush1.msra.mxu0 0.0
        %1564 = vmatprep.subr.mxu0 0.0
        %1565 = vmatpush1.msra.mxu0 0.0
        %1566 = vmatprep.subr.mxu0 0.0
        %1567 = vmatpush1.msra.mxu0 0.0
        %1568 = vmatprep.subr.mxu0 0.0
        %1569 = vmatpush1.msra.mxu0 0.0
        %1570 = vmatprep.subr.mxu0 0.0
        %1571 = vmatpush1.msra.mxu0 0.0
        %1572 = vmatprep.subr.mxu0 0.0
        %1573 = vmatpush1.msra.mxu0 0.0
        %1574 = vmatprep.subr.mxu0 0.0
        %1575 = vmatpush1.msra.mxu0 0.0
        %1576 = vmatprep.subr.mxu0 0.0
        %1577 = vmatpush1.msra.mxu0 0.0
        %1578 = vmatprep.subr.mxu0 0.0
        %1579 = vmatpush1.msra.mxu0 0.0
        %1580 = vmatprep.subr.mxu0 0.0
        %1581 = vmatpush1.msra.mxu0 0.0
        %1582 = vmatprep.subr.mxu0 0.0
        %1583 = vmatpush1.msra.mxu0 0.0
        %1584 = vmatprep.subr.mxu0 0.0
        %1585 = vmatpush1.msra.mxu0 0.0
        %1586 = vmatprep.subr.mxu0 0.0
        %1587 = vmatpush1.msra.mxu0 0.0
        %1588 = vmatprep.subr.mxu0 0.0
        %1589 = vmatpush1.msra.mxu0 0.0
        %1590 = vmatprep.subr.mxu0 0.0
        %1591 = vmatpush1.msra.mxu0 0.0
        %1592 = vmatprep.subr.mxu0 0.0
        %1593 = vmatpush1.msra.mxu0 0.0
        %1594 = vmatprep.subr.mxu0 0.0
        %1595 = vmatpush1.msra.mxu0 0.0
        %1596 = vmatprep.subr.mxu0 0.0
        %1597 = vmatpush1.msra.mxu0 0.0
        %1598 = vmatprep.subr.mxu0 0.0
        %1599 = vmatpush1.msra.mxu0 0.0
        %1600 = vmatprep.subr.mxu0 0.0
        %1601 = vmatpush1.msra.mxu0 0.0
        %1602 = vmatprep.subr.mxu0 0.0
        %1603 = vmatpush1.msra.mxu0 0.0
        %1604 = vmatprep.mubr.f32.mxu0 0.0
        %1605 = vmatmul.mubr.f32.gmra.mrb[0].mxu0 %v1538
        %v1606 = vpop.f32.mrb[0].mxu0
        %v1607 = vadd.f32 0.0, %v1606
        %v1608 = vpop.f32.mrb[0].mxu0
        %1609 = vdwg.mxu0
        %v1611 = vsel %vm1179, %v1525, 0
        %1613 = vmatprep.subr.mxu0 0.0
        %1614 = vmatpush1.msra.mxu0 %v1176
        %1615 = vmatprep.subr.mxu0 0.0
        %1616 = vmatpush1.msra.mxu0 0.0
        %1617 = vmatprep.subr.mxu0 0.0
        %1618 = vmatpush1.msra.mxu0 0.0
        %1619 = vmatprep.subr.mxu0 0.0
        %1620 = vmatpush1.msra.mxu0 0.0
        %1621 = vmatprep.subr.mxu0 0.0
        %1622 = vmatpush1.msra.mxu0 0.0
        %1623 = vmatprep.subr.mxu0 0.0
        %1624 = vmatpush1.msra.mxu0 0.0
        %1625 = vmatprep.subr.mxu0 0.0
        %1626 = vmatpush1.msra.mxu0 0.0
        %1627 = vmatprep.subr.mxu0 0.0
        %1628 = vmatpush1.msra.mxu0 0.0
        %1629 = vmatprep.subr.mxu0 0.0
        %1630 = vmatpush1.msra.mxu0 0.0
        %1631 = vmatprep.subr.mxu0 0.0
        %1632 = vmatpush1.msra.mxu0 0.0
        %1633 = vmatprep.subr.mxu0 0.0
        %1634 = vmatpush1.msra.mxu0 0.0
        %1635 = vmatprep.subr.mxu0 0.0
        %1636 = vmatpush1.msra.mxu0 0.0
        %1637 = vmatprep.subr.mxu0 0.0
        %1638 = vmatpush1.msra.mxu0 0.0
        %1639 = vmatprep.subr.mxu0 0.0
        %1640 = vmatpush1.msra.mxu0 0.0
        %1641 = vmatprep.subr.mxu0 0.0
        %1642 = vmatpush1.msra.mxu0 0.0
        %1643 = vmatprep.subr.mxu0 0.0
        %1644 = vmatpush1.msra.mxu0 0.0
        %1645 = vmatprep.subr.mxu0 0.0
        %1646 = vmatpush1.msra.mxu0 0.0
        %1647 = vmatprep.subr.mxu0 0.0
        %1648 = vmatpush1.msra.mxu0 0.0
        %1649 = vmatprep.subr.mxu0 0.0
        %1650 = vmatpush1.msra.mxu0 0.0
        %1651 = vmatprep.subr.mxu0 0.0
        %1652 = vmatpush1.msra.mxu0 0.0
        %1653 = vmatprep.subr.mxu0 0.0
        %1654 = vmatpush1.msra.mxu0 0.0
        %1655 = vmatprep.subr.mxu0 0.0
        %1656 = vmatpush1.msra.mxu0 0.0
        %1657 = vmatprep.subr.mxu0 0.0
        %1658 = vmatpush1.msra.mxu0 0.0
        %1659 = vmatprep.subr.mxu0 0.0
        %1660 = vmatpush1.msra.mxu0 0.0
        %1661 = vmatprep.subr.mxu0 0.0
        %1662 = vmatpush1.msra.mxu0 0.0
        %1663 = vmatprep.subr.mxu0 0.0
        %1664 = vmatpush1.msra.mxu0 0.0
        %1665 = vmatprep.subr.mxu0 0.0
        %1666 = vmatpush1.msra.mxu0 0.0
        %1667 = vmatprep.subr.mxu0 0.0
        %1668 = vmatpush1.msra.mxu0 0.0
        %1669 = vmatprep.subr.mxu0 0.0
        %1670 = vmatpush1.msra.mxu0 0.0
        %1671 = vmatprep.subr.mxu0 0.0
        %1672 = vmatpush1.msra.mxu0 0.0
        %1673 = vmatprep.subr.mxu0 0.0
        %1674 = vmatpush1.msra.mxu0 0.0
        %1675 = vmatprep.subr.mxu0 0.0
        %1676 = vmatpush1.msra.mxu0 0.0
        %1677 = vmatprep.mubr.f32.mxu0 0.0
        %1678 = vmatmul.mubr.f32.gmra.mrb[0].mxu0 %v1611
        %v1679 = vpop.f32.mrb[0].mxu0
        %v1680 = vadd.f32 0.0, %v1679
        %v1681 = vpop.f32.mrb[0].mxu0
        %1682 = vdwg.mxu0
        %v1684 = vsel %vm1179, %v1526, 0
        %1686 = vmatprep.subr.mxu0 0.0
        %1687 = vmatpush1.msra.mxu0 %v1177
        %1688 = vmatprep.subr.mxu0 0.0
        %1689 = vmatpush1.msra.mxu0 0.0
        %1690 = vmatprep.subr.mxu0 0.0
        %1691 = vmatpush1.msra.mxu0 0.0
        %1692 = vmatprep.subr.mxu0 0.0
        %1693 = vmatpush1.msra.mxu0 0.0
        %1694 = vmatprep.subr.mxu0 0.0
        %1695 = vmatpush1.msra.mxu0 0.0
        %1696 = vmatprep.subr.mxu0 0.0
        %1697 = vmatpush1.msra.mxu0 0.0
        %1698 = vmatprep.subr.mxu0 0.0
        %1699 = vmatpush1.msra.mxu0 0.0
        %1700 = vmatprep.subr.mxu0 0.0
        %1701 = vmatpush1.msra.mxu0 0.0
        %1702 = vmatprep.subr.mxu0 0.0
        %1703 = vmatpush1.msra.mxu0 0.0
        %1704 = vmatprep.subr.mxu0 0.0
        %1705 = vmatpush1.msra.mxu0 0.0
        %1706 = vmatprep.subr.mxu0 0.0
        %1707 = vmatpush1.msra.mxu0 0.0
        %1708 = vmatprep.subr.mxu0 0.0
        %1709 = vmatpush1.msra.mxu0 0.0
        %1710 = vmatprep.subr.mxu0 0.0
        %1711 = vmatpush1.msra.mxu0 0.0
        %1712 = vmatprep.subr.mxu0 0.0
        %1713 = vmatpush1.msra.mxu0 0.0
        %1714 = vmatprep.subr.mxu0 0.0
        %1715 = vmatpush1.msra.mxu0 0.0
        %1716 = vmatprep.subr.mxu0 0.0
        %1717 = vmatpush1.msra.mxu0 0.0
        %1718 = vmatprep.subr.mxu0 0.0
        %1719 = vmatpush1.msra.mxu0 0.0
        %1720 = vmatprep.subr.mxu0 0.0
        %1721 = vmatpush1.msra.mxu0 0.0
        %1722 = vmatprep.subr.mxu0 0.0
        %1723 = vmatpush1.msra.mxu0 0.0
        %1724 = vmatprep.subr.mxu0 0.0
        %1725 = vmatpush1.msra.mxu0 0.0
        %1726 = vmatprep.subr.mxu0 0.0
        %1727 = vmatpush1.msra.mxu0 0.0
        %1728 = vmatprep.subr.mxu0 0.0
        %1729 = vmatpush1.msra.mxu0 0.0
        %1730 = vmatprep.subr.mxu0 0.0
        %1731 = vmatpush1.msra.mxu0 0.0
        %1732 = vmatprep.subr.mxu0 0.0
        %1733 = vmatpush1.msra.mxu0 0.0
        %1734 = vmatprep.subr.mxu0 0.0
        %1735 = vmatpush1.msra.mxu0 0.0
        %1736 = vmatprep.subr.mxu0 0.0
        %1737 = vmatpush1.msra.mxu0 0.0
        %1738 = vmatprep.subr.mxu0 0.0
        %1739 = vmatpush1.msra.mxu0 0.0
        %1740 = vmatprep.subr.mxu0 0.0
        %1741 = vmatpush1.msra.mxu0 0.0
        %1742 = vmatprep.subr.mxu0 0.0
        %1743 = vmatpush1.msra.mxu0 0.0
        %1744 = vmatprep.subr.mxu0 0.0
        %1745 = vmatpush1.msra.mxu0 0.0
        %1746 = vmatprep.subr.mxu0 0.0
        %1747 = vmatpush1.msra.mxu0 0.0
        %1748 = vmatprep.subr.mxu0 0.0
        %1749 = vmatpush1.msra.mxu0 0.0
        %1750 = vmatprep.mubr.f32.mxu0 0.0
        %1751 = vmatmul.mubr.f32.gmra.mrb[0].mxu0 %v1684
        %v1752 = vpop.f32.mrb[0].mxu0
        %v1753 = vadd.f32 0.0, %v1752
        %v1754 = vpop.f32.mrb[0].mxu0
        %1755 = vdwg.mxu0
        %v1757 = vsel %vm1179, %v1527, 0
        %1759 = vmatprep.subr.mxu0 0.0
        %1760 = vmatpush1.msra.mxu0 %v1178
        %1761 = vmatprep.subr.mxu0 0.0
        %1762 = vmatpush1.msra.mxu0 0.0
        %1763 = vmatprep.subr.mxu0 0.0
        %1764 = vmatpush1.msra.mxu0 0.0
        %1765 = vmatprep.subr.mxu0 0.0
        %1766 = vmatpush1.msra.mxu0 0.0
        %1767 = vmatprep.subr.mxu0 0.0
        %1768 = vmatpush1.msra.mxu0 0.0
        %1769 = vmatprep.subr.mxu0 0.0
        %1770 = vmatpush1.msra.mxu0 0.0
        %1771 = vmatprep.subr.mxu0 0.0
        %1772 = vmatpush1.msra.mxu0 0.0
        %1773 = vmatprep.subr.mxu0 0.0
        %1774 = vmatpush1.msra.mxu0 0.0
        %1775 = vmatprep.subr.mxu0 0.0
        %1776 = vmatpush1.msra.mxu0 0.0
        %1777 = vmatprep.subr.mxu0 0.0
        %1778 = vmatpush1.msra.mxu0 0.0
        %1779 = vmatprep.subr.mxu0 0.0
        %1780 = vmatpush1.msra.mxu0 0.0
        %1781 = vmatprep.subr.mxu0 0.0
        %1782 = vmatpush1.msra.mxu0 0.0
        %1783 = vmatprep.subr.mxu0 0.0
        %1784 = vmatpush1.msra.mxu0 0.0
        %1785 = vmatprep.subr.mxu0 0.0
        %1786 = vmatpush1.msra.mxu0 0.0
        %1787 = vmatprep.subr.mxu0 0.0
        %1788 = vmatpush1.msra.mxu0 0.0
        %1789 = vmatprep.subr.mxu0 0.0
        %1790 = vmatpush1.msra.mxu0 0.0
        %1791 = vmatprep.subr.mxu0 0.0
        %1792 = vmatpush1.msra.mxu0 0.0
        %1793 = vmatprep.subr.mxu0 0.0
        %1794 = vmatpush1.msra.mxu0 0.0
        %1795 = vmatprep.subr.mxu0 0.0
        %1796 = vmatpush1.msra.mxu0 0.0
        %1797 = vmatprep.subr.mxu0 0.0
        %1798 = vmatpush1.msra.mxu0 0.0
        %1799 = vmatprep.subr.mxu0 0.0
        %1800 = vmatpush1.msra.mxu0 0.0
        %1801 = vmatprep.subr.mxu0 0.0
        %1802 = vmatpush1.msra.mxu0 0.0
        %1803 = vmatprep.subr.mxu0 0.0
        %1804 = vmatpush1.msra.mxu0 0.0
        %1805 = vmatprep.subr.mxu0 0.0
        %1806 = vmatpush1.msra.mxu0 0.0
        %1807 = vmatprep.subr.mxu0 0.0
        %1808 = vmatpush1.msra.mxu0 0.0
        %1809 = vmatprep.subr.mxu0 0.0
        %1810 = vmatpush1.msra.mxu0 0.0
        %1811 = vmatprep.subr.mxu0 0.0
        %1812 = vmatpush1.msra.mxu0 0.0
        %1813 = vmatprep.subr.mxu0 0.0
        %1814 = vmatpush1.msra.mxu0 0.0
        %1815 = vmatprep.subr.mxu0 0.0
        %1816 = vmatpush1.msra.mxu0 0.0
        %1817 = vmatprep.subr.mxu0 0.0
        %1818 = vmatpush1.msra.mxu0 0.0
        %1819 = vmatprep.subr.mxu0 0.0
        %1820 = vmatpush1.msra.mxu0 0.0
        %1821 = vmatprep.subr.mxu0 0.0
        %1822 = vmatpush1.msra.mxu0 0.0
        %1823 = vmatprep.mubr.f32.mxu0 0.0
        %1824 = vmatmul.mubr.f32.gmra.mrb[0].mxu0 %v1757
        %v1825 = vpop.f32.mrb[0].mxu0
        %v1826 = vadd.f32 0.0, %v1825
        %v1827 = vpop.f32.mrb[0].mxu0
        %1828 = vdwg.mxu0
        %v1829 = vcombine.low %v1607, %v1753
        %v1830 = vcombine.high %v1607, %v1753
        %v1832 = vunpack.c.l.s4 1983009808
        %v1833 = vunpack.c.0.s8 %v1832
        %v1834 = vlaneseq
        %v1835 = vshrl.u32 %v1834, 7
        %v1836 = vsub.s32 %v1833, %v1835
        %v1837 = vrot.slane %v1829, %v1836
        %v1839 = vunpack.c.l.s4 1983009808
        %v1840 = vunpack.c.0.s8 %v1839
        %v1841 = vlaneseq
        %v1842 = vshrl.u32 %v1841, 7
        %v1843 = vsub.s32 %v1840, %v1842
        %v1844 = vrot.slane %v1830, %v1843
        %v1845 = vcombine.low %v1680, %v1826
        %v1846 = vcombine.high %v1680, %v1826
        %v1848 = vunpack.c.l.s4 1983009808
        %v1849 = vunpack.c.0.s8 %v1848
        %v1850 = vlaneseq
        %v1851 = vshrl.u32 %v1850, 7
        %v1852 = vsub.s32 %v1849, %v1851
        %v1853 = vrot.slane %v1845, %v1852
        %v1855 = vunpack.c.l.s4 1983009808
        %v1856 = vunpack.c.0.s8 %v1855
        %v1857 = vlaneseq
        %v1858 = vshrl.u32 %v1857, 7
        %v1859 = vsub.s32 %v1856, %v1858
        %v1860 = vrot.slane %v1846, %v1859
        %v1861 = vcombine.low %v1837, %v1853
        %v1862 = vcombine.high %v1837, %v1853
        %v1864 = vunpack.c.l.s4 1934713408
        %v1865 = vunpack.c.0.s8 %v1864
        %v1866 = vlaneseq
        %v1867 = vshrl.u32 %v1866, 7
        %v1868 = vsub.s32 %v1865, %v1867
        %v1869 = vrot.slane %v1861, %v1868
        %v1871 = vunpack.c.l.s4 1934713408
        %v1872 = vunpack.c.0.s8 %v1871
        %v1873 = vlaneseq
        %v1874 = vshrl.u32 %v1873, 7
        %v1875 = vsub.s32 %v1872, %v1874
        %v1876 = vrot.slane %v1862, %v1875
        %v1877 = vcombine.low %v1844, %v1860
        %v1878 = vcombine.high %v1844, %v1860
        %v1880 = vunpack.c.l.s4 1934713408
        %v1881 = vunpack.c.0.s8 %v1880
        %v1882 = vlaneseq
        %v1883 = vshrl.u32 %v1882, 7
        %v1884 = vsub.s32 %v1881, %v1883
        %v1885 = vrot.slane %v1877, %v1884
        %v1887 = vunpack.c.l.s4 1934713408
        %v1888 = vunpack.c.0.s8 %v1887
        %v1889 = vlaneseq
        %v1890 = vshrl.u32 %v1889, 7
        %v1891 = vsub.s32 %v1888, %v1890
        %v1892 = vrot.slane %v1878, %v1891
        %v1893 = vcombine.high %v1869, 0.0
        %v1894 = vcombine.high %v1876, 0.0
        %v1895 = vcombine.high %v1885, 0.0
        %v1896 = vcombine.high %v1892, 0.0
        %v1897 = vcombine.low %v1869, %v1876
        %v1899 = vunpack.c.l.s4 1983009808
        %v1900 = vunpack.c.0.s8 %v1899
        %v1901 = vlaneseq
        %v1902 = vshrl.u32 %v1901, 7
        %v1903 = vsub.s32 %v1900, %v1902
        %v1904 = vrot.slane %v1897, %v1903
        %v1905 = vcombine.low %v1893, %v1894
        %v1907 = vunpack.c.l.s4 1983009808
        %v1908 = vunpack.c.0.s8 %v1907
        %v1909 = vlaneseq
        %v1910 = vshrl.u32 %v1909, 7
        %v1911 = vsub.s32 %v1908, %v1910
        %v1912 = vrot.slane %v1905, %v1911
        %v1913 = vcombine.low %v1885, %v1892
        %v1915 = vunpack.c.l.s4 1983009808
        %v1916 = vunpack.c.0.s8 %v1915
        %v1917 = vlaneseq
        %v1918 = vshrl.u32 %v1917, 7
        %v1919 = vsub.s32 %v1916, %v1918
        %v1920 = vrot.slane %v1913, %v1919
        %v1921 = vcombine.low %v1895, %v1896
        %v1923 = vunpack.c.l.s4 1983009808
        %v1924 = vunpack.c.0.s8 %v1923
        %v1925 = vlaneseq
        %v1926 = vshrl.u32 %v1925, 7
        %v1927 = vsub.s32 %v1924, %v1926
        %v1928 = vrot.slane %v1921, %v1927
        %v1929 = vcombine.low %v1904, %v1912
        %v1930 = vcombine.high %v1904, %v1912
        %v1932 = vunpack.c.l.s4 1934713408
        %v1933 = vunpack.c.0.s8 %v1932
        %v1934 = vlaneseq
        %v1935 = vshrl.u32 %v1934, 7
        %v1936 = vsub.s32 %v1933, %v1935
        %v1937 = vrot.slane %v1929, %v1936
        %v1939 = vunpack.c.l.s4 1934713408
        %v1940 = vunpack.c.0.s8 %v1939
        %v1941 = vlaneseq
        %v1942 = vshrl.u32 %v1941, 7
        %v1943 = vsub.s32 %v1940, %v1942
        %v1944 = vrot.slane %v1930, %v1943
        %v1945 = vcombine.low %v1920, %v1928
        %v1946 = vcombine.high %v1920, %v1928
        %v1948 = vunpack.c.l.s4 1934713408
        %v1949 = vunpack.c.0.s8 %v1948
        %v1950 = vlaneseq
        %v1951 = vshrl.u32 %v1950, 7
        %v1952 = vsub.s32 %v1949, %v1951
        %v1953 = vrot.slane %v1945, %v1952
        %v1955 = vunpack.c.l.s4 1934713408
        %v1956 = vunpack.c.0.s8 %v1955
        %v1957 = vlaneseq
        %v1958 = vshrl.u32 %v1957, 7
        %v1959 = vsub.s32 %v1956, %v1958
        %v1960 = vrot.slane %v1946, %v1959
        %v1961 = vcombine.low %v1937, %v1953
        %v1962 = vcombine.high %v1937, %v1953
        %v1963 = vcombine.low %v1944, %v1960
        %v1964 = vcombine.high %v1944, %v1960
        %1966 = vrot.lane.b32.xlu0 %v1962, 8
        %v1967 = vpop.permute.xlu0 %1966
        %1970 = vrot.lane.b32.xlu0 %v1963, 16
        %v1971 = vpop.permute.xlu0 %1970
        %1974 = vrot.lane.b32.xlu0 %v1964, 24
        %v1975 = vpop.permute.xlu0 %1974
        %v1977 = vsel %vm1179, %v1961, %v1967
        %vm1978 = vcmask 130048
        %v1979 = vsel %vm1978, %v1977, %v1971
        %vm1980 = vcmask 195584
        %v1981 = vsel %vm1980, %v1979, %v1975
        %v1982 = vlaneseq
        %v1983 = vshrl.u32 %v1982, 7
        %v1984 = vsub.s32 3, %v1983
        %v1985 = vrot.slane %v508, %v1984
        %v1987 = vsel %vm516, %v1981, 0
        %1989 = vmatprep.subr.mxu0 0.0
        %1990 = vmatpush1.msra.mxu0 %v491
        %1991 = vmatprep.subr.mxu0 0.0
        %1992 = vmatpush1.msra.mxu0 %v492
        %1993 = vmatprep.subr.mxu0 0.0
        %1994 = vmatpush1.msra.mxu0 %v493
        %1995 = vmatprep.subr.mxu0 0.0
        %1996 = vmatpush1.msra.mxu0 %v494
        %1997 = vmatprep.subr.mxu0 0.0
        %1998 = vmatpush1.msra.mxu0 0.0
        %1999 = vmatprep.subr.mxu0 0.0
        %2000 = vmatpush1.msra.mxu0 0.0
        %2001 = vmatprep.subr.mxu0 0.0
        %2002 = vmatpush1.msra.mxu0 0.0
        %2003 = vmatprep.subr.mxu0 0.0
        %2004 = vmatpush1.msra.mxu0 0.0
        %2005 = vmatprep.subr.mxu0 0.0
        %2006 = vmatpush1.msra.mxu0 0.0
        %2007 = vmatprep.subr.mxu0 0.0
        %2008 = vmatpush1.msra.mxu0 0.0
        %2009 = vmatprep.subr.mxu0 0.0
        %2010 = vmatpush1.msra.mxu0 0.0
        %2011 = vmatprep.subr.mxu0 0.0
        %2012 = vmatpush1.msra.mxu0 0.0
        %2013 = vmatprep.subr.mxu0 0.0
        %2014 = vmatpush1.msra.mxu0 0.0
        %2015 = vmatprep.subr.mxu0 0.0
        %2016 = vmatpush1.msra.mxu0 0.0
        %2017 = vmatprep.subr.mxu0 0.0
        %2018 = vmatpush1.msra.mxu0 0.0
        %2019 = vmatprep.subr.mxu0 0.0
        %2020 = vmatpush1.msra.mxu0 0.0
        %2021 = vmatprep.subr.mxu0 0.0
        %2022 = vmatpush1.msra.mxu0 0.0
        %2023 = vmatprep.subr.mxu0 0.0
        %2024 = vmatpush1.msra.mxu0 0.0
        %2025 = vmatprep.subr.mxu0 0.0
        %2026 = vmatpush1.msra.mxu0 0.0
        %2027 = vmatprep.subr.mxu0 0.0
        %2028 = vmatpush1.msra.mxu0 0.0
        %2029 = vmatprep.subr.mxu0 0.0
        %2030 = vmatpush1.msra.mxu0 0.0
        %2031 = vmatprep.subr.mxu0 0.0
        %2032 = vmatpush1.msra.mxu0 0.0
        %2033 = vmatprep.subr.mxu0 0.0
        %2034 = vmatpush1.msra.mxu0 0.0
        %2035 = vmatprep.subr.mxu0 0.0
        %2036 = vmatpush1.msra.mxu0 0.0
        %2037 = vmatprep.subr.mxu0 0.0
        %2038 = vmatpush1.msra.mxu0 0.0
        %2039 = vmatprep.subr.mxu0 0.0
        %2040 = vmatpush1.msra.mxu0 0.0
        %2041 = vmatprep.subr.mxu0 0.0
        %2042 = vmatpush1.msra.mxu0 0.0
        %2043 = vmatprep.subr.mxu0 0.0
        %2044 = vmatpush1.msra.mxu0 0.0
        %2045 = vmatprep.subr.mxu0 0.0
        %2046 = vmatpush1.msra.mxu0 0.0
        %2047 = vmatprep.subr.mxu0 0.0
        %2048 = vmatpush1.msra.mxu0 0.0
        %2049 = vmatprep.subr.mxu0 0.0
        %2050 = vmatpush1.msra.mxu0 0.0
        %2051 = vmatprep.subr.mxu0 0.0
        %2052 = vmatpush1.msra.mxu0 0.0
        %2053 = vmatprep.mubr.f32.mxu0 0.0
        %2054 = vmatmul.mubr.f32.gmra.mrb[0].mxu0 %v1987
        %v2055 = vpop.f32.mrb[0].mxu0
        %v2056 = vadd.f32 %v1985, %v2055
        %v2057 = vpop.f32.mrb[0].mxu0
        %2058 = vdwg.mxu0
        %v2059 = vadd.f32 %v510, %v2056
        %v2060 = vsel %vm516, %v2059, 0.0
        %2061 = vadd.xlane.f32.xlu0 %v2060
        %v2062 = vpop.xlane.xlu0 %2061
        %v2063 = vrcp.pop 32.0
        %v2064 = vmul.f32 %v2062, %v2063
        %v2065 = vsub.f32 %v2059, %v2064
        %v2066 = vmul.f32 %v2065, %v2065
        %v2067 = vsel %vm516, %v2066, 0.0
        %2068 = vadd.xlane.f32.xlu0 %v2067
        %v2069 = vpop.xlane.xlu0 %2068
        %v2070 = vmul.f32 %v2069, %v2063
        %v2071 = vadd.f32 %v2070, 1e-05
        %v2072 = vrsqrt.pop %v2071
        %v2073 = vmul.f32 %v2065, %v2072
        %v2074 = vlaneseq
        %v2075 = vshrl.u32 %v2074, 7
        %v2076 = vsub.s32 5, %v2075
        %v2077 = vrot.slane %v508, %v2076
        %v2078 = vmul.f32 %v2073, %v2077
        %v2079 = vlaneseq
        %v2080 = vshrl.u32 %v2079, 7
        %v2081 = vsub.s32 6, %v2080
        %v2082 = vrot.slane %v508, %v2081
        %v2083 = vadd.f32 %v2078, %v2082
        %v2085 = vlaneseq
        %v2086 = vshrl.u32 %v2085, 7
        %v2087 = vsub.s32 0, %v2086
        %v2088 = vrot.slane %v507, %v2087
        %v2091 = vsel %vm516, %v2083, 0
        %2093 = vmatprep.subr.mxu0 0.0
        %2094 = vmatpush1.msra.mxu0 %v495
        %2095 = vmatprep.subr.mxu0 0.0
        %2096 = vmatpush1.msra.mxu0 %v496
        %2097 = vmatprep.subr.mxu0 0.0
        %2098 = vmatpush1.msra.mxu0 %v497
        %2099 = vmatprep.subr.mxu0 0.0
        %2100 = vmatpush1.msra.mxu0 %v498
        %2101 = vmatprep.subr.mxu0 0.0
        %2102 = vmatpush1.msra.mxu0 0.0
        %2103 = vmatprep.subr.mxu0 0.0
        %2104 = vmatpush1.msra.mxu0 0.0
        %2105 = vmatprep.subr.mxu0 0.0
        %2106 = vmatpush1.msra.mxu0 0.0
        %2107 = vmatprep.subr.mxu0 0.0
        %2108 = vmatpush1.msra.mxu0 0.0
        %2109 = vmatprep.subr.mxu0 0.0
        %2110 = vmatpush1.msra.mxu0 0.0
        %2111 = vmatprep.subr.mxu0 0.0
        %2112 = vmatpush1.msra.mxu0 0.0
        %2113 = vmatprep.subr.mxu0 0.0
        %2114 = vmatpush1.msra.mxu0 0.0
        %2115 = vmatprep.subr.mxu0 0.0
        %2116 = vmatpush1.msra.mxu0 0.0
        %2117 = vmatprep.subr.mxu0 0.0
        %2118 = vmatpush1.msra.mxu0 0.0
        %2119 = vmatprep.subr.mxu0 0.0
        %2120 = vmatpush1.msra.mxu0 0.0
        %2121 = vmatprep.subr.mxu0 0.0
        %2122 = vmatpush1.msra.mxu0 0.0
        %2123 = vmatprep.subr.mxu0 0.0
        %2124 = vmatpush1.msra.mxu0 0.0
        %2125 = vmatprep.subr.mxu0 0.0
        %2126 = vmatpush1.msra.mxu0 0.0
        %2127 = vmatprep.subr.mxu0 0.0
        %2128 = vmatpush1.msra.mxu0 0.0
        %2129 = vmatprep.subr.mxu0 0.0
        %2130 = vmatpush1.msra.mxu0 0.0
        %2131 = vmatprep.subr.mxu0 0.0
        %2132 = vmatpush1.msra.mxu0 0.0
        %2133 = vmatprep.subr.mxu0 0.0
        %2134 = vmatpush1.msra.mxu0 0.0
        %2135 = vmatprep.subr.mxu0 0.0
        %2136 = vmatpush1.msra.mxu0 0.0
        %2137 = vmatprep.subr.mxu0 0.0
        %2138 = vmatpush1.msra.mxu0 0.0
        %2139 = vmatprep.subr.mxu0 0.0
        %2140 = vmatpush1.msra.mxu0 0.0
        %2141 = vmatprep.subr.mxu0 0.0
        %2142 = vmatpush1.msra.mxu0 0.0
        %2143 = vmatprep.subr.mxu0 0.0
        %2144 = vmatpush1.msra.mxu0 0.0
        %2145 = vmatprep.subr.mxu0 0.0
        %2146 = vmatpush1.msra.mxu0 0.0
        %2147 = vmatprep.subr.mxu0 0.0
        %2148 = vmatpush1.msra.mxu0 0.0
        %2149 = vmatprep.subr.mxu0 0.0
        %2150 = vmatpush1.msra.mxu0 0.0
        %2151 = vmatprep.subr.mxu0 0.0
        %2152 = vmatpush1.msra.mxu0 0.0
        %2153 = vmatprep.subr.mxu0 0.0
        %2154 = vmatpush1.msra.mxu0 0.0
        %2155 = vmatprep.subr.mxu0 0.0
        %2156 = vmatpush1.msra.mxu0 0.0
        %2157 = vmatprep.mubr.f32.mxu0 0.0
        %2158 = vmatmul.mubr.f32.gmra.mrb[0].mxu0 %v2091
        %v2159 = vpop.f32.mrb[0].mxu0
        %v2160 = vadd.f32 %v2088, %v2159
        %v2161 = vpop.f32.mrb[0].mxu0
        %2162 = vdwg.mxu0
        %v2163 = vmul.f32 %v2160, 0.5
        %v2164 = vmul.f32 %v2160, 0.70710677
        %v2165 = verf.f32.pop %v2164
        %v2166 = vadd.f32 %v2165, 1.0
        %v2167 = vmul.f32 %v2163, %v2166
        %v2168 = vlaneseq
        %v2169 = vshrl.u32 %v2168, 7
        %v2170 = vsub.s32 4, %v2169
        %v2171 = vrot.slane %v508, %v2170
        %vm2172 = vcmask 523264
        %v2174 = vsel %vm2172, %v2167, 0
        %2176 = vmatprep.subr.mxu0 0.0
        %2177 = vmatpush1.msra.mxu0 %v499
        %2178 = vmatprep.subr.mxu0 0.0
        %2179 = vmatpush1.msra.mxu0 %v500
        %2180 = vmatprep.subr.mxu0 0.0
        %2181 = vmatpush1.msra.mxu0 %v501
        %2182 = vmatprep.subr.mxu0 0.0
        %2183 = vmatpush1.msra.mxu0 %v502
        %2184 = vmatprep.subr.mxu0 0.0
        %2185 = vmatpush1.msra.mxu0 %v503
        %2186 = vmatprep.subr.mxu0 0.0
        %2187 = vmatpush1.msra.mxu0 %v504
        %2188 = vmatprep.subr.mxu0 0.0
        %2189 = vmatpush1.msra.mxu0 %v505
        %2190 = vmatprep.subr.mxu0 0.0
        %2191 = vmatpush1.msra.mxu0 %v506
        %2192 = vmatprep.subr.mxu0 0.0
        %2193 = vmatpush1.msra.mxu0 0.0
        %2194 = vmatprep.subr.mxu0 0.0
        %2195 = vmatpush1.msra.mxu0 0.0
        %2196 = vmatprep.subr.mxu0 0.0
        %2197 = vmatpush1.msra.mxu0 0.0
        %2198 = vmatprep.subr.mxu0 0.0
        %2199 = vmatpush1.msra.mxu0 0.0
        %2200 = vmatprep.subr.mxu0 0.0
        %2201 = vmatpush1.msra.mxu0 0.0
        %2202 = vmatprep.subr.mxu0 0.0
        %2203 = vmatpush1.msra.mxu0 0.0
        %2204 = vmatprep.subr.mxu0 0.0
        %2205 = vmatpush1.msra.mxu0 0.0
        %2206 = vmatprep.subr.mxu0 0.0
        %2207 = vmatpush1.msra.mxu0 0.0
        %2208 = vmatprep.subr.mxu0 0.0
        %2209 = vmatpush1.msra.mxu0 0.0
        %2210 = vmatprep.subr.mxu0 0.0
        %2211 = vmatpush1.msra.mxu0 0.0
        %2212 = vmatprep.subr.mxu0 0.0
        %2213 = vmatpush1.msra.mxu0 0.0
        %2214 = vmatprep.subr.mxu0 0.0
        %2215 = vmatpush1.msra.mxu0 0.0
        %2216 = vmatprep.subr.mxu0 0.0
        %2217 = vmatpush1.msra.mxu0 0.0
        %2218 = vmatprep.subr.mxu0 0.0
        %2219 = vmatpush1.msra.mxu0 0.0
        %2220 = vmatprep.subr.mxu0 0.0
        %2221 = vmatpush1.msra.mxu0 0.0
        %2222 = vmatprep.subr.mxu0 0.0
        %2223 = vmatpush1.msra.mxu0 0.0
        %2224 = vmatprep.subr.mxu0 0.0
        %2225 = vmatpush1.msra.mxu0 0.0
        %2226 = vmatprep.subr.mxu0 0.0
        %2227 = vmatpush1.msra.mxu0 0.0
        %2228 = vmatprep.subr.mxu0 0.0
        %2229 = vmatpush1.msra.mxu0 0.0
        %2230 = vmatprep.subr.mxu0 0.0
        %2231 = vmatpush1.msra.mxu0 0.0
        %2232 = vmatprep.subr.mxu0 0.0
        %2233 = vmatpush1.msra.mxu0 0.0
        %2234 = vmatprep.subr.mxu0 0.0
        %2235 = vmatpush1.msra.mxu0 0.0
        %2236 = vmatprep.subr.mxu0 0.0
        %2237 = vmatpush1.msra.mxu0 0.0
        %2238 = vmatprep.subr.mxu0 0.0
        %2239 = vmatpush1.msra.mxu0 0.0
        %2240 = vmatprep.mubr.f32.mxu0 0.0
        %2241 = vmatmul.mubr.f32.gmra.mrb[0].mxu0 %v2174
        %v2242 = vpop.f32.mrb[0].mxu0
        %v2243 = vadd.f32 %v2171, %v2242
        %v2244 = vpop.f32.mrb[0].mxu0
        %2245 = vdwg.mxu0
        %v2246 = vadd.f32 %v2083, %v2243
        %v2247 = vsel %vm516, %v2246, 0.0
        %2248 = vadd.xlane.f32.xlu0 %v2247
        %v2249 = vpop.xlane.xlu0 %2248
        %v2250 = vmul.f32 %v2249, %v2063
        %v2251 = vsub.f32 %v2246, %v2250
        %v2252 = vmul.f32 %v2251, %v2251
        %v2253 = vsel %vm516, %v2252, 0.0
        %2254 = vadd.xlane.f32.xlu0 %v2253
        %v2255 = vpop.xlane.xlu0 %2254
        %v2256 = vmul.f32 %v2255, %v2063
        %v2257 = vadd.f32 %v2256, 1e-05
        %v2258 = vrsqrt.pop %v2257
        %v2259 = vmul.f32 %v2251, %v2258
        %v2260 = vlaneseq
        %v2261 = vshrl.u32 %v2260, 7
        %v2262 = vsub.s32 7, %v2261
        %v2263 = vrot.slane %v508, %v2262
        %v2264 = vmul.f32 %v2259, %v2263
        %v2265 = vlaneseq
        %v2266 = vshrl.u32 %v2265, 7
        %v2267 = vsub.s32 0, %v2266
        %v2268 = vrot.slane %v509, %v2267
        %v2269 = vadd.f32 %v2264, %v2268
        %2270 = vst.msk [vmem:[%s471] sm:$0xff] %vm516, %v2269
        %s2271 = sand.u32 %s264, 1
        %s2272 = scalar_lea.sflag [#allocation4], %s2271
        %s2273 = sand.u32 %s264, 1
        %s2274 = smul.addr %s2273, 8
        %s2275 = scalar_lea.vmem [#allocation10], %s2274
        %s2276 = sand.u32 %s290, 1
        %s2277 = scalar_lea.sflag [#allocation12], %s2276
        %s2278 = sand.u32 %s290, 1
        %s2279 = smul.addr %s2278, 8
        %s2280 = scalar_lea.vmem [#allocation11], %s2279
        // Predicated region
        $region77: #{tpu_custom_call.1} parent=59 // pred_check
          %p2281 = pneg %p274
        $region78: #{tpu_custom_call.1} parent=59 // pred_check_branch
          %2283 = sbr.rel (%p2281) target = $region80
        $region79: #{tpu_custom_call.1} parent=59 // pred_region
          %s2285 = ssub.s32 128, 128
          %2286 = vsyncadd %s2272, %s2285
          %s2287 = smul.addr %s36, 128
          %s2288 = scalar_lea.hbm %s10, %s2287
          %s2290 = sshll.u32 %s2275, 4
          %s2291 = int_to_ptr.vmem [resolvable:$true] %s2290
          %2293 = dma.vmem_to_hbm [thread:$0]  %s2291, 128, %s2288, %s2272
        $region80: #{tpu_custom_call.1} parent=59 // pred_fallthru
          _
        // Predicated region
        $region81: #{tpu_custom_call.1} parent=59 // pred_check
          %p2294 = pneg %p300
        $region82: #{tpu_custom_call.1} parent=59 // pred_check_branch
          %2296 = sbr.rel (%p2294) target = $region84
        $region83: #{tpu_custom_call.1} parent=59 // pred_region
          %s2298 = ssub.s32 128, 128
          %2299 = vsyncadd %s2277, %s2298
          %s2300 = smul.addr %s36, 128
          %s2301 = scalar_lea.hbm %s11, %s2300
          %s2303 = sshll.u32 %s2280, 4
          %s2304 = int_to_ptr.vmem [resolvable:$true] %s2303
          %2306 = dma.vmem_to_hbm [thread:$0]  %s2304, 128, %s2301, %s2277
        $region84: #{tpu_custom_call.1} parent=59 // pred_fallthru
          _
      $region60: #{tpu_custom_call.1} parent=5 // pred_fallthru
        _
      %p2307 = scmp.le.s32.totalorder 2, %s31
      // Predicated region
      $region85: #{tpu_custom_call.1} parent=5 // pred_check
        %p2308 = pneg %p2307
      $region86: #{tpu_custom_call.1} parent=5 // pred_check_branch
        %2310 = sbr.rel (%p2308) target = $region88
      $region87: #{tpu_custom_call.1} parent=5 // pred_region
        %s2311 = ssub.s32 %s31, 2
        // Predicated region
        $region89: #{tpu_custom_call.1} parent=87 // pred_check
          %p2312 = pneg %p280
        $region90: #{tpu_custom_call.1} parent=87 // pred_check_branch
          %2314 = sbr.rel (%p2312) target = $region92
        $region91: #{tpu_custom_call.1} parent=87 // pred_region
          %s2315 = sand.u32 %s265, 1
          %s2316 = scalar_lea.sflag [#allocation4], %s2315
          %s2317 = sand.u32 %s265, 1
          %s2318 = smul.addr %s2317, 8
          %s2319 = scalar_lea.vmem [#allocation10], %s2318
          %2320 = dma.done %s2316, 128
        $region92: #{tpu_custom_call.1} parent=87 // pred_fallthru
          _
        // Predicated region
        $region93: #{tpu_custom_call.1} parent=87 // pred_check
          %p2321 = pneg %p306
        $region94: #{tpu_custom_call.1} parent=87 // pred_check_branch
          %2323 = sbr.rel (%p2321) target = $region96
        $region95: #{tpu_custom_call.1} parent=87 // pred_region
          %s2324 = sand.u32 %s291, 1
          %s2325 = scalar_lea.sflag [#allocation12], %s2324
          %s2326 = sand.u32 %s291, 1
          %s2327 = smul.addr %s2326, 8
          %s2328 = scalar_lea.vmem [#allocation11], %s2327
          %2329 = dma.done %s2325, 128
        $region96: #{tpu_custom_call.1} parent=87 // pred_fallthru
          _
      $region88: #{tpu_custom_call.1} parent=5 // pred_fallthru
        _
    $region6: #{tpu_custom_call.1} parent=1 // loop_footer
      %s35 = sadd.s32 1, %s31
    $region7: #{tpu_custom_call.1} parent=1 // loop_footer_branch
      %30 = sbr.rel target = $region3
    $region8: #{tpu_custom_call.1} parent=1 // loop_exit
      _
    %2330 = vsyncpa [#allocation3], 1
    %s2331 = scalar_lea.sflag [#allocation3], 1
    %2332 = vsyncpa %s2331, 1
    %2333 = vsyncpa [#allocation6], 1
    %s2334 = scalar_lea.sflag [#allocation6], 1
    %2335 = vsyncpa %s2334, 1
    %2336 = vsyncpa [#allocation9], 1
    %2337 = vsyncpa [#allocation4], 1
    %s2338 = scalar_lea.sflag [#allocation4], 1
    %2339 = vsyncpa %s2338, 1
    %2340 = vsyncpa [#allocation12], 1
    %s2341 = scalar_lea.sflag [#allocation12], 1
    %2342 = vsyncpa %s2341, 1

</llo_original>
